<compile_context>
chip_gen: v7x
topology: tpu7x:2x2x1
jax: 0.10.0
libtpu: 0.0.40
codegen_flags: <defaults>
</compile_context>

<pallas_src>
import jax
import jax.numpy as jnp
import numpy as np
from jax.experimental import pallas as pl
from jax.experimental.pallas import tpu as pltpu


def _crf_kernel(em_ref, tags_ref, mask_ref, start_ref, end_ref, trans_ref,
                exp_trans_t_ref, cmax_ref, ll_ref,
                alpha_sc, score_sc, end_sc, prevoh_sc):
    """Grid = (batch_blocks, time_blocks).  Per grid step:
         em_ref        (Tt, K, Bblk)  emissions for Tt timesteps (streamed, caller dtype)
         tags_ref      (Tt, Bblk)     gold tags (int32, streamed)
         mask_ref      (Tt, Bblk)     prefix mask (f32, streamed)
         start/end     (K, 1)         parameters (resident)
         trans         (K, K)         raw transitions (for the gold-path gather)
         exp_trans_t   (K, K)         [j, i] = exp(trans[i, j] - cmax[j])   (MXU LSE)
         cmax          (K, 1)         cmax[j] = max_i trans[i, j]
       Scratch carried across the (arbitrary) time axis:
         alpha_sc  (K, Bblk)  forward log-scores
         score_sc  (1, Bblk)  gold-path score accumulator
         end_sc    (1, Bblk)  end_transitions[tag at last valid step]
         prevoh_sc (K, Bblk)  one-hot of the previous step's tags
    """
    tb = pl.program_id(1)
    n_tb = pl.num_programs(1)
    Tt = em_ref.shape[0]
    K, Bblk = alpha_sc.shape

    # ---- per-grid-step constants, hoisted out of the unrolled time loop ----
    start_v = start_ref[...]                                   # (K, 1)
    end_v = end_ref[...]                                       # (K, 1)
    trans = trans_ref[...]                                     # (K, K)
    exp_tr_t = exp_trans_t_ref[...]                            # (K, K)
    cmax = cmax_ref[...]                                       # (K, 1)
    zero_kb = jnp.zeros((K, Bblk), jnp.float32)
    end_b = end_v + zero_kb                                    # (K, Bblk), broadcast once
    cmax_b = cmax + zero_kb                                    # (K, Bblk), broadcast once
    iota_k = jax.lax.broadcasted_iota(jnp.int32, (K, Bblk), 0)

    # ---- init at the first global timestep (requires mask[0] == 1, as in PyTorch CRF) ----
    @pl.when(tb == 0)
    def _init():
        em0 = em_ref[0].astype(jnp.float32)                    # (K, Bblk)
        oh0 = (iota_k == tags_ref[0:1, :]).astype(jnp.float32)
        first = start_v + em0
        alpha_sc[...] = first
        score_sc[...] = jnp.sum(first * oh0, axis=0, keepdims=True)
        end_sc[...] = jnp.sum(end_b * oh0, axis=0, keepdims=True)
        prevoh_sc[...] = oh0

    alpha = alpha_sc[...]
    score = score_sc[...]
    endc = end_sc[...]
    oh_prev = prevoh_sc[...]
    not_first_block = (tb > 0).astype(jnp.float32)

    # unrolled recurrence over the Tt local timesteps of this block
    for tl in range(Tt):
        em_t = em_ref[tl].astype(jnp.float32)                  # (K, Bblk)
        tags_t = tags_ref[pl.ds(tl, 1), :]                     # (1, Bblk) int32
        mask_t = mask_ref[pl.ds(tl, 1), :]                     # (1, Bblk) f32
        # the very first global timestep was consumed by _init -> make it a no-op here
        m_eff = mask_t * not_first_block if tl == 0 else mask_t
        oh_t = (iota_k == tags_t).astype(jnp.float32)          # (K, Bblk)

        # ---------------- numerator (gold path) ----------------
        # trans[:, tags_t[b]] gathered with one small MXU matmul
        sel = jnp.dot(trans, oh_t, preferred_element_type=jnp.float32)       # (K, Bblk)
        gold = jnp.sum(oh_prev * sel + em_t * oh_t, axis=0, keepdims=True)   # (1, Bblk)
        score = score + jnp.where(m_eff > 0, gold, 0.0)
        # end_transitions at the last valid position (prefix mask => last overwrite wins)
        end_t = jnp.sum(end_b * oh_t, axis=0, keepdims=True)
        endc = jnp.where(m_eff > 0, end_t, endc)
        oh_prev = oh_t

        # -------- denominator: forward-algorithm step, MXU log-sum-exp --------
        m_b = jnp.max(alpha, axis=0, keepdims=True)            # (1, Bblk)
        e_a = jnp.exp(alpha - m_b)                             # (K, Bblk)  in (0, 1]
        s = jnp.dot(exp_tr_t, e_a, preferred_element_type=jnp.float32)       # (K, Bblk)
        a_new = em_t + cmax_b + m_b + jnp.log(s)
        alpha = jnp.where(m_eff > 0, a_new, alpha)

    # carry state to the next time block
    alpha_sc[...] = alpha
    score_sc[...] = score
    end_sc[...] = endc
    prevoh_sc[...] = oh_prev

    # ---- finalize on the last time block: log-likelihood per example ----
    @pl.when(tb == n_tb - 1)
    def _finalize():
        sc = alpha + end_b
        m2 = jnp.max(sc, axis=0, keepdims=True)
        denom = m2 + jnp.log(jnp.sum(jnp.exp(sc - m2), axis=0, keepdims=True))
        ll_ref[...] = score + endc - denom                     # lane-dense (1, Bblk)


def _pick_time_block(T, max_tt=32):
    """Choose Tt (multiple of 8, or == T) and the padded time extent T_pad."""
    candidates = [tt for tt in (32, 24, 16, 8) if tt <= max_tt]
    for tt in candidates:
        if T % tt == 0:
            return tt, T
    if T <= 64:
        return T, T                      # whole time axis as one block (block == full dim)
    T_pad = ((T + 7) // 8) * 8
    for tt in candidates:
        if T_pad % tt == 0:
            return tt, T_pad
    return 8, T_pad


def crf_loglikelihood_pallas(emissions_tkb, tags_tb, mask_tb, start, end, trans,
                             *, batch_block=512, time_block=32,
                             vmem_limit_bytes=32 * 1024 * 1024):
    """emissions (T, K, B) float dtype, tags (T, B), mask (T, B) -> per-example ll (B,) f32."""
    T, K, B = emissions_tkb.shape
    tags_tb = tags_tb.astype(jnp.int32)
    mask_tb = mask_tb.astype(jnp.float32)

    # --- batch blocking: lane-aligned blocks, >=2 blocks when B > 128 (v7x megacore) ---
    if B <= 128:
        Bblk = B
    else:
        Bblk = min(batch_block, 128 * max(1, pl.cdiv(B, 2) // 128))
    nb = pl.cdiv(B, Bblk)

    # --- time blocking: Tt timesteps per grid step ---
    Tt, T_pad = _pick_time_block(T, time_block)
    nt = T_pad // Tt
    if T_pad != T:
        # only the tiny tags/mask arrays are padded; the emissions tail is never used
        # (padded mask == 0 and every state update is where()-guarded).
        tags_tb = jnp.pad(tags_tb, ((0, T_pad - T), (0, 0)))
        mask_tb = jnp.pad(mask_tb, ((0, T_pad - T), (0, 0)))

    start_f = start.reshape(K, 1).astype(jnp.float32)
    end_f = end.reshape(K, 1).astype(jnp.float32)
    trans_f = trans.astype(jnp.float32)
    # overflow-safe exp(transitions), transposed for the MXU log-sum-exp:
    #   exp_trans_t[j, i] = exp(trans[i, j] - cmax[j]),   cmax[j] = max_i trans[i, j]
    cmax = jnp.max(trans_f, axis=0).reshape(K, 1)
    exp_trans_t = jnp.exp(trans_f - cmax.T).T

    ll = pl.pallas_call(
        _crf_kernel,
        out_shape=jax.ShapeDtypeStruct((1, B), jnp.float32),
        grid_spec=pltpu.PrefetchScalarGridSpec(
            num_scalar_prefetch=0,
            grid=(nb, nt),                                      # (batch blocks, time blocks)
            in_specs=[
                pl.BlockSpec((Tt, K, Bblk), lambda b, t: (t, 0, b)),   # emissions (streamed)
                pl.BlockSpec((Tt, Bblk), lambda b, t: (t, b)),         # tags (streamed)
                pl.BlockSpec((Tt, Bblk), lambda b, t: (t, b)),         # mask (streamed)
                pl.BlockSpec((K, 1), lambda b, t: (0, 0)),             # start_transitions
                pl.BlockSpec((K, 1), lambda b, t: (0, 0)),             # end_transitions
                pl.BlockSpec((K, K), lambda b, t: (0, 0)),             # transitions
                pl.BlockSpec((K, K), lambda b, t: (0, 0)),             # exp(trans - cmax)^T
                pl.BlockSpec((K, 1), lambda b, t: (0, 0)),             # cmax
            ],
            out_specs=pl.BlockSpec((1, Bblk), lambda b, t: (0, b)),
            scratch_shapes=[
                pltpu.VMEM((K, Bblk), jnp.float32),   # forward alphas
                pltpu.VMEM((1, Bblk), jnp.float32),   # gold-path score
                pltpu.VMEM((1, Bblk), jnp.float32),   # end-transition contribution
                pltpu.VMEM((K, Bblk), jnp.float32),   # previous one-hot tags
            ],
        ),
        compiler_params=pltpu.CompilerParams(
            dimension_semantics=("parallel", "arbitrary"),       # batch shards across TCs
            vmem_limit_bytes=vmem_limit_bytes,
        ),
    )(emissions_tkb, tags_tb, mask_tb, start_f, end_f, trans_f, exp_trans_t, cmax)
    return ll[0]


class CRFPallas:
    """JAX/Pallas port of the PyTorch CRF module's forward pass (NLL loss)."""

    def __init__(self, num_tags, batch_first=True, seed=0):
        self.num_tags = num_tags
        self.batch_first = batch_first
        k1, k2, k3 = jax.random.split(jax.random.PRNGKey(seed), 3)
        # matches nn.init.uniform_(-0.1, 0.1) — deterministic synthetic init
        self.start_transitions = jax.random.uniform(k1, (num_tags,), jnp.float32, -0.1, 0.1)
        self.end_transitions = jax.random.uniform(k2, (num_tags,), jnp.float32, -0.1, 0.1)
        self.transitions = jax.random.uniform(k3, (num_tags, num_tags), jnp.float32, -0.1, 0.1)

    def forward(self, emissions, tags, mask=None, reduction='token_mean',
                neg_loglikelihood=True):
        if mask is None:
            mask = jnp.ones(tags.shape, dtype=jnp.float32)
        # NOTE: like the PyTorch module, a strict prefix mask with mask[0] == 1 is assumed.
        if self.batch_first:
            emissions = jnp.transpose(emissions, (1, 2, 0))     # (B,T,K) -> (T,K,B)
            tags = jnp.transpose(tags, (1, 0))
            mask = jnp.transpose(mask, (1, 0))
        else:
            emissions = jnp.transpose(emissions, (0, 2, 1))     # (T,B,K) -> (T,K,B)
        # emissions are streamed at their incoming dtype (f32 / bf16); the kernel
        # upcasts tiles to f32 internally, so bf16 callers halve emission HBM traffic.
        tags = tags.astype(jnp.int32)
        mask_f = mask.astype(jnp.float32)

        ll = crf_loglikelihood_pallas(
            emissions, tags, mask_f,
            self.start_transitions, self.end_transitions, self.transitions)  # (B,)

        if reduction == 'sum':
            out = ll.sum()
        elif reduction == 'mean':
            out = ll.mean()
        elif reduction == 'token_mean':
            out = ll.sum() / mask_f.sum()
        else:
            raise Exception('reduction not recognized!')
        return -out if neg_loglikelihood else out

    # TODO(synk): viterbi_decode (host-side Python-list backtracking) and save/load
    # (file I/O) have no clean in-kernel equivalent and are not implemented.


# ------------------------ pure-numpy reference (time-major, batch-second) -------
def reference_crf_nll(emissions, tags, mask, start, end, trans, reduction='token_mean'):
    """Direct transcription of the PyTorch CRF forward. emissions (T,B,K)."""
    em = np.asarray(emissions, np.float64)
    tg = np.asarray(tags, np.int64)
    mk = np.asarray(mask, np.float64)
    st = np.asarray(start, np.float64)
    en = np.asarray(end, np.float64)
    tr = np.asarray(trans, np.float64)
    T, B, K = em.shape

    # numerator
    score = st[tg[0]] + em[0, np.arange(B), tg[0]]
    for i in range(1, T):
        score += tr[tg[i - 1], tg[i]] * mk[i]
        score += em[i, np.arange(B), tg[i]] * mk[i]
    seq_ends = mk.sum(0).astype(np.int64) - 1
    score += en[tg[seq_ends, np.arange(B)]]
    numerator = score

    # denominator
    sc = st[None, :] + em[0]
    for i in range(1, T):
        x = sc[:, :, None] + tr[None, :, :] + em[i][:, None, :]
        m = x.max(axis=1, keepdims=True)
        nxt = (m + np.log(np.exp(x - m).sum(axis=1, keepdims=True)))[:, 0, :]
        sc = np.where(mk[i][:, None] > 0, nxt, sc)
    sc = sc + en[None, :]
    m = sc.max(axis=1, keepdims=True)
    denominator = (m + np.log(np.exp(sc - m).sum(axis=1, keepdims=True)))[:, 0]

    ll = numerator - denominator
    if reduction == 'token_mean':
        return -(ll.sum() / mk.sum())
    raise ValueError


if __name__ == "__main__":
    def run_case(B, T, K, seed, lengths):
        key = jax.random.PRNGKey(seed)
        ke, kt = jax.random.split(key, 2)
        emissions = jax.random.normal(ke, (B, T, K), jnp.float32)      # batch-first
        tags = jax.random.randint(kt, (B, T), 0, K, jnp.int32)
        lengths = np.asarray(lengths)
        mask_np = (np.arange(T)[None, :] < lengths[:, None]).astype(np.float32)
        mask = jnp.asarray(mask_np)

        crf = CRFPallas(num_tags=K, batch_first=True, seed=0)
        loss = crf.forward(emissions, tags, mask, reduction='token_mean',
                           neg_loglikelihood=True)
        loss = float(jax.block_until_ready(loss))

        ref = float(reference_crf_nll(
            np.transpose(np.asarray(emissions), (1, 0, 2)),
            np.asarray(tags).T, mask_np.T,
            np.asarray(crf.start_transitions), np.asarray(crf.end_transitions),
            np.asarray(crf.transitions)))
        # tolerance accounts for the MXU's default bf16-pass f32 matmul precision
        assert np.allclose(loss, ref, rtol=2e-3, atol=2e-3), (B, T, K, loss, ref)

    # primary small case (single time/batch block)
    run_case(B=8, T=12, K=6, seed=0, lengths=[12, 9, 5, 1, 12, 7, 3, 10])
    # multiple time blocks + padded time tail (T=70 -> T_pad=72, Tt=24)
    run_case(B=8, T=70, K=6, seed=1, lengths=[70, 64, 33, 25, 17, 9, 2, 1])
    # multiple batch blocks with a partial edge block (B=130 -> Bblk=128, nb=2)
    run_case(B=130, T=12, K=6, seed=2, lengths=list(np.arange(130) % 12 + 1))

    print("KERNEL_OK")
</pallas_src>

<mosaic_0001>
module attributes {stable_mosaic.version = 11 : i64} {
  func.func @_crf_kernel(%arg0: i32, %arg1: i32, %arg2: memref<12x6x8xf32, #tpu.memory_space<vmem>>, %arg3: memref<12x8xi32, #tpu.memory_space<vmem>>, %arg4: memref<12x8xf32, #tpu.memory_space<vmem>>, %arg5: memref<6x1xf32, #tpu.memory_space<vmem>>, %arg6: memref<6x1xf32, #tpu.memory_space<vmem>>, %arg7: memref<6x6xf32, #tpu.memory_space<vmem>>, %arg8: memref<6x6xf32, #tpu.memory_space<vmem>>, %arg9: memref<6x1xf32, #tpu.memory_space<vmem>>, %arg10: memref<1x8xf32, #tpu.memory_space<vmem>>, %arg11: memref<6x8xf32, #tpu.memory_space<vmem>>, %arg12: memref<1x8xf32, #tpu.memory_space<vmem>>, %arg13: memref<1x8xf32, #tpu.memory_space<vmem>>, %arg14: memref<6x8xf32, #tpu.memory_space<vmem>>) attributes {dimension_semantics = [#tpu.dimension_semantics<parallel>, #tpu.dimension_semantics<arbitrary>], iteration_bounds = array<i64: 1, 1>, scalar_prefetch = 0 : i64, scratch_operands = 4 : i64, tpu.core_type = #tpu.core_type<tc>, window_params = [{transform_indices = @transform_0, window_bounds = array<i64: 12, 6, 8>}, {transform_indices = @transform_1, window_bounds = array<i64: 12, 8>}, {transform_indices = @transform_2, window_bounds = array<i64: 12, 8>}, {pipeline_mode = #tpu.pipeline_mode<synchronous>, transform_indices = @transform_3, window_bounds = array<i64: 6, 1>}, {pipeline_mode = #tpu.pipeline_mode<synchronous>, transform_indices = @transform_4, window_bounds = array<i64: 6, 1>}, {pipeline_mode = #tpu.pipeline_mode<synchronous>, transform_indices = @transform_5, window_bounds = array<i64: 6, 6>}, {pipeline_mode = #tpu.pipeline_mode<synchronous>, transform_indices = @transform_6, window_bounds = array<i64: 6, 6>}, {pipeline_mode = #tpu.pipeline_mode<synchronous>, transform_indices = @transform_7, window_bounds = array<i64: 6, 1>}, {transform_indices = @transform_8, window_bounds = array<i64: 1, 8>}]} {
    %c0 = arith.constant 0 : index
    %c0_0 = arith.constant 0 : index
    %0 = vector.load %arg5[%c0, %c0_0] : memref<6x1xf32, #tpu.memory_space<vmem>>, vector<6x1xf32>
    %c0_1 = arith.constant 0 : index
    %c0_2 = arith.constant 0 : index
    %1 = vector.load %arg6[%c0_1, %c0_2] : memref<6x1xf32, #tpu.memory_space<vmem>>, vector<6x1xf32>
    %c0_3 = arith.constant 0 : index
    %c0_4 = arith.constant 0 : index
    %2 = vector.load %arg7[%c0_3, %c0_4] : memref<6x6xf32, #tpu.memory_space<vmem>>, vector<6x6xf32>
    %c0_5 = arith.constant 0 : index
    %c0_6 = arith.constant 0 : index
    %3 = vector.load %arg8[%c0_5, %c0_6] : memref<6x6xf32, #tpu.memory_space<vmem>>, vector<6x6xf32>
    %c0_7 = arith.constant 0 : index
    %c0_8 = arith.constant 0 : index
    %4 = vector.load %arg9[%c0_7, %c0_8] : memref<6x1xf32, #tpu.memory_space<vmem>>, vector<6x1xf32>
    %cst = arith.constant 0.000000e+00 : f32
    %5 = vector.broadcast %cst : f32 to vector<6x8xf32>
    %6 = vector.broadcast %1 : vector<6x1xf32> to vector<6x8xf32>
    %7 = arith.addf %6, %5 : vector<6x8xf32>
    %8 = vector.broadcast %4 : vector<6x1xf32> to vector<6x8xf32>
    %9 = arith.addf %8, %5 : vector<6x8xf32>
    %10 = tpu.iota {dimensions = array<i32: 0>} : vector<6x8xi32>
    %c0_i32 = arith.constant 0 : i32
    %11 = arith.cmpi eq, %arg1, %c0_i32 : i32
    %12 = arith.extui %11 : i1 to i32
    %c0_i32_9 = arith.constant 0 : i32
    %13 = arith.cmpi ne, %12, %c0_i32_9 : i32
    scf.if %13 {
      %c0_210 = arith.constant 0 : index
      %c0_211 = arith.constant 0 : index
      %c0_212 = arith.constant 0 : index
      %522 = vector.load %arg2[%c0_210, %c0_211, %c0_212] : memref<12x6x8xf32, #tpu.memory_space<vmem>>, vector<1x6x8xf32>
      %523 = vector.shape_cast %522 : vector<1x6x8xf32> to vector<6x8xf32>
      %c0_213 = arith.constant 0 : index
      %c0_214 = arith.constant 0 : index
      %524 = vector.load %arg3[%c0_213, %c0_214] : memref<12x8xi32, #tpu.memory_space<vmem>>, vector<1x8xi32>
      %525 = vector.broadcast %524 : vector<1x8xi32> to vector<6x8xi32>
      %526 = arith.cmpi eq, %10, %525 : vector<6x8xi32>
      %527 = arith.extui %526 : vector<6x8xi1> to vector<6x8xi32>
      %528 = arith.sitofp %527 : vector<6x8xi32> to vector<6x8xf32>
      %529 = vector.broadcast %0 : vector<6x1xf32> to vector<6x8xf32>
      %530 = arith.addf %529, %523 : vector<6x8xf32>
      %c0_215 = arith.constant 0 : index
      %c0_216 = arith.constant 0 : index
      %531 = vector.load %arg11[%c0_215, %c0_216] : memref<6x8xf32, #tpu.memory_space<vmem>>, vector<6x8xf32>
      tpu.vector_store %arg11[%c0_215, %c0_216], %530 {strides = array<i32>} : memref<6x8xf32, #tpu.memory_space<vmem>>, vector<6x8xf32>,
      %532 = arith.mulf %530, %528 : vector<6x8xf32>
      %cst_217 = arith.constant dense<0.000000e+00> : vector<8xf32>
      %533 = vector.multi_reduction <add>, %532, %cst_217 [0] : vector<6x8xf32> to vector<8xf32>
      %534 = vector.shape_cast %533 : vector<8xf32> to vector<1x8xf32>
      %c0_218 = arith.constant 0 : index
      %c0_219 = arith.constant 0 : index
      %535 = vector.load %arg12[%c0_218, %c0_219] : memref<1x8xf32, #tpu.memory_space<vmem>>, vector<1x8xf32>
      tpu.vector_store %arg12[%c0_218, %c0_219], %534 {strides = array<i32>} : memref<1x8xf32, #tpu.memory_space<vmem>>, vector<1x8xf32>,
      %536 = arith.mulf %7, %528 : vector<6x8xf32>
      %cst_220 = arith.constant dense<0.000000e+00> : vector<8xf32>
      %537 = vector.multi_reduction <add>, %536, %cst_220 [0] : vector<6x8xf32> to vector<8xf32>
      %538 = vector.shape_cast %537 : vector<8xf32> to vector<1x8xf32>
      %c0_221 = arith.constant 0 : index
      %c0_222 = arith.constant 0 : index
      %539 = vector.load %arg13[%c0_221, %c0_222] : memref<1x8xf32, #tpu.memory_space<vmem>>, vector<1x8xf32>
      tpu.vector_store %arg13[%c0_221, %c0_222], %538 {strides = array<i32>} : memref<1x8xf32, #tpu.memory_space<vmem>>, vector<1x8xf32>,
      %c0_223 = arith.constant 0 : index
      %c0_224 = arith.constant 0 : index
      %540 = vector.load %arg14[%c0_223, %c0_224] : memref<6x8xf32, #tpu.memory_space<vmem>>, vector<6x8xf32>
      tpu.vector_store %arg14[%c0_223, %c0_224], %528 {strides = array<i32>} : memref<6x8xf32, #tpu.memory_space<vmem>>, vector<6x8xf32>,
    } else {
    }
    %c0_10 = arith.constant 0 : index
    %c0_11 = arith.constant 0 : index
    %14 = vector.load %arg11[%c0_10, %c0_11] : memref<6x8xf32, #tpu.memory_space<vmem>>, vector<6x8xf32>
    %c0_12 = arith.constant 0 : index
    %c0_13 = arith.constant 0 : index
    %15 = vector.load %arg12[%c0_12, %c0_13] : memref<1x8xf32, #tpu.memory_space<vmem>>, vector<1x8xf32>
    %c0_14 = arith.constant 0 : index
    %c0_15 = arith.constant 0 : index
    %16 = vector.load %arg13[%c0_14, %c0_15] : memref<1x8xf32, #tpu.memory_space<vmem>>, vector<1x8xf32>
    %c0_16 = arith.constant 0 : index
    %c0_17 = arith.constant 0 : index
    %17 = vector.load %arg14[%c0_16, %c0_17] : memref<6x8xf32, #tpu.memory_space<vmem>>, vector<6x8xf32>
    %c0_i32_18 = arith.constant 0 : i32
    %18 = arith.cmpi sgt, %arg1, %c0_i32_18 : i32
    %19 = arith.extui %18 : i1 to i32
    %20 = arith.sitofp %19 : i32 to f32
    %c0_19 = arith.constant 0 : index
    %c0_20 = arith.constant 0 : index
    %c0_21 = arith.constant 0 : index
    %21 = vector.load %arg2[%c0_19, %c0_20, %c0_21] : memref<12x6x8xf32, #tpu.memory_space<vmem>>, vector<1x6x8xf32>
    %22 = vector.shape_cast %21 : vector<1x6x8xf32> to vector<6x8xf32>
    %c0_22 = arith.constant 0 : index
    %c0_23 = arith.constant 0 : index
    %23 = vector.load %arg3[%c0_22, %c0_23] : memref<12x8xi32, #tpu.memory_space<vmem>>, vector<1x8xi32>
    %c0_24 = arith.constant 0 : index
    %c0_25 = arith.constant 0 : index
    %24 = vector.load %arg4[%c0_24, %c0_25] : memref<12x8xf32, #tpu.memory_space<vmem>>, vector<1x8xf32>
    %25 = vector.broadcast %20 : f32 to vector<1x8xf32>
    %26 = arith.mulf %24, %25 : vector<1x8xf32>
    %27 = vector.broadcast %23 : vector<1x8xi32> to vector<6x8xi32>
    %28 = arith.cmpi eq, %10, %27 : vector<6x8xi32>
    %29 = arith.extui %28 : vector<6x8xi1> to vector<6x8xi32>
    %30 = arith.sitofp %29 : vector<6x8xi32> to vector<6x8xf32>
    %cst_26 = arith.constant dense<0.000000e+00> : vector<6x8xf32>
    %31 = tpu.matmul %2, %30, %cst_26 {dimension_numbers = #tpu.dot_dimension_numbers<[1], [0], [0], [1], [0, 0, 1, 1], [], []>} : vector<6x6xf32>, vector<6x8xf32>, vector<6x8xf32> -> vector<6x8xf32>
    %32 = arith.mulf %17, %31 : vector<6x8xf32>
    %33 = arith.mulf %22, %30 : vector<6x8xf32>
    %34 = arith.addf %32, %33 : vector<6x8xf32>
    %cst_27 = arith.constant dense<0.000000e+00> : vector<8xf32>
    %35 = vector.multi_reduction <add>, %34, %cst_27 [0] : vector<6x8xf32> to vector<8xf32>
    %36 = vector.shape_cast %35 : vector<8xf32> to vector<1x8xf32>
    %cst_28 = arith.constant 0.000000e+00 : f32
    %37 = vector.broadcast %cst_28 : f32 to vector<1x8xf32>
    %38 = arith.cmpf ogt, %26, %37 : vector<1x8xf32>
    %cst_29 = arith.constant 0.000000e+00 : f32
    %39 = vector.broadcast %cst_29 : f32 to vector<1x8xf32>
    %40 = arith.select %38, %36, %39 : vector<1x8xi1>, vector<1x8xf32>
    %41 = arith.addf %15, %40 : vector<1x8xf32>
    %42 = arith.mulf %7, %30 : vector<6x8xf32>
    %cst_30 = arith.constant dense<0.000000e+00> : vector<8xf32>
    %43 = vector.multi_reduction <add>, %42, %cst_30 [0] : vector<6x8xf32> to vector<8xf32>
    %44 = vector.shape_cast %43 : vector<8xf32> to vector<1x8xf32>
    %cst_31 = arith.constant 0.000000e+00 : f32
    %45 = vector.broadcast %cst_31 : f32 to vector<1x8xf32>
    %46 = arith.cmpf ogt, %26, %45 : vector<1x8xf32>
    %47 = arith.select %46, %44, %16 : vector<1x8xi1>, vector<1x8xf32>
    %cst_32 = arith.constant dense<0xFF800000> : vector<8xf32>
    %48 = vector.multi_reduction <maximumf>, %14, %cst_32 [0] : vector<6x8xf32> to vector<8xf32>
    %49 = vector.shape_cast %48 : vector<8xf32> to vector<1x8xf32>
    %50 = vector.broadcast %49 : vector<1x8xf32> to vector<6x8xf32>
    %51 = arith.subf %14, %50 : vector<6x8xf32>
    %52 = math.exp %51 : vector<6x8xf32>
    %cst_33 = arith.constant dense<0.000000e+00> : vector<6x8xf32>
    %53 = tpu.matmul %3, %52, %cst_33 {dimension_numbers = #tpu.dot_dimension_numbers<[1], [0], [0], [1], [0, 0, 1, 1], [], []>} : vector<6x6xf32>, vector<6x8xf32>, vector<6x8xf32> -> vector<6x8xf32>
    %54 = arith.addf %22, %9 : vector<6x8xf32>
    %55 = vector.broadcast %49 : vector<1x8xf32> to vector<6x8xf32>
    %56 = arith.addf %54, %55 : vector<6x8xf32>
    %57 = math.log %53 : vector<6x8xf32>
    %58 = arith.addf %56, %57 : vector<6x8xf32>
    %cst_34 = arith.constant 0.000000e+00 : f32
    %59 = vector.broadcast %cst_34 : f32 to vector<1x8xf32>
    %60 = arith.cmpf ogt, %26, %59 : vector<1x8xf32>
    %61 = vector.shape_cast %60 : vector<1x8xi1> to vector<1x8xi1>
    %62 = vector.broadcast %61 : vector<1x8xi1> to vector<6x8xi1>
    %63 = arith.select %62, %58, %14 : vector<6x8xi1>, vector<6x8xf32>
    %c1 = arith.constant 1 : index
    %c0_35 = arith.constant 0 : index
    %c0_36 = arith.constant 0 : index
    %64 = vector.load %arg2[%c1, %c0_35, %c0_36] : memref<12x6x8xf32, #tpu.memory_space<vmem>>, vector<1x6x8xf32>
    %65 = vector.shape_cast %64 : vector<1x6x8xf32> to vector<6x8xf32>
    %c1_37 = arith.constant 1 : index
    %c0_38 = arith.constant 0 : index
    %66 = vector.load %arg3[%c1_37, %c0_38] : memref<12x8xi32, #tpu.memory_space<vmem>>, vector<1x8xi32>
    %c1_39 = arith.constant 1 : index
    %c0_40 = arith.constant 0 : index
    %67 = vector.load %arg4[%c1_39, %c0_40] : memref<12x8xf32, #tpu.memory_space<vmem>>, vector<1x8xf32>
    %68 = vector.broadcast %66 : vector<1x8xi32> to vector<6x8xi32>
    %69 = arith.cmpi eq, %10, %68 : vector<6x8xi32>
    %70 = arith.extui %69 : vector<6x8xi1> to vector<6x8xi32>
    %71 = arith.sitofp %70 : vector<6x8xi32> to vector<6x8xf32>
    %cst_41 = arith.constant dense<0.000000e+00> : vector<6x8xf32>
    %72 = tpu.matmul %2, %71, %cst_41 {dimension_numbers = #tpu.dot_dimension_numbers<[1], [0], [0], [1], [0, 0, 1, 1], [], []>} : vector<6x6xf32>, vector<6x8xf32>, vector<6x8xf32> -> vector<6x8xf32>
    %73 = arith.mulf %30, %72 : vector<6x8xf32>
    %74 = arith.mulf %65, %71 : vector<6x8xf32>
    %75 = arith.addf %73, %74 : vector<6x8xf32>
    %cst_42 = arith.constant dense<0.000000e+00> : vector<8xf32>
    %76 = vector.multi_reduction <add>, %75, %cst_42 [0] : vector<6x8xf32> to vector<8xf32>
    %77 = vector.shape_cast %76 : vector<8xf32> to vector<1x8xf32>
    %cst_43 = arith.constant 0.000000e+00 : f32
    %78 = vector.broadcast %cst_43 : f32 to vector<1x8xf32>
    %79 = arith.cmpf ogt, %67, %78 : vector<1x8xf32>
    %cst_44 = arith.constant 0.000000e+00 : f32
    %80 = vector.broadcast %cst_44 : f32 to vector<1x8xf32>
    %81 = arith.select %79, %77, %80 : vector<1x8xi1>, vector<1x8xf32>
    %82 = arith.addf %41, %81 : vector<1x8xf32>
    %83 = arith.mulf %7, %71 : vector<6x8xf32>
    %cst_45 = arith.constant dense<0.000000e+00> : vector<8xf32>
    %84 = vector.multi_reduction <add>, %83, %cst_45 [0] : vector<6x8xf32> to vector<8xf32>
    %85 = vector.shape_cast %84 : vector<8xf32> to vector<1x8xf32>
    %cst_46 = arith.constant 0.000000e+00 : f32
    %86 = vector.broadcast %cst_46 : f32 to vector<1x8xf32>
    %87 = arith.cmpf ogt, %67, %86 : vector<1x8xf32>
    %88 = arith.select %87, %85, %47 : vector<1x8xi1>, vector<1x8xf32>
    %cst_47 = arith.constant dense<0xFF800000> : vector<8xf32>
    %89 = vector.multi_reduction <maximumf>, %63, %cst_47 [0] : vector<6x8xf32> to vector<8xf32>
    %90 = vector.shape_cast %89 : vector<8xf32> to vector<1x8xf32>
    %91 = vector.broadcast %90 : vector<1x8xf32> to vector<6x8xf32>
    %92 = arith.subf %63, %91 : vector<6x8xf32>
    %93 = math.exp %92 : vector<6x8xf32>
    %cst_48 = arith.constant dense<0.000000e+00> : vector<6x8xf32>
    %94 = tpu.matmul %3, %93, %cst_48 {dimension_numbers = #tpu.dot_dimension_numbers<[1], [0], [0], [1], [0, 0, 1, 1], [], []>} : vector<6x6xf32>, vector<6x8xf32>, vector<6x8xf32> -> vector<6x8xf32>
    %95 = arith.addf %65, %9 : vector<6x8xf32>
    %96 = vector.broadcast %90 : vector<1x8xf32> to vector<6x8xf32>
    %97 = arith.addf %95, %96 : vector<6x8xf32>
    %98 = math.log %94 : vector<6x8xf32>
    %99 = arith.addf %97, %98 : vector<6x8xf32>
    %cst_49 = arith.constant 0.000000e+00 : f32
    %100 = vector.broadcast %cst_49 : f32 to vector<1x8xf32>
    %101 = arith.cmpf ogt, %67, %100 : vector<1x8xf32>
    %102 = vector.shape_cast %101 : vector<1x8xi1> to vector<1x8xi1>
    %103 = vector.broadcast %102 : vector<1x8xi1> to vector<6x8xi1>
    %104 = arith.select %103, %99, %63 : vector<6x8xi1>, vector<6x8xf32>
    %c2 = arith.constant 2 : index
    %c0_50 = arith.constant 0 : index
    %c0_51 = arith.constant 0 : index
    %105 = vector.load %arg2[%c2, %c0_50, %c0_51] : memref<12x6x8xf32, #tpu.memory_space<vmem>>, vector<1x6x8xf32>
    %106 = vector.shape_cast %105 : vector<1x6x8xf32> to vector<6x8xf32>
    %c2_52 = arith.constant 2 : index
    %c0_53 = arith.constant 0 : index
    %107 = vector.load %arg3[%c2_52, %c0_53] : memref<12x8xi32, #tpu.memory_space<vmem>>, vector<1x8xi32>
    %c2_54 = arith.constant 2 : index
    %c0_55 = arith.constant 0 : index
    %108 = vector.load %arg4[%c2_54, %c0_55] : memref<12x8xf32, #tpu.memory_space<vmem>>, vector<1x8xf32>
    %109 = vector.broadcast %107 : vector<1x8xi32> to vector<6x8xi32>
    %110 = arith.cmpi eq, %10, %109 : vector<6x8xi32>
    %111 = arith.extui %110 : vector<6x8xi1> to vector<6x8xi32>
    %112 = arith.sitofp %111 : vector<6x8xi32> to vector<6x8xf32>
    %cst_56 = arith.constant dense<0.000000e+00> : vector<6x8xf32>
    %113 = tpu.matmul %2, %112, %cst_56 {dimension_numbers = #tpu.dot_dimension_numbers<[1], [0], [0], [1], [0, 0, 1, 1], [], []>} : vector<6x6xf32>, vector<6x8xf32>, vector<6x8xf32> -> vector<6x8xf32>
    %114 = arith.mulf %71, %113 : vector<6x8xf32>
    %115 = arith.mulf %106, %112 : vector<6x8xf32>
    %116 = arith.addf %114, %115 : vector<6x8xf32>
    %cst_57 = arith.constant dense<0.000000e+00> : vector<8xf32>
    %117 = vector.multi_reduction <add>, %116, %cst_57 [0] : vector<6x8xf32> to vector<8xf32>
    %118 = vector.shape_cast %117 : vector<8xf32> to vector<1x8xf32>
    %cst_58 = arith.constant 0.000000e+00 : f32
    %119 = vector.broadcast %cst_58 : f32 to vector<1x8xf32>
    %120 = arith.cmpf ogt, %108, %119 : vector<1x8xf32>
    %cst_59 = arith.constant 0.000000e+00 : f32
    %121 = vector.broadcast %cst_59 : f32 to vector<1x8xf32>
    %122 = arith.select %120, %118, %121 : vector<1x8xi1>, vector<1x8xf32>
    %123 = arith.addf %82, %122 : vector<1x8xf32>
    %124 = arith.mulf %7, %112 : vector<6x8xf32>
    %cst_60 = arith.constant dense<0.000000e+00> : vector<8xf32>
    %125 = vector.multi_reduction <add>, %124, %cst_60 [0] : vector<6x8xf32> to vector<8xf32>
    %126 = vector.shape_cast %125 : vector<8xf32> to vector<1x8xf32>
    %cst_61 = arith.constant 0.000000e+00 : f32
    %127 = vector.broadcast %cst_61 : f32 to vector<1x8xf32>
    %128 = arith.cmpf ogt, %108, %127 : vector<1x8xf32>
    %129 = arith.select %128, %126, %88 : vector<1x8xi1>, vector<1x8xf32>
    %cst_62 = arith.constant dense<0xFF800000> : vector<8xf32>
    %130 = vector.multi_reduction <maximumf>, %104, %cst_62 [0] : vector<6x8xf32> to vector<8xf32>
    %131 = vector.shape_cast %130 : vector<8xf32> to vector<1x8xf32>
    %132 = vector.broadcast %131 : vector<1x8xf32> to vector<6x8xf32>
    %133 = arith.subf %104, %132 : vector<6x8xf32>
    %134 = math.exp %133 : vector<6x8xf32>
    %cst_63 = arith.constant dense<0.000000e+00> : vector<6x8xf32>
    %135 = tpu.matmul %3, %134, %cst_63 {dimension_numbers = #tpu.dot_dimension_numbers<[1], [0], [0], [1], [0, 0, 1, 1], [], []>} : vector<6x6xf32>, vector<6x8xf32>, vector<6x8xf32> -> vector<6x8xf32>
    %136 = arith.addf %106, %9 : vector<6x8xf32>
    %137 = vector.broadcast %131 : vector<1x8xf32> to vector<6x8xf32>
    %138 = arith.addf %136, %137 : vector<6x8xf32>
    %139 = math.log %135 : vector<6x8xf32>
    %140 = arith.addf %138, %139 : vector<6x8xf32>
    %cst_64 = arith.constant 0.000000e+00 : f32
    %141 = vector.broadcast %cst_64 : f32 to vector<1x8xf32>
    %142 = arith.cmpf ogt, %108, %141 : vector<1x8xf32>
    %143 = vector.shape_cast %142 : vector<1x8xi1> to vector<1x8xi1>
    %144 = vector.broadcast %143 : vector<1x8xi1> to vector<6x8xi1>
    %145 = arith.select %144, %140, %104 : vector<6x8xi1>, vector<6x8xf32>
    %c3 = arith.constant 3 : index
    %c0_65 = arith.constant 0 : index
    %c0_66 = arith.constant 0 : index
    %146 = vector.load %arg2[%c3, %c0_65, %c0_66] : memref<12x6x8xf32, #tpu.memory_space<vmem>>, vector<1x6x8xf32>
    %147 = vector.shape_cast %146 : vector<1x6x8xf32> to vector<6x8xf32>
    %c3_67 = arith.constant 3 : index
    %c0_68 = arith.constant 0 : index
    %148 = vector.load %arg3[%c3_67, %c0_68] : memref<12x8xi32, #tpu.memory_space<vmem>>, vector<1x8xi32>
    %c3_69 = arith.constant 3 : index
    %c0_70 = arith.constant 0 : index
    %149 = vector.load %arg4[%c3_69, %c0_70] : memref<12x8xf32, #tpu.memory_space<vmem>>, vector<1x8xf32>
    %150 = vector.broadcast %148 : vector<1x8xi32> to vector<6x8xi32>
    %151 = arith.cmpi eq, %10, %150 : vector<6x8xi32>
    %152 = arith.extui %151 : vector<6x8xi1> to vector<6x8xi32>
    %153 = arith.sitofp %152 : vector<6x8xi32> to vector<6x8xf32>
    %cst_71 = arith.constant dense<0.000000e+00> : vector<6x8xf32>
    %154 = tpu.matmul %2, %153, %cst_71 {dimension_numbers = #tpu.dot_dimension_numbers<[1], [0], [0], [1], [0, 0, 1, 1], [], []>} : vector<6x6xf32>, vector<6x8xf32>, vector<6x8xf32> -> vector<6x8xf32>
    %155 = arith.mulf %112, %154 : vector<6x8xf32>
    %156 = arith.mulf %147, %153 : vector<6x8xf32>
    %157 = arith.addf %155, %156 : vector<6x8xf32>
    %cst_72 = arith.constant dense<0.000000e+00> : vector<8xf32>
    %158 = vector.multi_reduction <add>, %157, %cst_72 [0] : vector<6x8xf32> to vector<8xf32>
    %159 = vector.shape_cast %158 : vector<8xf32> to vector<1x8xf32>
    %cst_73 = arith.constant 0.000000e+00 : f32
    %160 = vector.broadcast %cst_73 : f32 to vector<1x8xf32>
    %161 = arith.cmpf ogt, %149, %160 : vector<1x8xf32>
    %cst_74 = arith.constant 0.000000e+00 : f32
    %162 = vector.broadcast %cst_74 : f32 to vector<1x8xf32>
    %163 = arith.select %161, %159, %162 : vector<1x8xi1>, vector<1x8xf32>
    %164 = arith.addf %123, %163 : vector<1x8xf32>
    %165 = arith.mulf %7, %153 : vector<6x8xf32>
    %cst_75 = arith.constant dense<0.000000e+00> : vector<8xf32>
    %166 = vector.multi_reduction <add>, %165, %cst_75 [0] : vector<6x8xf32> to vector<8xf32>
    %167 = vector.shape_cast %166 : vector<8xf32> to vector<1x8xf32>
    %cst_76 = arith.constant 0.000000e+00 : f32
    %168 = vector.broadcast %cst_76 : f32 to vector<1x8xf32>
    %169 = arith.cmpf ogt, %149, %168 : vector<1x8xf32>
    %170 = arith.select %169, %167, %129 : vector<1x8xi1>, vector<1x8xf32>
    %cst_77 = arith.constant dense<0xFF800000> : vector<8xf32>
    %171 = vector.multi_reduction <maximumf>, %145, %cst_77 [0] : vector<6x8xf32> to vector<8xf32>
    %172 = vector.shape_cast %171 : vector<8xf32> to vector<1x8xf32>
    %173 = vector.broadcast %172 : vector<1x8xf32> to vector<6x8xf32>
    %174 = arith.subf %145, %173 : vector<6x8xf32>
    %175 = math.exp %174 : vector<6x8xf32>
    %cst_78 = arith.constant dense<0.000000e+00> : vector<6x8xf32>
    %176 = tpu.matmul %3, %175, %cst_78 {dimension_numbers = #tpu.dot_dimension_numbers<[1], [0], [0], [1], [0, 0, 1, 1], [], []>} : vector<6x6xf32>, vector<6x8xf32>, vector<6x8xf32> -> vector<6x8xf32>
    %177 = arith.addf %147, %9 : vector<6x8xf32>
    %178 = vector.broadcast %172 : vector<1x8xf32> to vector<6x8xf32>
    %179 = arith.addf %177, %178 : vector<6x8xf32>
    %180 = math.log %176 : vector<6x8xf32>
    %181 = arith.addf %179, %180 : vector<6x8xf32>
    %cst_79 = arith.constant 0.000000e+00 : f32
    %182 = vector.broadcast %cst_79 : f32 to vector<1x8xf32>
    %183 = arith.cmpf ogt, %149, %182 : vector<1x8xf32>
    %184 = vector.shape_cast %183 : vector<1x8xi1> to vector<1x8xi1>
    %185 = vector.broadcast %184 : vector<1x8xi1> to vector<6x8xi1>
    %186 = arith.select %185, %181, %145 : vector<6x8xi1>, vector<6x8xf32>
    %c4 = arith.constant 4 : index
    %c0_80 = arith.constant 0 : index
    %c0_81 = arith.constant 0 : index
    %187 = vector.load %arg2[%c4, %c0_80, %c0_81] : memref<12x6x8xf32, #tpu.memory_space<vmem>>, vector<1x6x8xf32>
    %188 = vector.shape_cast %187 : vector<1x6x8xf32> to vector<6x8xf32>
    %c4_82 = arith.constant 4 : index
    %c0_83 = arith.constant 0 : index
    %189 = vector.load %arg3[%c4_82, %c0_83] : memref<12x8xi32, #tpu.memory_space<vmem>>, vector<1x8xi32>
    %c4_84 = arith.constant 4 : index
    %c0_85 = arith.constant 0 : index
    %190 = vector.load %arg4[%c4_84, %c0_85] : memref<12x8xf32, #tpu.memory_space<vmem>>, vector<1x8xf32>
    %191 = vector.broadcast %189 : vector<1x8xi32> to vector<6x8xi32>
    %192 = arith.cmpi eq, %10, %191 : vector<6x8xi32>
    %193 = arith.extui %192 : vector<6x8xi1> to vector<6x8xi32>
    %194 = arith.sitofp %193 : vector<6x8xi32> to vector<6x8xf32>
    %cst_86 = arith.constant dense<0.000000e+00> : vector<6x8xf32>
    %195 = tpu.matmul %2, %194, %cst_86 {dimension_numbers = #tpu.dot_dimension_numbers<[1], [0], [0], [1], [0, 0, 1, 1], [], []>} : vector<6x6xf32>, vector<6x8xf32>, vector<6x8xf32> -> vector<6x8xf32>
    %196 = arith.mulf %153, %195 : vector<6x8xf32>
    %197 = arith.mulf %188, %194 : vector<6x8xf32>
    %198 = arith.addf %196, %197 : vector<6x8xf32>
    %cst_87 = arith.constant dense<0.000000e+00> : vector<8xf32>
    %199 = vector.multi_reduction <add>, %198, %cst_87 [0] : vector<6x8xf32> to vector<8xf32>
    %200 = vector.shape_cast %199 : vector<8xf32> to vector<1x8xf32>
    %cst_88 = arith.constant 0.000000e+00 : f32
    %201 = vector.broadcast %cst_88 : f32 to vector<1x8xf32>
    %202 = arith.cmpf ogt, %190, %201 : vector<1x8xf32>
    %cst_89 = arith.constant 0.000000e+00 : f32
    %203 = vector.broadcast %cst_89 : f32 to vector<1x8xf32>
    %204 = arith.select %202, %200, %203 : vector<1x8xi1>, vector<1x8xf32>
    %205 = arith.addf %164, %204 : vector<1x8xf32>
    %206 = arith.mulf %7, %194 : vector<6x8xf32>
    %cst_90 = arith.constant dense<0.000000e+00> : vector<8xf32>
    %207 = vector.multi_reduction <add>, %206, %cst_90 [0] : vector<6x8xf32> to vector<8xf32>
    %208 = vector.shape_cast %207 : vector<8xf32> to vector<1x8xf32>
    %cst_91 = arith.constant 0.000000e+00 : f32
    %209 = vector.broadcast %cst_91 : f32 to vector<1x8xf32>
    %210 = arith.cmpf ogt, %190, %209 : vector<1x8xf32>
    %211 = arith.select %210, %208, %170 : vector<1x8xi1>, vector<1x8xf32>
    %cst_92 = arith.constant dense<0xFF800000> : vector<8xf32>
    %212 = vector.multi_reduction <maximumf>, %186, %cst_92 [0] : vector<6x8xf32> to vector<8xf32>
    %213 = vector.shape_cast %212 : vector<8xf32> to vector<1x8xf32>
    %214 = vector.broadcast %213 : vector<1x8xf32> to vector<6x8xf32>
    %215 = arith.subf %186, %214 : vector<6x8xf32>
    %216 = math.exp %215 : vector<6x8xf32>
    %cst_93 = arith.constant dense<0.000000e+00> : vector<6x8xf32>
    %217 = tpu.matmul %3, %216, %cst_93 {dimension_numbers = #tpu.dot_dimension_numbers<[1], [0], [0], [1], [0, 0, 1, 1], [], []>} : vector<6x6xf32>, vector<6x8xf32>, vector<6x8xf32> -> vector<6x8xf32>
    %218 = arith.addf %188, %9 : vector<6x8xf32>
    %219 = vector.broadcast %213 : vector<1x8xf32> to vector<6x8xf32>
    %220 = arith.addf %218, %219 : vector<6x8xf32>
    %221 = math.log %217 : vector<6x8xf32>
    %222 = arith.addf %220, %221 : vector<6x8xf32>
    %cst_94 = arith.constant 0.000000e+00 : f32
    %223 = vector.broadcast %cst_94 : f32 to vector<1x8xf32>
    %224 = arith.cmpf ogt, %190, %223 : vector<1x8xf32>
    %225 = vector.shape_cast %224 : vector<1x8xi1> to vector<1x8xi1>
    %226 = vector.broadcast %225 : vector<1x8xi1> to vector<6x8xi1>
    %227 = arith.select %226, %222, %186 : vector<6x8xi1>, vector<6x8xf32>
    %c5 = arith.constant 5 : index
    %c0_95 = arith.constant 0 : index
    %c0_96 = arith.constant 0 : index
    %228 = vector.load %arg2[%c5, %c0_95, %c0_96] : memref<12x6x8xf32, #tpu.memory_space<vmem>>, vector<1x6x8xf32>
    %229 = vector.shape_cast %228 : vector<1x6x8xf32> to vector<6x8xf32>
    %c5_97 = arith.constant 5 : index
    %c0_98 = arith.constant 0 : index
    %230 = vector.load %arg3[%c5_97, %c0_98] : memref<12x8xi32, #tpu.memory_space<vmem>>, vector<1x8xi32>
    %c5_99 = arith.constant 5 : index
    %c0_100 = arith.constant 0 : index
    %231 = vector.load %arg4[%c5_99, %c0_100] : memref<12x8xf32, #tpu.memory_space<vmem>>, vector<1x8xf32>
    %232 = vector.broadcast %230 : vector<1x8xi32> to vector<6x8xi32>
    %233 = arith.cmpi eq, %10, %232 : vector<6x8xi32>
    %234 = arith.extui %233 : vector<6x8xi1> to vector<6x8xi32>
    %235 = arith.sitofp %234 : vector<6x8xi32> to vector<6x8xf32>
    %cst_101 = arith.constant dense<0.000000e+00> : vector<6x8xf32>
    %236 = tpu.matmul %2, %235, %cst_101 {dimension_numbers = #tpu.dot_dimension_numbers<[1], [0], [0], [1], [0, 0, 1, 1], [], []>} : vector<6x6xf32>, vector<6x8xf32>, vector<6x8xf32> -> vector<6x8xf32>
    %237 = arith.mulf %194, %236 : vector<6x8xf32>
    %238 = arith.mulf %229, %235 : vector<6x8xf32>
    %239 = arith.addf %237, %238 : vector<6x8xf32>
    %cst_102 = arith.constant dense<0.000000e+00> : vector<8xf32>
    %240 = vector.multi_reduction <add>, %239, %cst_102 [0] : vector<6x8xf32> to vector<8xf32>
    %241 = vector.shape_cast %240 : vector<8xf32> to vector<1x8xf32>
    %cst_103 = arith.constant 0.000000e+00 : f32
    %242 = vector.broadcast %cst_103 : f32 to vector<1x8xf32>
    %243 = arith.cmpf ogt, %231, %242 : vector<1x8xf32>
    %cst_104 = arith.constant 0.000000e+00 : f32
    %244 = vector.broadcast %cst_104 : f32 to vector<1x8xf32>
    %245 = arith.select %243, %241, %244 : vector<1x8xi1>, vector<1x8xf32>
    %246 = arith.addf %205, %245 : vector<1x8xf32>
    %247 = arith.mulf %7, %235 : vector<6x8xf32>
    %cst_105 = arith.constant dense<0.000000e+00> : vector<8xf32>
    %248 = vector.multi_reduction <add>, %247, %cst_105 [0] : vector<6x8xf32> to vector<8xf32>
    %249 = vector.shape_cast %248 : vector<8xf32> to vector<1x8xf32>
    %cst_106 = arith.constant 0.000000e+00 : f32
    %250 = vector.broadcast %cst_106 : f32 to vector<1x8xf32>
    %251 = arith.cmpf ogt, %231, %250 : vector<1x8xf32>
    %252 = arith.select %251, %249, %211 : vector<1x8xi1>, vector<1x8xf32>
    %cst_107 = arith.constant dense<0xFF800000> : vector<8xf32>
    %253 = vector.multi_reduction <maximumf>, %227, %cst_107 [0] : vector<6x8xf32> to vector<8xf32>
    %254 = vector.shape_cast %253 : vector<8xf32> to vector<1x8xf32>
    %255 = vector.broadcast %254 : vector<1x8xf32> to vector<6x8xf32>
    %256 = arith.subf %227, %255 : vector<6x8xf32>
    %257 = math.exp %256 : vector<6x8xf32>
    %cst_108 = arith.constant dense<0.000000e+00> : vector<6x8xf32>
    %258 = tpu.matmul %3, %257, %cst_108 {dimension_numbers = #tpu.dot_dimension_numbers<[1], [0], [0], [1], [0, 0, 1, 1], [], []>} : vector<6x6xf32>, vector<6x8xf32>, vector<6x8xf32> -> vector<6x8xf32>
    %259 = arith.addf %229, %9 : vector<6x8xf32>
    %260 = vector.broadcast %254 : vector<1x8xf32> to vector<6x8xf32>
    %261 = arith.addf %259, %260 : vector<6x8xf32>
    %262 = math.log %258 : vector<6x8xf32>
    %263 = arith.addf %261, %262 : vector<6x8xf32>
    %cst_109 = arith.constant 0.000000e+00 : f32
    %264 = vector.broadcast %cst_109 : f32 to vector<1x8xf32>
    %265 = arith.cmpf ogt, %231, %264 : vector<1x8xf32>
    %266 = vector.shape_cast %265 : vector<1x8xi1> to vector<1x8xi1>
    %267 = vector.broadcast %266 : vector<1x8xi1> to vector<6x8xi1>
    %268 = arith.select %267, %263, %227 : vector<6x8xi1>, vector<6x8xf32>
    %c6 = arith.constant 6 : index
    %c0_110 = arith.constant 0 : index
    %c0_111 = arith.constant 0 : index
    %269 = vector.load %arg2[%c6, %c0_110, %c0_111] : memref<12x6x8xf32, #tpu.memory_space<vmem>>, vector<1x6x8xf32>
    %270 = vector.shape_cast %269 : vector<1x6x8xf32> to vector<6x8xf32>
    %c6_112 = arith.constant 6 : index
    %c0_113 = arith.constant 0 : index
    %271 = vector.load %arg3[%c6_112, %c0_113] : memref<12x8xi32, #tpu.memory_space<vmem>>, vector<1x8xi32>
    %c6_114 = arith.constant 6 : index
    %c0_115 = arith.constant 0 : index
    %272 = vector.load %arg4[%c6_114, %c0_115] : memref<12x8xf32, #tpu.memory_space<vmem>>, vector<1x8xf32>
    %273 = vector.broadcast %271 : vector<1x8xi32> to vector<6x8xi32>
    %274 = arith.cmpi eq, %10, %273 : vector<6x8xi32>
    %275 = arith.extui %274 : vector<6x8xi1> to vector<6x8xi32>
    %276 = arith.sitofp %275 : vector<6x8xi32> to vector<6x8xf32>
    %cst_116 = arith.constant dense<0.000000e+00> : vector<6x8xf32>
    %277 = tpu.matmul %2, %276, %cst_116 {dimension_numbers = #tpu.dot_dimension_numbers<[1], [0], [0], [1], [0, 0, 1, 1], [], []>} : vector<6x6xf32>, vector<6x8xf32>, vector<6x8xf32> -> vector<6x8xf32>
    %278 = arith.mulf %235, %277 : vector<6x8xf32>
    %279 = arith.mulf %270, %276 : vector<6x8xf32>
    %280 = arith.addf %278, %279 : vector<6x8xf32>
    %cst_117 = arith.constant dense<0.000000e+00> : vector<8xf32>
    %281 = vector.multi_reduction <add>, %280, %cst_117 [0] : vector<6x8xf32> to vector<8xf32>
    %282 = vector.shape_cast %281 : vector<8xf32> to vector<1x8xf32>
    %cst_118 = arith.constant 0.000000e+00 : f32
    %283 = vector.broadcast %cst_118 : f32 to vector<1x8xf32>
    %284 = arith.cmpf ogt, %272, %283 : vector<1x8xf32>
    %cst_119 = arith.constant 0.000000e+00 : f32
    %285 = vector.broadcast %cst_119 : f32 to vector<1x8xf32>
    %286 = arith.select %284, %282, %285 : vector<1x8xi1>, vector<1x8xf32>
    %287 = arith.addf %246, %286 : vector<1x8xf32>
    %288 = arith.mulf %7, %276 : vector<6x8xf32>
    %cst_120 = arith.constant dense<0.000000e+00> : vector<8xf32>
    %289 = vector.multi_reduction <add>, %288, %cst_120 [0] : vector<6x8xf32> to vector<8xf32>
    %290 = vector.shape_cast %289 : vector<8xf32> to vector<1x8xf32>
    %cst_121 = arith.constant 0.000000e+00 : f32
    %291 = vector.broadcast %cst_121 : f32 to vector<1x8xf32>
    %292 = arith.cmpf ogt, %272, %291 : vector<1x8xf32>
    %293 = arith.select %292, %290, %252 : vector<1x8xi1>, vector<1x8xf32>
    %cst_122 = arith.constant dense<0xFF800000> : vector<8xf32>
    %294 = vector.multi_reduction <maximumf>, %268, %cst_122 [0] : vector<6x8xf32> to vector<8xf32>
    %295 = vector.shape_cast %294 : vector<8xf32> to vector<1x8xf32>
    %296 = vector.broadcast %295 : vector<1x8xf32> to vector<6x8xf32>
    %297 = arith.subf %268, %296 : vector<6x8xf32>
    %298 = math.exp %297 : vector<6x8xf32>
    %cst_123 = arith.constant dense<0.000000e+00> : vector<6x8xf32>
    %299 = tpu.matmul %3, %298, %cst_123 {dimension_numbers = #tpu.dot_dimension_numbers<[1], [0], [0], [1], [0, 0, 1, 1], [], []>} : vector<6x6xf32>, vector<6x8xf32>, vector<6x8xf32> -> vector<6x8xf32>
    %300 = arith.addf %270, %9 : vector<6x8xf32>
    %301 = vector.broadcast %295 : vector<1x8xf32> to vector<6x8xf32>
    %302 = arith.addf %300, %301 : vector<6x8xf32>
    %303 = math.log %299 : vector<6x8xf32>
    %304 = arith.addf %302, %303 : vector<6x8xf32>
    %cst_124 = arith.constant 0.000000e+00 : f32
    %305 = vector.broadcast %cst_124 : f32 to vector<1x8xf32>
    %306 = arith.cmpf ogt, %272, %305 : vector<1x8xf32>
    %307 = vector.shape_cast %306 : vector<1x8xi1> to vector<1x8xi1>
    %308 = vector.broadcast %307 : vector<1x8xi1> to vector<6x8xi1>
    %309 = arith.select %308, %304, %268 : vector<6x8xi1>, vector<6x8xf32>
    %c7 = arith.constant 7 : index
    %c0_125 = arith.constant 0 : index
    %c0_126 = arith.constant 0 : index
    %310 = vector.load %arg2[%c7, %c0_125, %c0_126] : memref<12x6x8xf32, #tpu.memory_space<vmem>>, vector<1x6x8xf32>
    %311 = vector.shape_cast %310 : vector<1x6x8xf32> to vector<6x8xf32>
    %c7_127 = arith.constant 7 : index
    %c0_128 = arith.constant 0 : index
    %312 = vector.load %arg3[%c7_127, %c0_128] : memref<12x8xi32, #tpu.memory_space<vmem>>, vector<1x8xi32>
    %c7_129 = arith.constant 7 : index
    %c0_130 = arith.constant 0 : index
    %313 = vector.load %arg4[%c7_129, %c0_130] : memref<12x8xf32, #tpu.memory_space<vmem>>, vector<1x8xf32>
    %314 = vector.broadcast %312 : vector<1x8xi32> to vector<6x8xi32>
    %315 = arith.cmpi eq, %10, %314 : vector<6x8xi32>
    %316 = arith.extui %315 : vector<6x8xi1> to vector<6x8xi32>
    %317 = arith.sitofp %316 : vector<6x8xi32> to vector<6x8xf32>
    %cst_131 = arith.constant dense<0.000000e+00> : vector<6x8xf32>
    %318 = tpu.matmul %2, %317, %cst_131 {dimension_numbers = #tpu.dot_dimension_numbers<[1], [0], [0], [1], [0, 0, 1, 1], [], []>} : vector<6x6xf32>, vector<6x8xf32>, vector<6x8xf32> -> vector<6x8xf32>
    %319 = arith.mulf %276, %318 : vector<6x8xf32>
    %320 = arith.mulf %311, %317 : vector<6x8xf32>
    %321 = arith.addf %319, %320 : vector<6x8xf32>
    %cst_132 = arith.constant dense<0.000000e+00> : vector<8xf32>
    %322 = vector.multi_reduction <add>, %321, %cst_132 [0] : vector<6x8xf32> to vector<8xf32>
    %323 = vector.shape_cast %322 : vector<8xf32> to vector<1x8xf32>
    %cst_133 = arith.constant 0.000000e+00 : f32
    %324 = vector.broadcast %cst_133 : f32 to vector<1x8xf32>
    %325 = arith.cmpf ogt, %313, %324 : vector<1x8xf32>
    %cst_134 = arith.constant 0.000000e+00 : f32
    %326 = vector.broadcast %cst_134 : f32 to vector<1x8xf32>
    %327 = arith.select %325, %323, %326 : vector<1x8xi1>, vector<1x8xf32>
    %328 = arith.addf %287, %327 : vector<1x8xf32>
    %329 = arith.mulf %7, %317 : vector<6x8xf32>
    %cst_135 = arith.constant dense<0.000000e+00> : vector<8xf32>
    %330 = vector.multi_reduction <add>, %329, %cst_135 [0] : vector<6x8xf32> to vector<8xf32>
    %331 = vector.shape_cast %330 : vector<8xf32> to vector<1x8xf32>
    %cst_136 = arith.constant 0.000000e+00 : f32
    %332 = vector.broadcast %cst_136 : f32 to vector<1x8xf32>
    %333 = arith.cmpf ogt, %313, %332 : vector<1x8xf32>
    %334 = arith.select %333, %331, %293 : vector<1x8xi1>, vector<1x8xf32>
    %cst_137 = arith.constant dense<0xFF800000> : vector<8xf32>
    %335 = vector.multi_reduction <maximumf>, %309, %cst_137 [0] : vector<6x8xf32> to vector<8xf32>
    %336 = vector.shape_cast %335 : vector<8xf32> to vector<1x8xf32>
    %337 = vector.broadcast %336 : vector<1x8xf32> to vector<6x8xf32>
    %338 = arith.subf %309, %337 : vector<6x8xf32>
    %339 = math.exp %338 : vector<6x8xf32>
    %cst_138 = arith.constant dense<0.000000e+00> : vector<6x8xf32>
    %340 = tpu.matmul %3, %339, %cst_138 {dimension_numbers = #tpu.dot_dimension_numbers<[1], [0], [0], [1], [0, 0, 1, 1], [], []>} : vector<6x6xf32>, vector<6x8xf32>, vector<6x8xf32> -> vector<6x8xf32>
    %341 = arith.addf %311, %9 : vector<6x8xf32>
    %342 = vector.broadcast %336 : vector<1x8xf32> to vector<6x8xf32>
    %343 = arith.addf %341, %342 : vector<6x8xf32>
    %344 = math.log %340 : vector<6x8xf32>
    %345 = arith.addf %343, %344 : vector<6x8xf32>
    %cst_139 = arith.constant 0.000000e+00 : f32
    %346 = vector.broadcast %cst_139 : f32 to vector<1x8xf32>
    %347 = arith.cmpf ogt, %313, %346 : vector<1x8xf32>
    %348 = vector.shape_cast %347 : vector<1x8xi1> to vector<1x8xi1>
    %349 = vector.broadcast %348 : vector<1x8xi1> to vector<6x8xi1>
    %350 = arith.select %349, %345, %309 : vector<6x8xi1>, vector<6x8xf32>
    %c8 = arith.constant 8 : index
    %c0_140 = arith.constant 0 : index
    %c0_141 = arith.constant 0 : index
    %351 = vector.load %arg2[%c8, %c0_140, %c0_141] : memref<12x6x8xf32, #tpu.memory_space<vmem>>, vector<1x6x8xf32>
    %352 = vector.shape_cast %351 : vector<1x6x8xf32> to vector<6x8xf32>
    %c8_142 = arith.constant 8 : index
    %c0_143 = arith.constant 0 : index
    %353 = vector.load %arg3[%c8_142, %c0_143] : memref<12x8xi32, #tpu.memory_space<vmem>>, vector<1x8xi32>
    %c8_144 = arith.constant 8 : index
    %c0_145 = arith.constant 0 : index
    %354 = vector.load %arg4[%c8_144, %c0_145] : memref<12x8xf32, #tpu.memory_space<vmem>>, vector<1x8xf32>
    %355 = vector.broadcast %353 : vector<1x8xi32> to vector<6x8xi32>
    %356 = arith.cmpi eq, %10, %355 : vector<6x8xi32>
    %357 = arith.extui %356 : vector<6x8xi1> to vector<6x8xi32>
    %358 = arith.sitofp %357 : vector<6x8xi32> to vector<6x8xf32>
    %cst_146 = arith.constant dense<0.000000e+00> : vector<6x8xf32>
    %359 = tpu.matmul %2, %358, %cst_146 {dimension_numbers = #tpu.dot_dimension_numbers<[1], [0], [0], [1], [0, 0, 1, 1], [], []>} : vector<6x6xf32>, vector<6x8xf32>, vector<6x8xf32> -> vector<6x8xf32>
    %360 = arith.mulf %317, %359 : vector<6x8xf32>
    %361 = arith.mulf %352, %358 : vector<6x8xf32>
    %362 = arith.addf %360, %361 : vector<6x8xf32>
    %cst_147 = arith.constant dense<0.000000e+00> : vector<8xf32>
    %363 = vector.multi_reduction <add>, %362, %cst_147 [0] : vector<6x8xf32> to vector<8xf32>
    %364 = vector.shape_cast %363 : vector<8xf32> to vector<1x8xf32>
    %cst_148 = arith.constant 0.000000e+00 : f32
    %365 = vector.broadcast %cst_148 : f32 to vector<1x8xf32>
    %366 = arith.cmpf ogt, %354, %365 : vector<1x8xf32>
    %cst_149 = arith.constant 0.000000e+00 : f32
    %367 = vector.broadcast %cst_149 : f32 to vector<1x8xf32>
    %368 = arith.select %366, %364, %367 : vector<1x8xi1>, vector<1x8xf32>
    %369 = arith.addf %328, %368 : vector<1x8xf32>
    %370 = arith.mulf %7, %358 : vector<6x8xf32>
    %cst_150 = arith.constant dense<0.000000e+00> : vector<8xf32>
    %371 = vector.multi_reduction <add>, %370, %cst_150 [0] : vector<6x8xf32> to vector<8xf32>
    %372 = vector.shape_cast %371 : vector<8xf32> to vector<1x8xf32>
    %cst_151 = arith.constant 0.000000e+00 : f32
    %373 = vector.broadcast %cst_151 : f32 to vector<1x8xf32>
    %374 = arith.cmpf ogt, %354, %373 : vector<1x8xf32>
    %375 = arith.select %374, %372, %334 : vector<1x8xi1>, vector<1x8xf32>
    %cst_152 = arith.constant dense<0xFF800000> : vector<8xf32>
    %376 = vector.multi_reduction <maximumf>, %350, %cst_152 [0] : vector<6x8xf32> to vector<8xf32>
    %377 = vector.shape_cast %376 : vector<8xf32> to vector<1x8xf32>
    %378 = vector.broadcast %377 : vector<1x8xf32> to vector<6x8xf32>
    %379 = arith.subf %350, %378 : vector<6x8xf32>
    %380 = math.exp %379 : vector<6x8xf32>
    %cst_153 = arith.constant dense<0.000000e+00> : vector<6x8xf32>
    %381 = tpu.matmul %3, %380, %cst_153 {dimension_numbers = #tpu.dot_dimension_numbers<[1], [0], [0], [1], [0, 0, 1, 1], [], []>} : vector<6x6xf32>, vector<6x8xf32>, vector<6x8xf32> -> vector<6x8xf32>
    %382 = arith.addf %352, %9 : vector<6x8xf32>
    %383 = vector.broadcast %377 : vector<1x8xf32> to vector<6x8xf32>
    %384 = arith.addf %382, %383 : vector<6x8xf32>
    %385 = math.log %381 : vector<6x8xf32>
    %386 = arith.addf %384, %385 : vector<6x8xf32>
    %cst_154 = arith.constant 0.000000e+00 : f32
    %387 = vector.broadcast %cst_154 : f32 to vector<1x8xf32>
    %388 = arith.cmpf ogt, %354, %387 : vector<1x8xf32>
    %389 = vector.shape_cast %388 : vector<1x8xi1> to vector<1x8xi1>
    %390 = vector.broadcast %389 : vector<1x8xi1> to vector<6x8xi1>
    %391 = arith.select %390, %386, %350 : vector<6x8xi1>, vector<6x8xf32>
    %c9 = arith.constant 9 : index
    %c0_155 = arith.constant 0 : index
    %c0_156 = arith.constant 0 : index
    %392 = vector.load %arg2[%c9, %c0_155, %c0_156] : memref<12x6x8xf32, #tpu.memory_space<vmem>>, vector<1x6x8xf32>
    %393 = vector.shape_cast %392 : vector<1x6x8xf32> to vector<6x8xf32>
    %c9_157 = arith.constant 9 : index
    %c0_158 = arith.constant 0 : index
    %394 = vector.load %arg3[%c9_157, %c0_158] : memref<12x8xi32, #tpu.memory_space<vmem>>, vector<1x8xi32>
    %c9_159 = arith.constant 9 : index
    %c0_160 = arith.constant 0 : index
    %395 = vector.load %arg4[%c9_159, %c0_160] : memref<12x8xf32, #tpu.memory_space<vmem>>, vector<1x8xf32>
    %396 = vector.broadcast %394 : vector<1x8xi32> to vector<6x8xi32>
    %397 = arith.cmpi eq, %10, %396 : vector<6x8xi32>
    %398 = arith.extui %397 : vector<6x8xi1> to vector<6x8xi32>
    %399 = arith.sitofp %398 : vector<6x8xi32> to vector<6x8xf32>
    %cst_161 = arith.constant dense<0.000000e+00> : vector<6x8xf32>
    %400 = tpu.matmul %2, %399, %cst_161 {dimension_numbers = #tpu.dot_dimension_numbers<[1], [0], [0], [1], [0, 0, 1, 1], [], []>} : vector<6x6xf32>, vector<6x8xf32>, vector<6x8xf32> -> vector<6x8xf32>
    %401 = arith.mulf %358, %400 : vector<6x8xf32>
    %402 = arith.mulf %393, %399 : vector<6x8xf32>
    %403 = arith.addf %401, %402 : vector<6x8xf32>
    %cst_162 = arith.constant dense<0.000000e+00> : vector<8xf32>
    %404 = vector.multi_reduction <add>, %403, %cst_162 [0] : vector<6x8xf32> to vector<8xf32>
    %405 = vector.shape_cast %404 : vector<8xf32> to vector<1x8xf32>
    %cst_163 = arith.constant 0.000000e+00 : f32
    %406 = vector.broadcast %cst_163 : f32 to vector<1x8xf32>
    %407 = arith.cmpf ogt, %395, %406 : vector<1x8xf32>
    %cst_164 = arith.constant 0.000000e+00 : f32
    %408 = vector.broadcast %cst_164 : f32 to vector<1x8xf32>
    %409 = arith.select %407, %405, %408 : vector<1x8xi1>, vector<1x8xf32>
    %410 = arith.addf %369, %409 : vector<1x8xf32>
    %411 = arith.mulf %7, %399 : vector<6x8xf32>
    %cst_165 = arith.constant dense<0.000000e+00> : vector<8xf32>
    %412 = vector.multi_reduction <add>, %411, %cst_165 [0] : vector<6x8xf32> to vector<8xf32>
    %413 = vector.shape_cast %412 : vector<8xf32> to vector<1x8xf32>
    %cst_166 = arith.constant 0.000000e+00 : f32
    %414 = vector.broadcast %cst_166 : f32 to vector<1x8xf32>
    %415 = arith.cmpf ogt, %395, %414 : vector<1x8xf32>
    %416 = arith.select %415, %413, %375 : vector<1x8xi1>, vector<1x8xf32>
    %cst_167 = arith.constant dense<0xFF800000> : vector<8xf32>
    %417 = vector.multi_reduction <maximumf>, %391, %cst_167 [0] : vector<6x8xf32> to vector<8xf32>
    %418 = vector.shape_cast %417 : vector<8xf32> to vector<1x8xf32>
    %419 = vector.broadcast %418 : vector<1x8xf32> to vector<6x8xf32>
    %420 = arith.subf %391, %419 : vector<6x8xf32>
    %421 = math.exp %420 : vector<6x8xf32>
    %cst_168 = arith.constant dense<0.000000e+00> : vector<6x8xf32>
    %422 = tpu.matmul %3, %421, %cst_168 {dimension_numbers = #tpu.dot_dimension_numbers<[1], [0], [0], [1], [0, 0, 1, 1], [], []>} : vector<6x6xf32>, vector<6x8xf32>, vector<6x8xf32> -> vector<6x8xf32>
    %423 = arith.addf %393, %9 : vector<6x8xf32>
    %424 = vector.broadcast %418 : vector<1x8xf32> to vector<6x8xf32>
    %425 = arith.addf %423, %424 : vector<6x8xf32>
    %426 = math.log %422 : vector<6x8xf32>
    %427 = arith.addf %425, %426 : vector<6x8xf32>
    %cst_169 = arith.constant 0.000000e+00 : f32
    %428 = vector.broadcast %cst_169 : f32 to vector<1x8xf32>
    %429 = arith.cmpf ogt, %395, %428 : vector<1x8xf32>
    %430 = vector.shape_cast %429 : vector<1x8xi1> to vector<1x8xi1>
    %431 = vector.broadcast %430 : vector<1x8xi1> to vector<6x8xi1>
    %432 = arith.select %431, %427, %391 : vector<6x8xi1>, vector<6x8xf32>
    %c10 = arith.constant 10 : index
    %c0_170 = arith.constant 0 : index
    %c0_171 = arith.constant 0 : index
    %433 = vector.load %arg2[%c10, %c0_170, %c0_171] : memref<12x6x8xf32, #tpu.memory_space<vmem>>, vector<1x6x8xf32>
    %434 = vector.shape_cast %433 : vector<1x6x8xf32> to vector<6x8xf32>
    %c10_172 = arith.constant 10 : index
    %c0_173 = arith.constant 0 : index
    %435 = vector.load %arg3[%c10_172, %c0_173] : memref<12x8xi32, #tpu.memory_space<vmem>>, vector<1x8xi32>
    %c10_174 = arith.constant 10 : index
    %c0_175 = arith.constant 0 : index
    %436 = vector.load %arg4[%c10_174, %c0_175] : memref<12x8xf32, #tpu.memory_space<vmem>>, vector<1x8xf32>
    %437 = vector.broadcast %435 : vector<1x8xi32> to vector<6x8xi32>
    %438 = arith.cmpi eq, %10, %437 : vector<6x8xi32>
    %439 = arith.extui %438 : vector<6x8xi1> to vector<6x8xi32>
    %440 = arith.sitofp %439 : vector<6x8xi32> to vector<6x8xf32>
    %cst_176 = arith.constant dense<0.000000e+00> : vector<6x8xf32>
    %441 = tpu.matmul %2, %440, %cst_176 {dimension_numbers = #tpu.dot_dimension_numbers<[1], [0], [0], [1], [0, 0, 1, 1], [], []>} : vector<6x6xf32>, vector<6x8xf32>, vector<6x8xf32> -> vector<6x8xf32>
    %442 = arith.mulf %399, %441 : vector<6x8xf32>
    %443 = arith.mulf %434, %440 : vector<6x8xf32>
    %444 = arith.addf %442, %443 : vector<6x8xf32>
    %cst_177 = arith.constant dense<0.000000e+00> : vector<8xf32>
    %445 = vector.multi_reduction <add>, %444, %cst_177 [0] : vector<6x8xf32> to vector<8xf32>
    %446 = vector.shape_cast %445 : vector<8xf32> to vector<1x8xf32>
    %cst_178 = arith.constant 0.000000e+00 : f32
    %447 = vector.broadcast %cst_178 : f32 to vector<1x8xf32>
    %448 = arith.cmpf ogt, %436, %447 : vector<1x8xf32>
    %cst_179 = arith.constant 0.000000e+00 : f32
    %449 = vector.broadcast %cst_179 : f32 to vector<1x8xf32>
    %450 = arith.select %448, %446, %449 : vector<1x8xi1>, vector<1x8xf32>
    %451 = arith.addf %410, %450 : vector<1x8xf32>
    %452 = arith.mulf %7, %440 : vector<6x8xf32>
    %cst_180 = arith.constant dense<0.000000e+00> : vector<8xf32>
    %453 = vector.multi_reduction <add>, %452, %cst_180 [0] : vector<6x8xf32> to vector<8xf32>
    %454 = vector.shape_cast %453 : vector<8xf32> to vector<1x8xf32>
    %cst_181 = arith.constant 0.000000e+00 : f32
    %455 = vector.broadcast %cst_181 : f32 to vector<1x8xf32>
    %456 = arith.cmpf ogt, %436, %455 : vector<1x8xf32>
    %457 = arith.select %456, %454, %416 : vector<1x8xi1>, vector<1x8xf32>
    %cst_182 = arith.constant dense<0xFF800000> : vector<8xf32>
    %458 = vector.multi_reduction <maximumf>, %432, %cst_182 [0] : vector<6x8xf32> to vector<8xf32>
    %459 = vector.shape_cast %458 : vector<8xf32> to vector<1x8xf32>
    %460 = vector.broadcast %459 : vector<1x8xf32> to vector<6x8xf32>
    %461 = arith.subf %432, %460 : vector<6x8xf32>
    %462 = math.exp %461 : vector<6x8xf32>
    %cst_183 = arith.constant dense<0.000000e+00> : vector<6x8xf32>
    %463 = tpu.matmul %3, %462, %cst_183 {dimension_numbers = #tpu.dot_dimension_numbers<[1], [0], [0], [1], [0, 0, 1, 1], [], []>} : vector<6x6xf32>, vector<6x8xf32>, vector<6x8xf32> -> vector<6x8xf32>
    %464 = arith.addf %434, %9 : vector<6x8xf32>
    %465 = vector.broadcast %459 : vector<1x8xf32> to vector<6x8xf32>
    %466 = arith.addf %464, %465 : vector<6x8xf32>
    %467 = math.log %463 : vector<6x8xf32>
    %468 = arith.addf %466, %467 : vector<6x8xf32>
    %cst_184 = arith.constant 0.000000e+00 : f32
    %469 = vector.broadcast %cst_184 : f32 to vector<1x8xf32>
    %470 = arith.cmpf ogt, %436, %469 : vector<1x8xf32>
    %471 = vector.shape_cast %470 : vector<1x8xi1> to vector<1x8xi1>
    %472 = vector.broadcast %471 : vector<1x8xi1> to vector<6x8xi1>
    %473 = arith.select %472, %468, %432 : vector<6x8xi1>, vector<6x8xf32>
    %c11 = arith.constant 11 : index
    %c0_185 = arith.constant 0 : index
    %c0_186 = arith.constant 0 : index
    %474 = vector.load %arg2[%c11, %c0_185, %c0_186] : memref<12x6x8xf32, #tpu.memory_space<vmem>>, vector<1x6x8xf32>
    %475 = vector.shape_cast %474 : vector<1x6x8xf32> to vector<6x8xf32>
    %c11_187 = arith.constant 11 : index
    %c0_188 = arith.constant 0 : index
    %476 = vector.load %arg3[%c11_187, %c0_188] : memref<12x8xi32, #tpu.memory_space<vmem>>, vector<1x8xi32>
    %c11_189 = arith.constant 11 : index
    %c0_190 = arith.constant 0 : index
    %477 = vector.load %arg4[%c11_189, %c0_190] : memref<12x8xf32, #tpu.memory_space<vmem>>, vector<1x8xf32>
    %478 = vector.broadcast %476 : vector<1x8xi32> to vector<6x8xi32>
    %479 = arith.cmpi eq, %10, %478 : vector<6x8xi32>
    %480 = arith.extui %479 : vector<6x8xi1> to vector<6x8xi32>
    %481 = arith.sitofp %480 : vector<6x8xi32> to vector<6x8xf32>
    %cst_191 = arith.constant dense<0.000000e+00> : vector<6x8xf32>
    %482 = tpu.matmul %2, %481, %cst_191 {dimension_numbers = #tpu.dot_dimension_numbers<[1], [0], [0], [1], [0, 0, 1, 1], [], []>} : vector<6x6xf32>, vector<6x8xf32>, vector<6x8xf32> -> vector<6x8xf32>
    %483 = arith.mulf %440, %482 : vector<6x8xf32>
    %484 = arith.mulf %475, %481 : vector<6x8xf32>
    %485 = arith.addf %483, %484 : vector<6x8xf32>
    %cst_192 = arith.constant dense<0.000000e+00> : vector<8xf32>
    %486 = vector.multi_reduction <add>, %485, %cst_192 [0] : vector<6x8xf32> to vector<8xf32>
    %487 = vector.shape_cast %486 : vector<8xf32> to vector<1x8xf32>
    %cst_193 = arith.constant 0.000000e+00 : f32
    %488 = vector.broadcast %cst_193 : f32 to vector<1x8xf32>
    %489 = arith.cmpf ogt, %477, %488 : vector<1x8xf32>
    %cst_194 = arith.constant 0.000000e+00 : f32
    %490 = vector.broadcast %cst_194 : f32 to vector<1x8xf32>
    %491 = arith.select %489, %487, %490 : vector<1x8xi1>, vector<1x8xf32>
    %492 = arith.addf %451, %491 : vector<1x8xf32>
    %493 = arith.mulf %7, %481 : vector<6x8xf32>
    %cst_195 = arith.constant dense<0.000000e+00> : vector<8xf32>
    %494 = vector.multi_reduction <add>, %493, %cst_195 [0] : vector<6x8xf32> to vector<8xf32>
    %495 = vector.shape_cast %494 : vector<8xf32> to vector<1x8xf32>
    %cst_196 = arith.constant 0.000000e+00 : f32
    %496 = vector.broadcast %cst_196 : f32 to vector<1x8xf32>
    %497 = arith.cmpf ogt, %477, %496 : vector<1x8xf32>
    %498 = arith.select %497, %495, %457 : vector<1x8xi1>, vector<1x8xf32>
    %cst_197 = arith.constant dense<0xFF800000> : vector<8xf32>
    %499 = vector.multi_reduction <maximumf>, %473, %cst_197 [0] : vector<6x8xf32> to vector<8xf32>
    %500 = vector.shape_cast %499 : vector<8xf32> to vector<1x8xf32>
    %501 = vector.broadcast %500 : vector<1x8xf32> to vector<6x8xf32>
    %502 = arith.subf %473, %501 : vector<6x8xf32>
    %503 = math.exp %502 : vector<6x8xf32>
    %cst_198 = arith.constant dense<0.000000e+00> : vector<6x8xf32>
    %504 = tpu.matmul %3, %503, %cst_198 {dimension_numbers = #tpu.dot_dimension_numbers<[1], [0], [0], [1], [0, 0, 1, 1], [], []>} : vector<6x6xf32>, vector<6x8xf32>, vector<6x8xf32> -> vector<6x8xf32>
    %505 = arith.addf %475, %9 : vector<6x8xf32>
    %506 = vector.broadcast %500 : vector<1x8xf32> to vector<6x8xf32>
    %507 = arith.addf %505, %506 : vector<6x8xf32>
    %508 = math.log %504 : vector<6x8xf32>
    %509 = arith.addf %507, %508 : vector<6x8xf32>
    %cst_199 = arith.constant 0.000000e+00 : f32
    %510 = vector.broadcast %cst_199 : f32 to vector<1x8xf32>
    %511 = arith.cmpf ogt, %477, %510 : vector<1x8xf32>
    %512 = vector.shape_cast %511 : vector<1x8xi1> to vector<1x8xi1>
    %513 = vector.broadcast %512 : vector<1x8xi1> to vector<6x8xi1>
    %514 = arith.select %513, %509, %473 : vector<6x8xi1>, vector<6x8xf32>
    %c0_200 = arith.constant 0 : index
    %c0_201 = arith.constant 0 : index
    %515 = vector.load %arg11[%c0_200, %c0_201] : memref<6x8xf32, #tpu.memory_space<vmem>>, vector<6x8xf32>
    tpu.vector_store %arg11[%c0_200, %c0_201], %514 {strides = array<i32>} : memref<6x8xf32, #tpu.memory_space<vmem>>, vector<6x8xf32>,
    %c0_202 = arith.constant 0 : index
    %c0_203 = arith.constant 0 : index
    %516 = vector.load %arg12[%c0_202, %c0_203] : memref<1x8xf32, #tpu.memory_space<vmem>>, vector<1x8xf32>
    tpu.vector_store %arg12[%c0_202, %c0_203], %492 {strides = array<i32>} : memref<1x8xf32, #tpu.memory_space<vmem>>, vector<1x8xf32>,
    %c0_204 = arith.constant 0 : index
    %c0_205 = arith.constant 0 : index
    %517 = vector.load %arg13[%c0_204, %c0_205] : memref<1x8xf32, #tpu.memory_space<vmem>>, vector<1x8xf32>
    tpu.vector_store %arg13[%c0_204, %c0_205], %498 {strides = array<i32>} : memref<1x8xf32, #tpu.memory_space<vmem>>, vector<1x8xf32>,
    %c0_206 = arith.constant 0 : index
    %c0_207 = arith.constant 0 : index
    %518 = vector.load %arg14[%c0_206, %c0_207] : memref<6x8xf32, #tpu.memory_space<vmem>>, vector<6x8xf32>
    tpu.vector_store %arg14[%c0_206, %c0_207], %481 {strides = array<i32>} : memref<6x8xf32, #tpu.memory_space<vmem>>, vector<6x8xf32>,
    %c0_i32_208 = arith.constant 0 : i32
    %519 = arith.cmpi eq, %arg1, %c0_i32_208 : i32
    %520 = arith.extui %519 : i1 to i32
    %c0_i32_209 = arith.constant 0 : i32
    %521 = arith.cmpi ne, %520, %c0_i32_209 : i32
    scf.if %521 {
      %522 = arith.addf %514, %7 : vector<6x8xf32>
      %cst_210 = arith.constant dense<0xFF800000> : vector<8xf32>
      %523 = vector.multi_reduction <maximumf>, %522, %cst_210 [0] : vector<6x8xf32> to vector<8xf32>
      %524 = vector.shape_cast %523 : vector<8xf32> to vector<1x8xf32>
      %525 = vector.broadcast %524 : vector<1x8xf32> to vector<6x8xf32>
      %526 = arith.subf %522, %525 : vector<6x8xf32>
      %527 = math.exp %526 : vector<6x8xf32>
      %cst_211 = arith.constant dense<0.000000e+00> : vector<8xf32>
      %528 = vector.multi_reduction <add>, %527, %cst_211 [0] : vector<6x8xf32> to vector<8xf32>
      %529 = vector.shape_cast %528 : vector<8xf32> to vector<1x8xf32>
      %530 = math.log %529 : vector<1x8xf32>
      %531 = arith.addf %524, %530 : vector<1x8xf32>
      %532 = arith.addf %492, %498 : vector<1x8xf32>
      %533 = arith.subf %532, %531 : vector<1x8xf32>
      %c0_212 = arith.constant 0 : index
      %c0_213 = arith.constant 0 : index
      %534 = vector.load %arg10[%c0_212, %c0_213] : memref<1x8xf32, #tpu.memory_space<vmem>>, vector<1x8xf32>
      tpu.vector_store %arg10[%c0_212, %c0_213], %533 {strides = array<i32>} : memref<1x8xf32, #tpu.memory_space<vmem>>, vector<1x8xf32>,
    } else {
    }
    return
  }
  func.func @transform_0(%arg0: i32, %arg1: i32) -> (i32, i32, i32) {
    %c0_i32 = arith.constant 0 : i32
    %c0_i32_0 = arith.constant 0 : i32
    return %arg1, %c0_i32, %arg0 : i32, i32, i32
  }
  func.func @transform_1(%arg0: i32, %arg1: i32) -> (i32, i32) {
    %c0_i32 = arith.constant 0 : i32
    return %arg1, %arg0 : i32, i32
  }
  func.func @transform_2(%arg0: i32, %arg1: i32) -> (i32, i32) {
    %c0_i32 = arith.constant 0 : i32
    return %arg1, %arg0 : i32, i32
  }
  func.func @transform_3(%arg0: i32, %arg1: i32) -> (i32, i32) {
    %c0_i32 = arith.constant 0 : i32
    %c0_i32_0 = arith.constant 0 : i32
    %c0_i32_1 = arith.constant 0 : i32
    return %c0_i32, %c0_i32_0 : i32, i32
  }
  func.func @transform_4(%arg0: i32, %arg1: i32) -> (i32, i32) {
    %c0_i32 = arith.constant 0 : i32
    %c0_i32_0 = arith.constant 0 : i32
    %c0_i32_1 = arith.constant 0 : i32
    return %c0_i32, %c0_i32_0 : i32, i32
  }
  func.func @transform_5(%arg0: i32, %arg1: i32) -> (i32, i32) {
    %c0_i32 = arith.constant 0 : i32
    %c0_i32_0 = arith.constant 0 : i32
    %c0_i32_1 = arith.constant 0 : i32
    return %c0_i32, %c0_i32_0 : i32, i32
  }
  func.func @transform_6(%arg0: i32, %arg1: i32) -> (i32, i32) {
    %c0_i32 = arith.constant 0 : i32
    %c0_i32_0 = arith.constant 0 : i32
    %c0_i32_1 = arith.constant 0 : i32
    return %c0_i32, %c0_i32_0 : i32, i32
  }
  func.func @transform_7(%arg0: i32, %arg1: i32) -> (i32, i32) {
    %c0_i32 = arith.constant 0 : i32
    %c0_i32_0 = arith.constant 0 : i32
    %c0_i32_1 = arith.constant 0 : i32
    return %c0_i32, %c0_i32_0 : i32, i32
  }
  func.func @transform_8(%arg0: i32, %arg1: i32) -> (i32, i32) {
    %c0_i32 = arith.constant 0 : i32
    %c0_i32_0 = arith.constant 0 : i32
    return %c0_i32, %arg0 : i32, i32
  }
}

</mosaic_0001>

<llo_original>
// kernel: tpu_custom_call.1
$region0: #{tpu_custom_call.1}
  #allocation0 [shape = 'u32[]', space=smem, size = 0x4, offset = 0x4, fixed_abs, tag = 'smem constant byte address 0x4 - core index']
  #allocation1 [shape = 'u32[144,128]{1,0:T(1,128)}', space=vmem, size = 0x12000, scoped, tag = 'internal scratch']
  #allocation2 [shape = 'f32[6,8]{1,0:T(8,128)}', space=vmem, size = 0x1000, scoped, tag = 'scratch operand']
  #allocation3 [shape = 'f32[1,8]{1,0:T(1,128)}', space=vmem, size = 0x200, scoped, tag = 'scratch operand']
  #allocation4 [shape = 'f32[1,8]{1,0:T(1,128)}', space=vmem, size = 0x200, scoped, tag = 'scratch operand']
  #allocation5 [shape = 'f32[6,8]{1,0:T(8,128)}', space=vmem, size = 0x1000, scoped, tag = 'scratch operand']
  %s0 = inlined_call_operand.vmem [shape: f32[12,6,8], index: 0, kind: input, shape index: {}]
  %s1 = inlined_call_operand.vmem [shape: s32[12,8], index: 1, kind: input, shape index: {}]
  %s2 = inlined_call_operand.vmem [shape: f32[12,8], index: 2, kind: input, shape index: {}]
  %s3 = inlined_call_operand.vmem [shape: f32[6,1], index: 3, kind: input, shape index: {}]
  %s4 = inlined_call_operand.vmem [shape: f32[6,1], index: 4, kind: input, shape index: {}]
  %s5 = inlined_call_operand.vmem [shape: f32[6,6], index: 5, kind: input, shape index: {}]
  %s6 = inlined_call_operand.vmem [shape: f32[6,6], index: 6, kind: input, shape index: {}]
  %s7 = inlined_call_operand.vmem [shape: f32[6,1], index: 7, kind: input, shape index: {}]
  %s8 = inlined_call_operand.hbm [shape: f32[1,8], index: 8, kind: output, shape index: {}]
  %s9 = sld [smem:[#allocation0]]
  $region50: #{tpu_custom_call.1} parent=0
    _
  %s11 = ssub.s32 1, %s9
  %s12 = scalar_select 0, %s11, %s9
  $region1: #{tpu_custom_call.1} parent=0
    #allocation6 [shape = 'u8[512]{0}', space=vmem, size = 0x400, scoped, tag = 'output window, operand 0, single buffered']
    #allocation7 [shape = 's32[1]{0}', space=sflag, size = 0x4, scoped, tag = 'scoped memory for tpu_custom_call.1']
    %13 = vsyncpa [#allocation7], 0
    // Predicated region
    $region2: #{tpu_custom_call.1} parent=1 // pred_check
      _
    $region3: #{tpu_custom_call.1} parent=1 // pred_check_branch
      %15 = sbr.rel (0) target = $region5
    $region4: #{tpu_custom_call.1} parent=1 // pred_region
      _
    $region5: #{tpu_custom_call.1} parent=1 // pred_fallthru
      _
    // Predicated region
    $region6: #{tpu_custom_call.1} parent=1 // pred_check
      _
    $region7: #{tpu_custom_call.1} parent=1 // pred_check_branch
      %17 = sbr.rel (0) target = $region9
    $region8: #{tpu_custom_call.1} parent=1 // pred_region
      _
    $region9: #{tpu_custom_call.1} parent=1 // pred_fallthru
      _
    // Predicated region
    $region10: #{tpu_custom_call.1} parent=1 // pred_check
      _
    $region11: #{tpu_custom_call.1} parent=1 // pred_check_branch
      %19 = sbr.rel (0) target = $region13
    $region12: #{tpu_custom_call.1} parent=1 // pred_region
      _
    $region13: #{tpu_custom_call.1} parent=1 // pred_fallthru
      _
    // Predicated region
    $region14: #{tpu_custom_call.1} parent=1 // pred_check
      _
    $region15: #{tpu_custom_call.1} parent=1 // pred_check_branch
      %21 = sbr.rel (0) target = $region17
    $region16: #{tpu_custom_call.1} parent=1 // pred_region
      _
    $region17: #{tpu_custom_call.1} parent=1 // pred_fallthru
      _
    // Predicated region
    $region18: #{tpu_custom_call.1} parent=1 // pred_check
      _
    $region19: #{tpu_custom_call.1} parent=1 // pred_check_branch
      %23 = sbr.rel (0) target = $region21
    $region20: #{tpu_custom_call.1} parent=1 // pred_region
      _
    $region21: #{tpu_custom_call.1} parent=1 // pred_fallthru
      _
    // Predicated region
    $region22: #{tpu_custom_call.1} parent=1 // pred_check
      _
    $region23: #{tpu_custom_call.1} parent=1 // pred_check_branch
      %25 = sbr.rel (0) target = $region25
    $region24: #{tpu_custom_call.1} parent=1 // pred_region
      _
    $region25: #{tpu_custom_call.1} parent=1 // pred_fallthru
      _
    // Predicated region
    $region26: #{tpu_custom_call.1} parent=1 // pred_check
      _
    $region27: #{tpu_custom_call.1} parent=1 // pred_check_branch
      %27 = sbr.rel (0) target = $region29
    $region28: #{tpu_custom_call.1} parent=1 // pred_region
      _
    $region29: #{tpu_custom_call.1} parent=1 // pred_fallthru
      _
    // Predicated region
    $region30: #{tpu_custom_call.1} parent=1 // pred_check
      _
    $region31: #{tpu_custom_call.1} parent=1 // pred_check_branch
      %29 = sbr.rel (0) target = $region33
    $region32: #{tpu_custom_call.1} parent=1 // pred_region
      _
    $region33: #{tpu_custom_call.1} parent=1 // pred_fallthru
      _
    %v30 = vld [vmem:[%s3] sm:$0x3f]
    %v31 = vld [vmem:[%s4] sm:$0x3f]
    %v32 = vld [vmem:[%s5] sm:$0x3f]
    %v33 = vld [vmem:[%s6] sm:$0x3f]
    %v34 = vld [vmem:[%s7] sm:$0x3f]
    %36 = vset.pattern.permute.xlu0 0
    %37 = vperm.xlu0 %36, %v31
    %v38 = vpop.permute.xlu0 %37
    %v40 = vadd.f32 %v38, 0.0
    %42 = vset.pattern.permute.xlu0 0
    %43 = vperm.xlu0 %42, %v34
    %v44 = vpop.permute.xlu0 %43
    %v46 = vadd.f32 %v44, 0.0
    %v47 = vlaneseq
    %v48 = vshrl.u32 %v47, 7
    %p49 = scmp.eq.s32.totalorder 0, 0
    // Predicated region
    $region34: #{tpu_custom_call.1} parent=1 // pred_check
      %p50 = pneg %p49
    $region35: #{tpu_custom_call.1} parent=1 // pred_check_branch
      %52 = sbr.rel (%p50) target = $region37
    $region36: #{tpu_custom_call.1} parent=1 // pred_region
      %v53 = vld [vmem:[%s0] sm:$0x3f]
      %v54 = vld [vmem:[%s1] sm:$0x1]
      %v55 = vlaneseq
      %v56 = vshrl.u32 %v55, 7
      %v57 = vsub.s32 0, %v56
      %v58 = vrot.slane %v54, %v57
      %vm59 = vcmp.eq.s32.totalorder %v48, %v58
      %v60 = vsel %vm59, 1, 0
      %v61 = vcvt.s32.f32 %v60
      %63 = vset.pattern.permute.xlu0 0
      %64 = vperm.xlu0 %63, %v30
      %v65 = vpop.permute.xlu0 %64
      %v67 = vadd.f32 %v65, %v53
      %vm68 = vcmask 62464
      %69 = vst.msk [vmem:[#allocation2] sm:$0x3f] %vm68, %v67
      %v70 = vmul.f32 %v67, %v61
      %v71 = vsel %vm68, %v70, 0.0
      %v72 = vrot.slane %v71, 4
      %v73 = vadd.f32 %v71, %v72
      %v74 = vrot.slane %v73, 2
      %v75 = vadd.f32 %v73, %v74
      %v76 = vrot.slane %v75, 1
      %v77 = vadd.f32 %v75, %v76
      %vm78 = vcmask 57344
      %79 = vst.msk [vmem:[#allocation3] sm:$0x1] %vm78, %v77
      %v80 = vmul.f32 %v40, %v61
      %v81 = vsel %vm68, %v80, 0.0
      %v82 = vrot.slane %v81, 4
      %v83 = vadd.f32 %v81, %v82
      %v84 = vrot.slane %v83, 2
      %v85 = vadd.f32 %v83, %v84
      %v86 = vrot.slane %v85, 1
      %v87 = vadd.f32 %v85, %v86
      %88 = vst.msk [vmem:[#allocation4] sm:$0x1] %vm78, %v87
      %89 = vst.msk [vmem:[#allocation5] sm:$0x3f] %vm68, %v61
    $region37: #{tpu_custom_call.1} parent=1 // pred_fallthru
      _
    %v90 = vld [vmem:[#allocation2] sm:$0x3f]
    %v91 = vld [vmem:[#allocation3] sm:$0x1]
    %v92 = vld [vmem:[#allocation4] sm:$0x1]
    %v93 = vld [vmem:[#allocation5] sm:$0x3f]
    %p94 = scmp.gt.s32.totalorder 0, 0
    %s95 = scalar_select %p94, 1, 0
    %s96 = scvt.s32.f32 %s95
    %v97 = vld [vmem:[%s0] sm:$0x3f]
    %v98 = vld [vmem:[%s1] sm:$0x1]
    %v99 = vld [vmem:[%s2] sm:$0x1]
    %v100 = vstv %s96
    %v101 = vmul.f32 %v99, %v100
    %v102 = vlaneseq
    %v103 = vshrl.u32 %v102, 7
    %v104 = vsub.s32 0, %v103
    %v105 = vrot.slane %v98, %v104
    %vm106 = vcmp.eq.s32.totalorder %v48, %v105
    %v107 = vsel %vm106, 1, 0
    %v108 = vcvt.s32.f32 %v107
    %vm109 = vcmask 48128
    %v111 = vsel %vm109, %v32, 0
    %vm113 = vcmask 1045504
    %v115 = vsel %vm113, %v108, 0
    %117 = vmatprep.subr.mxu0 0.0
    %118 = vmatpush1.msra.mxu0 %v115
    %119 = vmatprep.subr.mxu0 0.0
    %120 = vmatpush1.msra.mxu0 0.0
    %121 = vmatprep.subr.mxu0 0.0
    %122 = vmatpush1.msra.mxu0 0.0
    %123 = vmatprep.subr.mxu0 0.0
    %124 = vmatpush1.msra.mxu0 0.0
    %125 = vmatprep.subr.mxu0 0.0
    %126 = vmatpush1.msra.mxu0 0.0
    %127 = vmatprep.subr.mxu0 0.0
    %128 = vmatpush1.msra.mxu0 0.0
    %129 = vmatprep.subr.mxu0 0.0
    %130 = vmatpush1.msra.mxu0 0.0
    %131 = vmatprep.subr.mxu0 0.0
    %132 = vmatpush1.msra.mxu0 0.0
    %133 = vmatprep.subr.mxu0 0.0
    %134 = vmatpush1.msra.mxu0 0.0
    %135 = vmatprep.subr.mxu0 0.0
    %136 = vmatpush1.msra.mxu0 0.0
    %137 = vmatprep.subr.mxu0 0.0
    %138 = vmatpush1.msra.mxu0 0.0
    %139 = vmatprep.subr.mxu0 0.0
    %140 = vmatpush1.msra.mxu0 0.0
    %141 = vmatprep.subr.mxu0 0.0
    %142 = vmatpush1.msra.mxu0 0.0
    %143 = vmatprep.subr.mxu0 0.0
    %144 = vmatpush1.msra.mxu0 0.0
    %145 = vmatprep.subr.mxu0 0.0
    %146 = vmatpush1.msra.mxu0 0.0
    %147 = vmatprep.subr.mxu0 0.0
    %148 = vmatpush1.msra.mxu0 0.0
    %149 = vmatprep.subr.mxu0 0.0
    %150 = vmatpush1.msra.mxu0 0.0
    %151 = vmatprep.subr.mxu0 0.0
    %152 = vmatpush1.msra.mxu0 0.0
    %153 = vmatprep.subr.mxu0 0.0
    %154 = vmatpush1.msra.mxu0 0.0
    %155 = vmatprep.subr.mxu0 0.0
    %156 = vmatpush1.msra.mxu0 0.0
    %157 = vmatprep.subr.mxu0 0.0
    %158 = vmatpush1.msra.mxu0 0.0
    %159 = vmatprep.subr.mxu0 0.0
    %160 = vmatpush1.msra.mxu0 0.0
    %161 = vmatprep.subr.mxu0 0.0
    %162 = vmatpush1.msra.mxu0 0.0
    %163 = vmatprep.subr.mxu0 0.0
    %164 = vmatpush1.msra.mxu0 0.0
    %165 = vmatprep.subr.mxu0 0.0
    %166 = vmatpush1.msra.mxu0 0.0
    %167 = vmatprep.subr.mxu0 0.0
    %168 = vmatpush1.msra.mxu0 0.0
    %169 = vmatprep.subr.mxu0 0.0
    %170 = vmatpush1.msra.mxu0 0.0
    %171 = vmatprep.subr.mxu0 0.0
    %172 = vmatpush1.msra.mxu0 0.0
    %173 = vmatprep.subr.mxu0 0.0
    %174 = vmatpush1.msra.mxu0 0.0
    %175 = vmatprep.subr.mxu0 0.0
    %176 = vmatpush1.msra.mxu0 0.0
    %177 = vmatprep.subr.mxu0 0.0
    %178 = vmatpush1.msra.mxu0 0.0
    %179 = vmatprep.subr.mxu0 0.0
    %180 = vmatpush1.msra.mxu0 0.0
    %181 = vmatprep.mubr.f32.mxu0 0.0
    %182 = vmatmul.mubr.f32.gmra.mrb[0].mxu0 %v111
    %v183 = vpop.f32.mrb[0].mxu0
    %v184 = vadd.f32 0.0, %v183
    %v185 = vpop.f32.mrb[0].mxu0
    %186 = vdwg.mxu0
    %v187 = vmul.f32 %v93, %v184
    %v188 = vmul.f32 %v97, %v108
    %v189 = vadd.f32 %v187, %v188
    %vm190 = vcmask 62464
    %v191 = vsel %vm190, %v189, 0.0
    %v192 = vrot.slane %v191, 4
    %v193 = vadd.f32 %v191, %v192
    %v194 = vrot.slane %v193, 2
    %v195 = vadd.f32 %v193, %v194
    %v196 = vrot.slane %v195, 1
    %v197 = vadd.f32 %v195, %v196
    %vm198 = vcmp.gt.f32.partialorder %v101, 0.0
    %v199 = vsel %vm198, %v197, 0.0
    %v200 = vadd.f32 %v91, %v199
    %v201 = vmul.f32 %v40, %v108
    %v202 = vsel %vm190, %v201, 0.0
    %v203 = vrot.slane %v202, 4
    %v204 = vadd.f32 %v202, %v203
    %v205 = vrot.slane %v204, 2
    %v206 = vadd.f32 %v204, %v205
    %v207 = vrot.slane %v206, 1
    %v208 = vadd.f32 %v206, %v207
    %v209 = vsel %vm198, %v208, %v92
    %v210 = vsel %vm190, %v90, -inf
    %v211 = vrot.slane %v210, 4
    %v212 = vmax.f32 %v210, %v211
    %v213 = vrot.slane %v212, 2
    %v214 = vmax.f32 %v212, %v213
    %v215 = vrot.slane %v214, 1
    %v216 = vmax.f32 %v214, %v215
    %v217 = vsub.f32 %v90, %v216
    %v218 = vmul.f32 %v217, 1.442695
    %v219 = vpow.pop %v218
    %v221 = vsel %vm109, %v33, 0
    %v224 = vsel %vm113, %v219, 0
    %226 = vmatprep.subr.mxu0 0.0
    %227 = vmatpush1.msra.mxu0 %v224
    %228 = vmatprep.subr.mxu0 0.0
    %229 = vmatpush1.msra.mxu0 0.0
    %230 = vmatprep.subr.mxu0 0.0
    %231 = vmatpush1.msra.mxu0 0.0
    %232 = vmatprep.subr.mxu0 0.0
    %233 = vmatpush1.msra.mxu0 0.0
    %234 = vmatprep.subr.mxu0 0.0
    %235 = vmatpush1.msra.mxu0 0.0
    %236 = vmatprep.subr.mxu0 0.0
    %237 = vmatpush1.msra.mxu0 0.0
    %238 = vmatprep.subr.mxu0 0.0
    %239 = vmatpush1.msra.mxu0 0.0
    %240 = vmatprep.subr.mxu0 0.0
    %241 = vmatpush1.msra.mxu0 0.0
    %242 = vmatprep.subr.mxu0 0.0
    %243 = vmatpush1.msra.mxu0 0.0
    %244 = vmatprep.subr.mxu0 0.0
    %245 = vmatpush1.msra.mxu0 0.0
    %246 = vmatprep.subr.mxu0 0.0
    %247 = vmatpush1.msra.mxu0 0.0
    %248 = vmatprep.subr.mxu0 0.0
    %249 = vmatpush1.msra.mxu0 0.0
    %250 = vmatprep.subr.mxu0 0.0
    %251 = vmatpush1.msra.mxu0 0.0
    %252 = vmatprep.subr.mxu0 0.0
    %253 = vmatpush1.msra.mxu0 0.0
    %254 = vmatprep.subr.mxu0 0.0
    %255 = vmatpush1.msra.mxu0 0.0
    %256 = vmatprep.subr.mxu0 0.0
    %257 = vmatpush1.msra.mxu0 0.0
    %258 = vmatprep.subr.mxu0 0.0
    %259 = vmatpush1.msra.mxu0 0.0
    %260 = vmatprep.subr.mxu0 0.0
    %261 = vmatpush1.msra.mxu0 0.0
    %262 = vmatprep.subr.mxu0 0.0
    %263 = vmatpush1.msra.mxu0 0.0
    %264 = vmatprep.subr.mxu0 0.0
    %265 = vmatpush1.msra.mxu0 0.0
    %266 = vmatprep.subr.mxu0 0.0
    %267 = vmatpush1.msra.mxu0 0.0
    %268 = vmatprep.subr.mxu0 0.0
    %269 = vmatpush1.msra.mxu0 0.0
    %270 = vmatprep.subr.mxu0 0.0
    %271 = vmatpush1.msra.mxu0 0.0
    %272 = vmatprep.subr.mxu0 0.0
    %273 = vmatpush1.msra.mxu0 0.0
    %274 = vmatprep.subr.mxu0 0.0
    %275 = vmatpush1.msra.mxu0 0.0
    %276 = vmatprep.subr.mxu0 0.0
    %277 = vmatpush1.msra.mxu0 0.0
    %278 = vmatprep.subr.mxu0 0.0
    %279 = vmatpush1.msra.mxu0 0.0
    %280 = vmatprep.subr.mxu0 0.0
    %281 = vmatpush1.msra.mxu0 0.0
    %282 = vmatprep.subr.mxu0 0.0
    %283 = vmatpush1.msra.mxu0 0.0
    %284 = vmatprep.subr.mxu0 0.0
    %285 = vmatpush1.msra.mxu0 0.0
    %286 = vmatprep.subr.mxu0 0.0
    %287 = vmatpush1.msra.mxu0 0.0
    %288 = vmatprep.subr.mxu0 0.0
    %289 = vmatpush1.msra.mxu0 0.0
    %290 = vmatprep.mubr.f32.mxu0 0.0
    %291 = vmatmul.mubr.f32.gmra.mrb[0].mxu0 %v221
    %v292 = vpop.f32.mrb[0].mxu0
    %v293 = vadd.f32 0.0, %v292
    %v294 = vpop.f32.mrb[0].mxu0
    %295 = vdwg.mxu0
    %v296 = vadd.f32 %v97, %v46
    %v297 = vadd.f32 %v296, %v216
    %v298 = vlog2.pop %v293
    %v299 = vmul.f32 %v298, 0.6931472
    %v300 = vadd.f32 %v297, %v299
    %v301 = vsel %vm198, 1, 0
    %v302 = vlaneseq
    %v303 = vshrl.u32 %v302, 7
    %v304 = vsub.s32 0, %v303
    %v305 = vrot.slane %v301, %v304
    %vm306 = vcmp.eq.s32.totalorder %v305, 1
    %v307 = vsel %vm306, %v300, %v90
    %s308 = scalar_lea.vmem %s0, 8
    %v309 = vld [vmem:[%s308] sm:$0x3f]
    %v310 = vld [vmem:[%s1 + $0x1] sm:$0x1]
    %v311 = vld [vmem:[%s2 + $0x1] sm:$0x1]
    %v312 = vlaneseq
    %v313 = vshrl.u32 %v312, 7
    %v314 = vsub.s32 0, %v313
    %v315 = vrot.slane %v310, %v314
    %vm316 = vcmp.eq.s32.totalorder %v48, %v315
    %v317 = vsel %vm316, 1, 0
    %v318 = vcvt.s32.f32 %v317
    %v320 = vsel %vm113, %v318, 0
    %322 = vmatprep.subr.mxu0 0.0
    %323 = vmatpush1.msra.mxu0 %v320
    %324 = vmatprep.subr.mxu0 0.0
    %325 = vmatpush1.msra.mxu0 0.0
    %326 = vmatprep.subr.mxu0 0.0
    %327 = vmatpush1.msra.mxu0 0.0
    %328 = vmatprep.subr.mxu0 0.0
    %329 = vmatpush1.msra.mxu0 0.0
    %330 = vmatprep.subr.mxu0 0.0
    %331 = vmatpush1.msra.mxu0 0.0
    %332 = vmatprep.subr.mxu0 0.0
    %333 = vmatpush1.msra.mxu0 0.0
    %334 = vmatprep.subr.mxu0 0.0
    %335 = vmatpush1.msra.mxu0 0.0
    %336 = vmatprep.subr.mxu0 0.0
    %337 = vmatpush1.msra.mxu0 0.0
    %338 = vmatprep.subr.mxu0 0.0
    %339 = vmatpush1.msra.mxu0 0.0
    %340 = vmatprep.subr.mxu0 0.0
    %341 = vmatpush1.msra.mxu0 0.0
    %342 = vmatprep.subr.mxu0 0.0
    %343 = vmatpush1.msra.mxu0 0.0
    %344 = vmatprep.subr.mxu0 0.0
    %345 = vmatpush1.msra.mxu0 0.0
    %346 = vmatprep.subr.mxu0 0.0
    %347 = vmatpush1.msra.mxu0 0.0
    %348 = vmatprep.subr.mxu0 0.0
    %349 = vmatpush1.msra.mxu0 0.0
    %350 = vmatprep.subr.mxu0 0.0
    %351 = vmatpush1.msra.mxu0 0.0
    %352 = vmatprep.subr.mxu0 0.0
    %353 = vmatpush1.msra.mxu0 0.0
    %354 = vmatprep.subr.mxu0 0.0
    %355 = vmatpush1.msra.mxu0 0.0
    %356 = vmatprep.subr.mxu0 0.0
    %357 = vmatpush1.msra.mxu0 0.0
    %358 = vmatprep.subr.mxu0 0.0
    %359 = vmatpush1.msra.mxu0 0.0
    %360 = vmatprep.subr.mxu0 0.0
    %361 = vmatpush1.msra.mxu0 0.0
    %362 = vmatprep.subr.mxu0 0.0
    %363 = vmatpush1.msra.mxu0 0.0
    %364 = vmatprep.subr.mxu0 0.0
    %365 = vmatpush1.msra.mxu0 0.0
    %366 = vmatprep.subr.mxu0 0.0
    %367 = vmatpush1.msra.mxu0 0.0
    %368 = vmatprep.subr.mxu0 0.0
    %369 = vmatpush1.msra.mxu0 0.0
    %370 = vmatprep.subr.mxu0 0.0
    %371 = vmatpush1.msra.mxu0 0.0
    %372 = vmatprep.subr.mxu0 0.0
    %373 = vmatpush1.msra.mxu0 0.0
    %374 = vmatprep.subr.mxu0 0.0
    %375 = vmatpush1.msra.mxu0 0.0
    %376 = vmatprep.subr.mxu0 0.0
    %377 = vmatpush1.msra.mxu0 0.0
    %378 = vmatprep.subr.mxu0 0.0
    %379 = vmatpush1.msra.mxu0 0.0
    %380 = vmatprep.subr.mxu0 0.0
    %381 = vmatpush1.msra.mxu0 0.0
    %382 = vmatprep.subr.mxu0 0.0
    %383 = vmatpush1.msra.mxu0 0.0
    %384 = vmatprep.subr.mxu0 0.0
    %385 = vmatpush1.msra.mxu0 0.0
    %386 = vmatprep.mubr.f32.mxu0 0.0
    %387 = vmatmul.mubr.f32.gmra.mrb[0].mxu0 %v111
    %v388 = vpop.f32.mrb[0].mxu0
    %v389 = vadd.f32 0.0, %v388
    %v390 = vpop.f32.mrb[0].mxu0
    %391 = vdwg.mxu0
    %v392 = vmul.f32 %v108, %v389
    %v393 = vmul.f32 %v309, %v318
    %v394 = vadd.f32 %v392, %v393
    %v395 = vsel %vm190, %v394, 0.0
    %v396 = vrot.slane %v395, 4
    %v397 = vadd.f32 %v395, %v396
    %v398 = vrot.slane %v397, 2
    %v399 = vadd.f32 %v397, %v398
    %v400 = vrot.slane %v399, 1
    %v401 = vadd.f32 %v399, %v400
    %vm402 = vcmp.gt.f32.partialorder %v311, 0.0
    %v403 = vsel %vm402, %v401, 0.0
    %v404 = vadd.f32 %v200, %v403
    %v405 = vmul.f32 %v40, %v318
    %v406 = vsel %vm190, %v405, 0.0
    %v407 = vrot.slane %v406, 4
    %v408 = vadd.f32 %v406, %v407
    %v409 = vrot.slane %v408, 2
    %v410 = vadd.f32 %v408, %v409
    %v411 = vrot.slane %v410, 1
    %v412 = vadd.f32 %v410, %v411
    %v413 = vsel %vm402, %v412, %v209
    %v414 = vsel %vm190, %v307, -inf
    %v415 = vrot.slane %v414, 4
    %v416 = vmax.f32 %v414, %v415
    %v417 = vrot.slane %v416, 2
    %v418 = vmax.f32 %v416, %v417
    %v419 = vrot.slane %v418, 1
    %v420 = vmax.f32 %v418, %v419
    %v421 = vsub.f32 %v307, %v420
    %v422 = vmul.f32 %v421, 1.442695
    %v423 = vpow.pop %v422
    %v425 = vsel %vm113, %v423, 0
    %427 = vmatprep.subr.mxu0 0.0
    %428 = vmatpush1.msra.mxu0 %v425
    %429 = vmatprep.subr.mxu0 0.0
    %430 = vmatpush1.msra.mxu0 0.0
    %431 = vmatprep.subr.mxu0 0.0
    %432 = vmatpush1.msra.mxu0 0.0
    %433 = vmatprep.subr.mxu0 0.0
    %434 = vmatpush1.msra.mxu0 0.0
    %435 = vmatprep.subr.mxu0 0.0
    %436 = vmatpush1.msra.mxu0 0.0
    %437 = vmatprep.subr.mxu0 0.0
    %438 = vmatpush1.msra.mxu0 0.0
    %439 = vmatprep.subr.mxu0 0.0
    %440 = vmatpush1.msra.mxu0 0.0
    %441 = vmatprep.subr.mxu0 0.0
    %442 = vmatpush1.msra.mxu0 0.0
    %443 = vmatprep.subr.mxu0 0.0
    %444 = vmatpush1.msra.mxu0 0.0
    %445 = vmatprep.subr.mxu0 0.0
    %446 = vmatpush1.msra.mxu0 0.0
    %447 = vmatprep.subr.mxu0 0.0
    %448 = vmatpush1.msra.mxu0 0.0
    %449 = vmatprep.subr.mxu0 0.0
    %450 = vmatpush1.msra.mxu0 0.0
    %451 = vmatprep.subr.mxu0 0.0
    %452 = vmatpush1.msra.mxu0 0.0
    %453 = vmatprep.subr.mxu0 0.0
    %454 = vmatpush1.msra.mxu0 0.0
    %455 = vmatprep.subr.mxu0 0.0
    %456 = vmatpush1.msra.mxu0 0.0
    %457 = vmatprep.subr.mxu0 0.0
    %458 = vmatpush1.msra.mxu0 0.0
    %459 = vmatprep.subr.mxu0 0.0
    %460 = vmatpush1.msra.mxu0 0.0
    %461 = vmatprep.subr.mxu0 0.0
    %462 = vmatpush1.msra.mxu0 0.0
    %463 = vmatprep.subr.mxu0 0.0
    %464 = vmatpush1.msra.mxu0 0.0
    %465 = vmatprep.subr.mxu0 0.0
    %466 = vmatpush1.msra.mxu0 0.0
    %467 = vmatprep.subr.mxu0 0.0
    %468 = vmatpush1.msra.mxu0 0.0
    %469 = vmatprep.subr.mxu0 0.0
    %470 = vmatpush1.msra.mxu0 0.0
    %471 = vmatprep.subr.mxu0 0.0
    %472 = vmatpush1.msra.mxu0 0.0
    %473 = vmatprep.subr.mxu0 0.0
    %474 = vmatpush1.msra.mxu0 0.0
    %475 = vmatprep.subr.mxu0 0.0
    %476 = vmatpush1.msra.mxu0 0.0
    %477 = vmatprep.subr.mxu0 0.0
    %478 = vmatpush1.msra.mxu0 0.0
    %479 = vmatprep.subr.mxu0 0.0
    %480 = vmatpush1.msra.mxu0 0.0
    %481 = vmatprep.subr.mxu0 0.0
    %482 = vmatpush1.msra.mxu0 0.0
    %483 = vmatprep.subr.mxu0 0.0
    %484 = vmatpush1.msra.mxu0 0.0
    %485 = vmatprep.subr.mxu0 0.0
    %486 = vmatpush1.msra.mxu0 0.0
    %487 = vmatprep.subr.mxu0 0.0
    %488 = vmatpush1.msra.mxu0 0.0
    %489 = vmatprep.subr.mxu0 0.0
    %490 = vmatpush1.msra.mxu0 0.0
    %491 = vmatprep.mubr.f32.mxu0 0.0
    %492 = vmatmul.mubr.f32.gmra.mrb[0].mxu0 %v221
    %v493 = vpop.f32.mrb[0].mxu0
    %v494 = vadd.f32 0.0, %v493
    %v495 = vpop.f32.mrb[0].mxu0
    %496 = vdwg.mxu0
    %v497 = vadd.f32 %v309, %v46
    %v498 = vadd.f32 %v497, %v420
    %v499 = vlog2.pop %v494
    %v500 = vmul.f32 %v499, 0.6931472
    %v501 = vadd.f32 %v498, %v500
    %v502 = vsel %vm402, 1, 0
    %v503 = vlaneseq
    %v504 = vshrl.u32 %v503, 7
    %v505 = vsub.s32 0, %v504
    %v506 = vrot.slane %v502, %v505
    %vm507 = vcmp.eq.s32.totalorder %v506, 1
    %v508 = vsel %vm507, %v501, %v307
    %s509 = scalar_lea.vmem %s0, 16
    %v510 = vld [vmem:[%s509] sm:$0x3f]
    %v511 = vld [vmem:[%s1 + $0x2] sm:$0x1]
    %v512 = vld [vmem:[%s2 + $0x2] sm:$0x1]
    %v513 = vlaneseq
    %v514 = vshrl.u32 %v513, 7
    %v515 = vsub.s32 0, %v514
    %v516 = vrot.slane %v511, %v515
    %vm517 = vcmp.eq.s32.totalorder %v48, %v516
    %v518 = vsel %vm517, 1, 0
    %v519 = vcvt.s32.f32 %v518
    %v521 = vsel %vm113, %v519, 0
    %523 = vmatprep.subr.mxu0 0.0
    %524 = vmatpush1.msra.mxu0 %v521
    %525 = vmatprep.subr.mxu0 0.0
    %526 = vmatpush1.msra.mxu0 0.0
    %527 = vmatprep.subr.mxu0 0.0
    %528 = vmatpush1.msra.mxu0 0.0
    %529 = vmatprep.subr.mxu0 0.0
    %530 = vmatpush1.msra.mxu0 0.0
    %531 = vmatprep.subr.mxu0 0.0
    %532 = vmatpush1.msra.mxu0 0.0
    %533 = vmatprep.subr.mxu0 0.0
    %534 = vmatpush1.msra.mxu0 0.0
    %535 = vmatprep.subr.mxu0 0.0
    %536 = vmatpush1.msra.mxu0 0.0
    %537 = vmatprep.subr.mxu0 0.0
    %538 = vmatpush1.msra.mxu0 0.0
    %539 = vmatprep.subr.mxu0 0.0
    %540 = vmatpush1.msra.mxu0 0.0
    %541 = vmatprep.subr.mxu0 0.0
    %542 = vmatpush1.msra.mxu0 0.0
    %543 = vmatprep.subr.mxu0 0.0
    %544 = vmatpush1.msra.mxu0 0.0
    %545 = vmatprep.subr.mxu0 0.0
    %546 = vmatpush1.msra.mxu0 0.0
    %547 = vmatprep.subr.mxu0 0.0
    %548 = vmatpush1.msra.mxu0 0.0
    %549 = vmatprep.subr.mxu0 0.0
    %550 = vmatpush1.msra.mxu0 0.0
    %551 = vmatprep.subr.mxu0 0.0
    %552 = vmatpush1.msra.mxu0 0.0
    %553 = vmatprep.subr.mxu0 0.0
    %554 = vmatpush1.msra.mxu0 0.0
    %555 = vmatprep.subr.mxu0 0.0
    %556 = vmatpush1.msra.mxu0 0.0
    %557 = vmatprep.subr.mxu0 0.0
    %558 = vmatpush1.msra.mxu0 0.0
    %559 = vmatprep.subr.mxu0 0.0
    %560 = vmatpush1.msra.mxu0 0.0
    %561 = vmatprep.subr.mxu0 0.0
    %562 = vmatpush1.msra.mxu0 0.0
    %563 = vmatprep.subr.mxu0 0.0
    %564 = vmatpush1.msra.mxu0 0.0
    %565 = vmatprep.subr.mxu0 0.0
    %566 = vmatpush1.msra.mxu0 0.0
    %567 = vmatprep.subr.mxu0 0.0
    %568 = vmatpush1.msra.mxu0 0.0
    %569 = vmatprep.subr.mxu0 0.0
    %570 = vmatpush1.msra.mxu0 0.0
    %571 = vmatprep.subr.mxu0 0.0
    %572 = vmatpush1.msra.mxu0 0.0
    %573 = vmatprep.subr.mxu0 0.0
    %574 = vmatpush1.msra.mxu0 0.0
    %575 = vmatprep.subr.mxu0 0.0
    %576 = vmatpush1.msra.mxu0 0.0
    %577 = vmatprep.subr.mxu0 0.0
    %578 = vmatpush1.msra.mxu0 0.0
    %579 = vmatprep.subr.mxu0 0.0
    %580 = vmatpush1.msra.mxu0 0.0
    %581 = vmatprep.subr.mxu0 0.0
    %582 = vmatpush1.msra.mxu0 0.0
    %583 = vmatprep.subr.mxu0 0.0
    %584 = vmatpush1.msra.mxu0 0.0
    %585 = vmatprep.subr.mxu0 0.0
    %586 = vmatpush1.msra.mxu0 0.0
    %587 = vmatprep.mubr.f32.mxu0 0.0
    %588 = vmatmul.mubr.f32.gmra.mrb[0].mxu0 %v111
    %v589 = vpop.f32.mrb[0].mxu0
    %v590 = vadd.f32 0.0, %v589
    %v591 = vpop.f32.mrb[0].mxu0
    %592 = vdwg.mxu0
    %v593 = vmul.f32 %v318, %v590
    %v594 = vmul.f32 %v510, %v519
    %v595 = vadd.f32 %v593, %v594
    %v596 = vsel %vm190, %v595, 0.0
    %v597 = vrot.slane %v596, 4
    %v598 = vadd.f32 %v596, %v597
    %v599 = vrot.slane %v598, 2
    %v600 = vadd.f32 %v598, %v599
    %v601 = vrot.slane %v600, 1
    %v602 = vadd.f32 %v600, %v601
    %vm603 = vcmp.gt.f32.partialorder %v512, 0.0
    %v604 = vsel %vm603, %v602, 0.0
    %v605 = vadd.f32 %v404, %v604
    %v606 = vmul.f32 %v40, %v519
    %v607 = vsel %vm190, %v606, 0.0
    %v608 = vrot.slane %v607, 4
    %v609 = vadd.f32 %v607, %v608
    %v610 = vrot.slane %v609, 2
    %v611 = vadd.f32 %v609, %v610
    %v612 = vrot.slane %v611, 1
    %v613 = vadd.f32 %v611, %v612
    %v614 = vsel %vm603, %v613, %v413
    %v615 = vsel %vm190, %v508, -inf
    %v616 = vrot.slane %v615, 4
    %v617 = vmax.f32 %v615, %v616
    %v618 = vrot.slane %v617, 2
    %v619 = vmax.f32 %v617, %v618
    %v620 = vrot.slane %v619, 1
    %v621 = vmax.f32 %v619, %v620
    %v622 = vsub.f32 %v508, %v621
    %v623 = vmul.f32 %v622, 1.442695
    %v624 = vpow.pop %v623
    %v626 = vsel %vm113, %v624, 0
    %628 = vmatprep.subr.mxu0 0.0
    %629 = vmatpush1.msra.mxu0 %v626
    %630 = vmatprep.subr.mxu0 0.0
    %631 = vmatpush1.msra.mxu0 0.0
    %632 = vmatprep.subr.mxu0 0.0
    %633 = vmatpush1.msra.mxu0 0.0
    %634 = vmatprep.subr.mxu0 0.0
    %635 = vmatpush1.msra.mxu0 0.0
    %636 = vmatprep.subr.mxu0 0.0
    %637 = vmatpush1.msra.mxu0 0.0
    %638 = vmatprep.subr.mxu0 0.0
    %639 = vmatpush1.msra.mxu0 0.0
    %640 = vmatprep.subr.mxu0 0.0
    %641 = vmatpush1.msra.mxu0 0.0
    %642 = vmatprep.subr.mxu0 0.0
    %643 = vmatpush1.msra.mxu0 0.0
    %644 = vmatprep.subr.mxu0 0.0
    %645 = vmatpush1.msra.mxu0 0.0
    %646 = vmatprep.subr.mxu0 0.0
    %647 = vmatpush1.msra.mxu0 0.0
    %648 = vmatprep.subr.mxu0 0.0
    %649 = vmatpush1.msra.mxu0 0.0
    %650 = vmatprep.subr.mxu0 0.0
    %651 = vmatpush1.msra.mxu0 0.0
    %652 = vmatprep.subr.mxu0 0.0
    %653 = vmatpush1.msra.mxu0 0.0
    %654 = vmatprep.subr.mxu0 0.0
    %655 = vmatpush1.msra.mxu0 0.0
    %656 = vmatprep.subr.mxu0 0.0
    %657 = vmatpush1.msra.mxu0 0.0
    %658 = vmatprep.subr.mxu0 0.0
    %659 = vmatpush1.msra.mxu0 0.0
    %660 = vmatprep.subr.mxu0 0.0
    %661 = vmatpush1.msra.mxu0 0.0
    %662 = vmatprep.subr.mxu0 0.0
    %663 = vmatpush1.msra.mxu0 0.0
    %664 = vmatprep.subr.mxu0 0.0
    %665 = vmatpush1.msra.mxu0 0.0
    %666 = vmatprep.subr.mxu0 0.0
    %667 = vmatpush1.msra.mxu0 0.0
    %668 = vmatprep.subr.mxu0 0.0
    %669 = vmatpush1.msra.mxu0 0.0
    %670 = vmatprep.subr.mxu0 0.0
    %671 = vmatpush1.msra.mxu0 0.0
    %672 = vmatprep.subr.mxu0 0.0
    %673 = vmatpush1.msra.mxu0 0.0
    %674 = vmatprep.subr.mxu0 0.0
    %675 = vmatpush1.msra.mxu0 0.0
    %676 = vmatprep.subr.mxu0 0.0
    %677 = vmatpush1.msra.mxu0 0.0
    %678 = vmatprep.subr.mxu0 0.0
    %679 = vmatpush1.msra.mxu0 0.0
    %680 = vmatprep.subr.mxu0 0.0
    %681 = vmatpush1.msra.mxu0 0.0
    %682 = vmatprep.subr.mxu0 0.0
    %683 = vmatpush1.msra.mxu0 0.0
    %684 = vmatprep.subr.mxu0 0.0
    %685 = vmatpush1.msra.mxu0 0.0
    %686 = vmatprep.subr.mxu0 0.0
    %687 = vmatpush1.msra.mxu0 0.0
    %688 = vmatprep.subr.mxu0 0.0
    %689 = vmatpush1.msra.mxu0 0.0
    %690 = vmatprep.subr.mxu0 0.0
    %691 = vmatpush1.msra.mxu0 0.0
    %692 = vmatprep.mubr.f32.mxu0 0.0
    %693 = vmatmul.mubr.f32.gmra.mrb[0].mxu0 %v221
    %v694 = vpop.f32.mrb[0].mxu0
    %v695 = vadd.f32 0.0, %v694
    %v696 = vpop.f32.mrb[0].mxu0
    %697 = vdwg.mxu0
    %v698 = vadd.f32 %v510, %v46
    %v699 = vadd.f32 %v698, %v621
    %v700 = vlog2.pop %v695
    %v701 = vmul.f32 %v700, 0.6931472
    %v702 = vadd.f32 %v699, %v701
    %v703 = vsel %vm603, 1, 0
    %v704 = vlaneseq
    %v705 = vshrl.u32 %v704, 7
    %v706 = vsub.s32 0, %v705
    %v707 = vrot.slane %v703, %v706
    %vm708 = vcmp.eq.s32.totalorder %v707, 1
    %v709 = vsel %vm708, %v702, %v508
    %s710 = scalar_lea.vmem %s0, 24
    %v711 = vld [vmem:[%s710] sm:$0x3f]
    %v712 = vld [vmem:[%s1 + $0x3] sm:$0x1]
    %v713 = vld [vmem:[%s2 + $0x3] sm:$0x1]
    %v714 = vlaneseq
    %v715 = vshrl.u32 %v714, 7
    %v716 = vsub.s32 0, %v715
    %v717 = vrot.slane %v712, %v716
    %vm718 = vcmp.eq.s32.totalorder %v48, %v717
    %v719 = vsel %vm718, 1, 0
    %v720 = vcvt.s32.f32 %v719
    %v722 = vsel %vm113, %v720, 0
    %724 = vmatprep.subr.mxu0 0.0
    %725 = vmatpush1.msra.mxu0 %v722
    %726 = vmatprep.subr.mxu0 0.0
    %727 = vmatpush1.msra.mxu0 0.0
    %728 = vmatprep.subr.mxu0 0.0
    %729 = vmatpush1.msra.mxu0 0.0
    %730 = vmatprep.subr.mxu0 0.0
    %731 = vmatpush1.msra.mxu0 0.0
    %732 = vmatprep.subr.mxu0 0.0
    %733 = vmatpush1.msra.mxu0 0.0
    %734 = vmatprep.subr.mxu0 0.0
    %735 = vmatpush1.msra.mxu0 0.0
    %736 = vmatprep.subr.mxu0 0.0
    %737 = vmatpush1.msra.mxu0 0.0
    %738 = vmatprep.subr.mxu0 0.0
    %739 = vmatpush1.msra.mxu0 0.0
    %740 = vmatprep.subr.mxu0 0.0
    %741 = vmatpush1.msra.mxu0 0.0
    %742 = vmatprep.subr.mxu0 0.0
    %743 = vmatpush1.msra.mxu0 0.0
    %744 = vmatprep.subr.mxu0 0.0
    %745 = vmatpush1.msra.mxu0 0.0
    %746 = vmatprep.subr.mxu0 0.0
    %747 = vmatpush1.msra.mxu0 0.0
    %748 = vmatprep.subr.mxu0 0.0
    %749 = vmatpush1.msra.mxu0 0.0
    %750 = vmatprep.subr.mxu0 0.0
    %751 = vmatpush1.msra.mxu0 0.0
    %752 = vmatprep.subr.mxu0 0.0
    %753 = vmatpush1.msra.mxu0 0.0
    %754 = vmatprep.subr.mxu0 0.0
    %755 = vmatpush1.msra.mxu0 0.0
    %756 = vmatprep.subr.mxu0 0.0
    %757 = vmatpush1.msra.mxu0 0.0
    %758 = vmatprep.subr.mxu0 0.0
    %759 = vmatpush1.msra.mxu0 0.0
    %760 = vmatprep.subr.mxu0 0.0
    %761 = vmatpush1.msra.mxu0 0.0
    %762 = vmatprep.subr.mxu0 0.0
    %763 = vmatpush1.msra.mxu0 0.0
    %764 = vmatprep.subr.mxu0 0.0
    %765 = vmatpush1.msra.mxu0 0.0
    %766 = vmatprep.subr.mxu0 0.0
    %767 = vmatpush1.msra.mxu0 0.0
    %768 = vmatprep.subr.mxu0 0.0
    %769 = vmatpush1.msra.mxu0 0.0
    %770 = vmatprep.subr.mxu0 0.0
    %771 = vmatpush1.msra.mxu0 0.0
    %772 = vmatprep.subr.mxu0 0.0
    %773 = vmatpush1.msra.mxu0 0.0
    %774 = vmatprep.subr.mxu0 0.0
    %775 = vmatpush1.msra.mxu0 0.0
    %776 = vmatprep.subr.mxu0 0.0
    %777 = vmatpush1.msra.mxu0 0.0
    %778 = vmatprep.subr.mxu0 0.0
    %779 = vmatpush1.msra.mxu0 0.0
    %780 = vmatprep.subr.mxu0 0.0
    %781 = vmatpush1.msra.mxu0 0.0
    %782 = vmatprep.subr.mxu0 0.0
    %783 = vmatpush1.msra.mxu0 0.0
    %784 = vmatprep.subr.mxu0 0.0
    %785 = vmatpush1.msra.mxu0 0.0
    %786 = vmatprep.subr.mxu0 0.0
    %787 = vmatpush1.msra.mxu0 0.0
    %788 = vmatprep.mubr.f32.mxu0 0.0
    %789 = vmatmul.mubr.f32.gmra.mrb[0].mxu0 %v111
    %v790 = vpop.f32.mrb[0].mxu0
    %v791 = vadd.f32 0.0, %v790
    %v792 = vpop.f32.mrb[0].mxu0
    %793 = vdwg.mxu0
    %v794 = vmul.f32 %v519, %v791
    %v795 = vmul.f32 %v711, %v720
    %v796 = vadd.f32 %v794, %v795
    %v797 = vsel %vm190, %v796, 0.0
    %v798 = vrot.slane %v797, 4
    %v799 = vadd.f32 %v797, %v798
    %v800 = vrot.slane %v799, 2
    %v801 = vadd.f32 %v799, %v800
    %v802 = vrot.slane %v801, 1
    %v803 = vadd.f32 %v801, %v802
    %vm804 = vcmp.gt.f32.partialorder %v713, 0.0
    %v805 = vsel %vm804, %v803, 0.0
    %v806 = vadd.f32 %v605, %v805
    %v807 = vmul.f32 %v40, %v720
    %v808 = vsel %vm190, %v807, 0.0
    %v809 = vrot.slane %v808, 4
    %v810 = vadd.f32 %v808, %v809
    %v811 = vrot.slane %v810, 2
    %v812 = vadd.f32 %v810, %v811
    %v813 = vrot.slane %v812, 1
    %v814 = vadd.f32 %v812, %v813
    %v815 = vsel %vm804, %v814, %v614
    %v816 = vsel %vm190, %v709, -inf
    %v817 = vrot.slane %v816, 4
    %v818 = vmax.f32 %v816, %v817
    %v819 = vrot.slane %v818, 2
    %v820 = vmax.f32 %v818, %v819
    %v821 = vrot.slane %v820, 1
    %v822 = vmax.f32 %v820, %v821
    %v823 = vsub.f32 %v709, %v822
    %v824 = vmul.f32 %v823, 1.442695
    %v825 = vpow.pop %v824
    %v827 = vsel %vm113, %v825, 0
    %829 = vmatprep.subr.mxu0 0.0
    %830 = vmatpush1.msra.mxu0 %v827
    %831 = vmatprep.subr.mxu0 0.0
    %832 = vmatpush1.msra.mxu0 0.0
    %833 = vmatprep.subr.mxu0 0.0
    %834 = vmatpush1.msra.mxu0 0.0
    %835 = vmatprep.subr.mxu0 0.0
    %836 = vmatpush1.msra.mxu0 0.0
    %837 = vmatprep.subr.mxu0 0.0
    %838 = vmatpush1.msra.mxu0 0.0
    %839 = vmatprep.subr.mxu0 0.0
    %840 = vmatpush1.msra.mxu0 0.0
    %841 = vmatprep.subr.mxu0 0.0
    %842 = vmatpush1.msra.mxu0 0.0
    %843 = vmatprep.subr.mxu0 0.0
    %844 = vmatpush1.msra.mxu0 0.0
    %845 = vmatprep.subr.mxu0 0.0
    %846 = vmatpush1.msra.mxu0 0.0
    %847 = vmatprep.subr.mxu0 0.0
    %848 = vmatpush1.msra.mxu0 0.0
    %849 = vmatprep.subr.mxu0 0.0
    %850 = vmatpush1.msra.mxu0 0.0
    %851 = vmatprep.subr.mxu0 0.0
    %852 = vmatpush1.msra.mxu0 0.0
    %853 = vmatprep.subr.mxu0 0.0
    %854 = vmatpush1.msra.mxu0 0.0
    %855 = vmatprep.subr.mxu0 0.0
    %856 = vmatpush1.msra.mxu0 0.0
    %857 = vmatprep.subr.mxu0 0.0
    %858 = vmatpush1.msra.mxu0 0.0
    %859 = vmatprep.subr.mxu0 0.0
    %860 = vmatpush1.msra.mxu0 0.0
    %861 = vmatprep.subr.mxu0 0.0
    %862 = vmatpush1.msra.mxu0 0.0
    %863 = vmatprep.subr.mxu0 0.0
    %864 = vmatpush1.msra.mxu0 0.0
    %865 = vmatprep.subr.mxu0 0.0
    %866 = vmatpush1.msra.mxu0 0.0
    %867 = vmatprep.subr.mxu0 0.0
    %868 = vmatpush1.msra.mxu0 0.0
    %869 = vmatprep.subr.mxu0 0.0
    %870 = vmatpush1.msra.mxu0 0.0
    %871 = vmatprep.subr.mxu0 0.0
    %872 = vmatpush1.msra.mxu0 0.0
    %873 = vmatprep.subr.mxu0 0.0
    %874 = vmatpush1.msra.mxu0 0.0
    %875 = vmatprep.subr.mxu0 0.0
    %876 = vmatpush1.msra.mxu0 0.0
    %877 = vmatprep.subr.mxu0 0.0
    %878 = vmatpush1.msra.mxu0 0.0
    %879 = vmatprep.subr.mxu0 0.0
    %880 = vmatpush1.msra.mxu0 0.0
    %881 = vmatprep.subr.mxu0 0.0
    %882 = vmatpush1.msra.mxu0 0.0
    %883 = vmatprep.subr.mxu0 0.0
    %884 = vmatpush1.msra.mxu0 0.0
    %885 = vmatprep.subr.mxu0 0.0
    %886 = vmatpush1.msra.mxu0 0.0
    %887 = vmatprep.subr.mxu0 0.0
    %888 = vmatpush1.msra.mxu0 0.0
    %889 = vmatprep.subr.mxu0 0.0
    %890 = vmatpush1.msra.mxu0 0.0
    %891 = vmatprep.subr.mxu0 0.0
    %892 = vmatpush1.msra.mxu0 0.0
    %893 = vmatprep.mubr.f32.mxu0 0.0
    %894 = vmatmul.mubr.f32.gmra.mrb[0].mxu0 %v221
    %v895 = vpop.f32.mrb[0].mxu0
    %v896 = vadd.f32 0.0, %v895
    %v897 = vpop.f32.mrb[0].mxu0
    %898 = vdwg.mxu0
    %v899 = vadd.f32 %v711, %v46
    %v900 = vadd.f32 %v899, %v822
    %v901 = vlog2.pop %v896
    %v902 = vmul.f32 %v901, 0.6931472
    %v903 = vadd.f32 %v900, %v902
    %v904 = vsel %vm804, 1, 0
    %v905 = vlaneseq
    %v906 = vshrl.u32 %v905, 7
    %v907 = vsub.s32 0, %v906
    %v908 = vrot.slane %v904, %v907
    %vm909 = vcmp.eq.s32.totalorder %v908, 1
    %v910 = vsel %vm909, %v903, %v709
    %s911 = scalar_lea.vmem %s0, 32
    %v912 = vld [vmem:[%s911] sm:$0x3f]
    %v913 = vld [vmem:[%s1 + $0x4] sm:$0x1]
    %v914 = vld [vmem:[%s2 + $0x4] sm:$0x1]
    %v915 = vlaneseq
    %v916 = vshrl.u32 %v915, 7
    %v917 = vsub.s32 0, %v916
    %v918 = vrot.slane %v913, %v917
    %vm919 = vcmp.eq.s32.totalorder %v48, %v918
    %v920 = vsel %vm919, 1, 0
    %v921 = vcvt.s32.f32 %v920
    %v923 = vsel %vm113, %v921, 0
    %925 = vmatprep.subr.mxu0 0.0
    %926 = vmatpush1.msra.mxu0 %v923
    %927 = vmatprep.subr.mxu0 0.0
    %928 = vmatpush1.msra.mxu0 0.0
    %929 = vmatprep.subr.mxu0 0.0
    %930 = vmatpush1.msra.mxu0 0.0
    %931 = vmatprep.subr.mxu0 0.0
    %932 = vmatpush1.msra.mxu0 0.0
    %933 = vmatprep.subr.mxu0 0.0
    %934 = vmatpush1.msra.mxu0 0.0
    %935 = vmatprep.subr.mxu0 0.0
    %936 = vmatpush1.msra.mxu0 0.0
    %937 = vmatprep.subr.mxu0 0.0
    %938 = vmatpush1.msra.mxu0 0.0
    %939 = vmatprep.subr.mxu0 0.0
    %940 = vmatpush1.msra.mxu0 0.0
    %941 = vmatprep.subr.mxu0 0.0
    %942 = vmatpush1.msra.mxu0 0.0
    %943 = vmatprep.subr.mxu0 0.0
    %944 = vmatpush1.msra.mxu0 0.0
    %945 = vmatprep.subr.mxu0 0.0
    %946 = vmatpush1.msra.mxu0 0.0
    %947 = vmatprep.subr.mxu0 0.0
    %948 = vmatpush1.msra.mxu0 0.0
    %949 = vmatprep.subr.mxu0 0.0
    %950 = vmatpush1.msra.mxu0 0.0
    %951 = vmatprep.subr.mxu0 0.0
    %952 = vmatpush1.msra.mxu0 0.0
    %953 = vmatprep.subr.mxu0 0.0
    %954 = vmatpush1.msra.mxu0 0.0
    %955 = vmatprep.subr.mxu0 0.0
    %956 = vmatpush1.msra.mxu0 0.0
    %957 = vmatprep.subr.mxu0 0.0
    %958 = vmatpush1.msra.mxu0 0.0
    %959 = vmatprep.subr.mxu0 0.0
    %960 = vmatpush1.msra.mxu0 0.0
    %961 = vmatprep.subr.mxu0 0.0
    %962 = vmatpush1.msra.mxu0 0.0
    %963 = vmatprep.subr.mxu0 0.0
    %964 = vmatpush1.msra.mxu0 0.0
    %965 = vmatprep.subr.mxu0 0.0
    %966 = vmatpush1.msra.mxu0 0.0
    %967 = vmatprep.subr.mxu0 0.0
    %968 = vmatpush1.msra.mxu0 0.0
    %969 = vmatprep.subr.mxu0 0.0
    %970 = vmatpush1.msra.mxu0 0.0
    %971 = vmatprep.subr.mxu0 0.0
    %972 = vmatpush1.msra.mxu0 0.0
    %973 = vmatprep.subr.mxu0 0.0
    %974 = vmatpush1.msra.mxu0 0.0
    %975 = vmatprep.subr.mxu0 0.0
    %976 = vmatpush1.msra.mxu0 0.0
    %977 = vmatprep.subr.mxu0 0.0
    %978 = vmatpush1.msra.mxu0 0.0
    %979 = vmatprep.subr.mxu0 0.0
    %980 = vmatpush1.msra.mxu0 0.0
    %981 = vmatprep.subr.mxu0 0.0
    %982 = vmatpush1.msra.mxu0 0.0
    %983 = vmatprep.subr.mxu0 0.0
    %984 = vmatpush1.msra.mxu0 0.0
    %985 = vmatprep.subr.mxu0 0.0
    %986 = vmatpush1.msra.mxu0 0.0
    %987 = vmatprep.subr.mxu0 0.0
    %988 = vmatpush1.msra.mxu0 0.0
    %989 = vmatprep.mubr.f32.mxu0 0.0
    %990 = vmatmul.mubr.f32.gmra.mrb[0].mxu0 %v111
    %v991 = vpop.f32.mrb[0].mxu0
    %v992 = vadd.f32 0.0, %v991
    %v993 = vpop.f32.mrb[0].mxu0
    %994 = vdwg.mxu0
    %v995 = vmul.f32 %v720, %v992
    %v996 = vmul.f32 %v912, %v921
    %v997 = vadd.f32 %v995, %v996
    %v998 = vsel %vm190, %v997, 0.0
    %v999 = vrot.slane %v998, 4
    %v1000 = vadd.f32 %v998, %v999
    %v1001 = vrot.slane %v1000, 2
    %v1002 = vadd.f32 %v1000, %v1001
    %v1003 = vrot.slane %v1002, 1
    %v1004 = vadd.f32 %v1002, %v1003
    %vm1005 = vcmp.gt.f32.partialorder %v914, 0.0
    %v1006 = vsel %vm1005, %v1004, 0.0
    %v1007 = vadd.f32 %v806, %v1006
    %v1008 = vmul.f32 %v40, %v921
    %v1009 = vsel %vm190, %v1008, 0.0
    %v1010 = vrot.slane %v1009, 4
    %v1011 = vadd.f32 %v1009, %v1010
    %v1012 = vrot.slane %v1011, 2
    %v1013 = vadd.f32 %v1011, %v1012
    %v1014 = vrot.slane %v1013, 1
    %v1015 = vadd.f32 %v1013, %v1014
    %v1016 = vsel %vm1005, %v1015, %v815
    %v1017 = vsel %vm190, %v910, -inf
    %v1018 = vrot.slane %v1017, 4
    %v1019 = vmax.f32 %v1017, %v1018
    %v1020 = vrot.slane %v1019, 2
    %v1021 = vmax.f32 %v1019, %v1020
    %v1022 = vrot.slane %v1021, 1
    %v1023 = vmax.f32 %v1021, %v1022
    %v1024 = vsub.f32 %v910, %v1023
    %v1025 = vmul.f32 %v1024, 1.442695
    %v1026 = vpow.pop %v1025
    %v1028 = vsel %vm113, %v1026, 0
    %1030 = vmatprep.subr.mxu0 0.0
    %1031 = vmatpush1.msra.mxu0 %v1028
    %1032 = vmatprep.subr.mxu0 0.0
    %1033 = vmatpush1.msra.mxu0 0.0
    %1034 = vmatprep.subr.mxu0 0.0
    %1035 = vmatpush1.msra.mxu0 0.0
    %1036 = vmatprep.subr.mxu0 0.0
    %1037 = vmatpush1.msra.mxu0 0.0
    %1038 = vmatprep.subr.mxu0 0.0
    %1039 = vmatpush1.msra.mxu0 0.0
    %1040 = vmatprep.subr.mxu0 0.0
    %1041 = vmatpush1.msra.mxu0 0.0
    %1042 = vmatprep.subr.mxu0 0.0
    %1043 = vmatpush1.msra.mxu0 0.0
    %1044 = vmatprep.subr.mxu0 0.0
    %1045 = vmatpush1.msra.mxu0 0.0
    %1046 = vmatprep.subr.mxu0 0.0
    %1047 = vmatpush1.msra.mxu0 0.0
    %1048 = vmatprep.subr.mxu0 0.0
    %1049 = vmatpush1.msra.mxu0 0.0
    %1050 = vmatprep.subr.mxu0 0.0
    %1051 = vmatpush1.msra.mxu0 0.0
    %1052 = vmatprep.subr.mxu0 0.0
    %1053 = vmatpush1.msra.mxu0 0.0
    %1054 = vmatprep.subr.mxu0 0.0
    %1055 = vmatpush1.msra.mxu0 0.0
    %1056 = vmatprep.subr.mxu0 0.0
    %1057 = vmatpush1.msra.mxu0 0.0
    %1058 = vmatprep.subr.mxu0 0.0
    %1059 = vmatpush1.msra.mxu0 0.0
    %1060 = vmatprep.subr.mxu0 0.0
    %1061 = vmatpush1.msra.mxu0 0.0
    %1062 = vmatprep.subr.mxu0 0.0
    %1063 = vmatpush1.msra.mxu0 0.0
    %1064 = vmatprep.subr.mxu0 0.0
    %1065 = vmatpush1.msra.mxu0 0.0
    %1066 = vmatprep.subr.mxu0 0.0
    %1067 = vmatpush1.msra.mxu0 0.0
    %1068 = vmatprep.subr.mxu0 0.0
    %1069 = vmatpush1.msra.mxu0 0.0
    %1070 = vmatprep.subr.mxu0 0.0
    %1071 = vmatpush1.msra.mxu0 0.0
    %1072 = vmatprep.subr.mxu0 0.0
    %1073 = vmatpush1.msra.mxu0 0.0
    %1074 = vmatprep.subr.mxu0 0.0
    %1075 = vmatpush1.msra.mxu0 0.0
    %1076 = vmatprep.subr.mxu0 0.0
    %1077 = vmatpush1.msra.mxu0 0.0
    %1078 = vmatprep.subr.mxu0 0.0
    %1079 = vmatpush1.msra.mxu0 0.0
    %1080 = vmatprep.subr.mxu0 0.0
    %1081 = vmatpush1.msra.mxu0 0.0
    %1082 = vmatprep.subr.mxu0 0.0
    %1083 = vmatpush1.msra.mxu0 0.0
    %1084 = vmatprep.subr.mxu0 0.0
    %1085 = vmatpush1.msra.mxu0 0.0
    %1086 = vmatprep.subr.mxu0 0.0
    %1087 = vmatpush1.msra.mxu0 0.0
    %1088 = vmatprep.subr.mxu0 0.0
    %1089 = vmatpush1.msra.mxu0 0.0
    %1090 = vmatprep.subr.mxu0 0.0
    %1091 = vmatpush1.msra.mxu0 0.0
    %1092 = vmatprep.subr.mxu0 0.0
    %1093 = vmatpush1.msra.mxu0 0.0
    %1094 = vmatprep.mubr.f32.mxu0 0.0
    %1095 = vmatmul.mubr.f32.gmra.mrb[0].mxu0 %v221
    %v1096 = vpop.f32.mrb[0].mxu0
    %v1097 = vadd.f32 0.0, %v1096
    %v1098 = vpop.f32.mrb[0].mxu0
    %1099 = vdwg.mxu0
    %v1100 = vadd.f32 %v912, %v46
    %v1101 = vadd.f32 %v1100, %v1023
    %v1102 = vlog2.pop %v1097
    %v1103 = vmul.f32 %v1102, 0.6931472
    %v1104 = vadd.f32 %v1101, %v1103
    %v1105 = vsel %vm1005, 1, 0
    %v1106 = vlaneseq
    %v1107 = vshrl.u32 %v1106, 7
    %v1108 = vsub.s32 0, %v1107
    %v1109 = vrot.slane %v1105, %v1108
    %vm1110 = vcmp.eq.s32.totalorder %v1109, 1
    %v1111 = vsel %vm1110, %v1104, %v910
    %s1112 = scalar_lea.vmem %s0, 40
    %v1113 = vld [vmem:[%s1112] sm:$0x3f]
    %v1114 = vld [vmem:[%s1 + $0x5] sm:$0x1]
    %v1115 = vld [vmem:[%s2 + $0x5] sm:$0x1]
    %v1116 = vlaneseq
    %v1117 = vshrl.u32 %v1116, 7
    %v1118 = vsub.s32 0, %v1117
    %v1119 = vrot.slane %v1114, %v1118
    %vm1120 = vcmp.eq.s32.totalorder %v48, %v1119
    %v1121 = vsel %vm1120, 1, 0
    %v1122 = vcvt.s32.f32 %v1121
    %v1124 = vsel %vm113, %v1122, 0
    %1126 = vmatprep.subr.mxu0 0.0
    %1127 = vmatpush1.msra.mxu0 %v1124
    %1128 = vmatprep.subr.mxu0 0.0
    %1129 = vmatpush1.msra.mxu0 0.0
    %1130 = vmatprep.subr.mxu0 0.0
    %1131 = vmatpush1.msra.mxu0 0.0
    %1132 = vmatprep.subr.mxu0 0.0
    %1133 = vmatpush1.msra.mxu0 0.0
    %1134 = vmatprep.subr.mxu0 0.0
    %1135 = vmatpush1.msra.mxu0 0.0
    %1136 = vmatprep.subr.mxu0 0.0
    %1137 = vmatpush1.msra.mxu0 0.0
    %1138 = vmatprep.subr.mxu0 0.0
    %1139 = vmatpush1.msra.mxu0 0.0
    %1140 = vmatprep.subr.mxu0 0.0
    %1141 = vmatpush1.msra.mxu0 0.0
    %1142 = vmatprep.subr.mxu0 0.0
    %1143 = vmatpush1.msra.mxu0 0.0
    %1144 = vmatprep.subr.mxu0 0.0
    %1145 = vmatpush1.msra.mxu0 0.0
    %1146 = vmatprep.subr.mxu0 0.0
    %1147 = vmatpush1.msra.mxu0 0.0
    %1148 = vmatprep.subr.mxu0 0.0
    %1149 = vmatpush1.msra.mxu0 0.0
    %1150 = vmatprep.subr.mxu0 0.0
    %1151 = vmatpush1.msra.mxu0 0.0
    %1152 = vmatprep.subr.mxu0 0.0
    %1153 = vmatpush1.msra.mxu0 0.0
    %1154 = vmatprep.subr.mxu0 0.0
    %1155 = vmatpush1.msra.mxu0 0.0
    %1156 = vmatprep.subr.mxu0 0.0
    %1157 = vmatpush1.msra.mxu0 0.0
    %1158 = vmatprep.subr.mxu0 0.0
    %1159 = vmatpush1.msra.mxu0 0.0
    %1160 = vmatprep.subr.mxu0 0.0
    %1161 = vmatpush1.msra.mxu0 0.0
    %1162 = vmatprep.subr.mxu0 0.0
    %1163 = vmatpush1.msra.mxu0 0.0
    %1164 = vmatprep.subr.mxu0 0.0
    %1165 = vmatpush1.msra.mxu0 0.0
    %1166 = vmatprep.subr.mxu0 0.0
    %1167 = vmatpush1.msra.mxu0 0.0
    %1168 = vmatprep.subr.mxu0 0.0
    %1169 = vmatpush1.msra.mxu0 0.0
    %1170 = vmatprep.subr.mxu0 0.0
    %1171 = vmatpush1.msra.mxu0 0.0
    %1172 = vmatprep.subr.mxu0 0.0
    %1173 = vmatpush1.msra.mxu0 0.0
    %1174 = vmatprep.subr.mxu0 0.0
    %1175 = vmatpush1.msra.mxu0 0.0
    %1176 = vmatprep.subr.mxu0 0.0
    %1177 = vmatpush1.msra.mxu0 0.0
    %1178 = vmatprep.subr.mxu0 0.0
    %1179 = vmatpush1.msra.mxu0 0.0
    %1180 = vmatprep.subr.mxu0 0.0
    %1181 = vmatpush1.msra.mxu0 0.0
    %1182 = vmatprep.subr.mxu0 0.0
    %1183 = vmatpush1.msra.mxu0 0.0
    %1184 = vmatprep.subr.mxu0 0.0
    %1185 = vmatpush1.msra.mxu0 0.0
    %1186 = vmatprep.subr.mxu0 0.0
    %1187 = vmatpush1.msra.mxu0 0.0
    %1188 = vmatprep.subr.mxu0 0.0
    %1189 = vmatpush1.msra.mxu0 0.0
    %1190 = vmatprep.mubr.f32.mxu0 0.0
    %1191 = vmatmul.mubr.f32.gmra.mrb[0].mxu0 %v111
    %v1192 = vpop.f32.mrb[0].mxu0
    %v1193 = vadd.f32 0.0, %v1192
    %v1194 = vpop.f32.mrb[0].mxu0
    %1195 = vdwg.mxu0
    %v1196 = vmul.f32 %v921, %v1193
    %v1197 = vmul.f32 %v1113, %v1122
    %v1198 = vadd.f32 %v1196, %v1197
    %v1199 = vsel %vm190, %v1198, 0.0
    %v1200 = vrot.slane %v1199, 4
    %v1201 = vadd.f32 %v1199, %v1200
    %v1202 = vrot.slane %v1201, 2
    %v1203 = vadd.f32 %v1201, %v1202
    %v1204 = vrot.slane %v1203, 1
    %v1205 = vadd.f32 %v1203, %v1204
    %vm1206 = vcmp.gt.f32.partialorder %v1115, 0.0
    %v1207 = vsel %vm1206, %v1205, 0.0
    %v1208 = vadd.f32 %v1007, %v1207
    %v1209 = vmul.f32 %v40, %v1122
    %v1210 = vsel %vm190, %v1209, 0.0
    %v1211 = vrot.slane %v1210, 4
    %v1212 = vadd.f32 %v1210, %v1211
    %v1213 = vrot.slane %v1212, 2
    %v1214 = vadd.f32 %v1212, %v1213
    %v1215 = vrot.slane %v1214, 1
    %v1216 = vadd.f32 %v1214, %v1215
    %v1217 = vsel %vm1206, %v1216, %v1016
    %v1218 = vsel %vm190, %v1111, -inf
    %v1219 = vrot.slane %v1218, 4
    %v1220 = vmax.f32 %v1218, %v1219
    %v1221 = vrot.slane %v1220, 2
    %v1222 = vmax.f32 %v1220, %v1221
    %v1223 = vrot.slane %v1222, 1
    %v1224 = vmax.f32 %v1222, %v1223
    %v1225 = vsub.f32 %v1111, %v1224
    %v1226 = vmul.f32 %v1225, 1.442695
    %v1227 = vpow.pop %v1226
    %v1229 = vsel %vm113, %v1227, 0
    %1231 = vmatprep.subr.mxu0 0.0
    %1232 = vmatpush1.msra.mxu0 %v1229
    %1233 = vmatprep.subr.mxu0 0.0
    %1234 = vmatpush1.msra.mxu0 0.0
    %1235 = vmatprep.subr.mxu0 0.0
    %1236 = vmatpush1.msra.mxu0 0.0
    %1237 = vmatprep.subr.mxu0 0.0
    %1238 = vmatpush1.msra.mxu0 0.0
    %1239 = vmatprep.subr.mxu0 0.0
    %1240 = vmatpush1.msra.mxu0 0.0
    %1241 = vmatprep.subr.mxu0 0.0
    %1242 = vmatpush1.msra.mxu0 0.0
    %1243 = vmatprep.subr.mxu0 0.0
    %1244 = vmatpush1.msra.mxu0 0.0
    %1245 = vmatprep.subr.mxu0 0.0
    %1246 = vmatpush1.msra.mxu0 0.0
    %1247 = vmatprep.subr.mxu0 0.0
    %1248 = vmatpush1.msra.mxu0 0.0
    %1249 = vmatprep.subr.mxu0 0.0
    %1250 = vmatpush1.msra.mxu0 0.0
    %1251 = vmatprep.subr.mxu0 0.0
    %1252 = vmatpush1.msra.mxu0 0.0
    %1253 = vmatprep.subr.mxu0 0.0
    %1254 = vmatpush1.msra.mxu0 0.0
    %1255 = vmatprep.subr.mxu0 0.0
    %1256 = vmatpush1.msra.mxu0 0.0
    %1257 = vmatprep.subr.mxu0 0.0
    %1258 = vmatpush1.msra.mxu0 0.0
    %1259 = vmatprep.subr.mxu0 0.0
    %1260 = vmatpush1.msra.mxu0 0.0
    %1261 = vmatprep.subr.mxu0 0.0
    %1262 = vmatpush1.msra.mxu0 0.0
    %1263 = vmatprep.subr.mxu0 0.0
    %1264 = vmatpush1.msra.mxu0 0.0
    %1265 = vmatprep.subr.mxu0 0.0
    %1266 = vmatpush1.msra.mxu0 0.0
    %1267 = vmatprep.subr.mxu0 0.0
    %1268 = vmatpush1.msra.mxu0 0.0
    %1269 = vmatprep.subr.mxu0 0.0
    %1270 = vmatpush1.msra.mxu0 0.0
    %1271 = vmatprep.subr.mxu0 0.0
    %1272 = vmatpush1.msra.mxu0 0.0
    %1273 = vmatprep.subr.mxu0 0.0
    %1274 = vmatpush1.msra.mxu0 0.0
    %1275 = vmatprep.subr.mxu0 0.0
    %1276 = vmatpush1.msra.mxu0 0.0
    %1277 = vmatprep.subr.mxu0 0.0
    %1278 = vmatpush1.msra.mxu0 0.0
    %1279 = vmatprep.subr.mxu0 0.0
    %1280 = vmatpush1.msra.mxu0 0.0
    %1281 = vmatprep.subr.mxu0 0.0
    %1282 = vmatpush1.msra.mxu0 0.0
    %1283 = vmatprep.subr.mxu0 0.0
    %1284 = vmatpush1.msra.mxu0 0.0
    %1285 = vmatprep.subr.mxu0 0.0
    %1286 = vmatpush1.msra.mxu0 0.0
    %1287 = vmatprep.subr.mxu0 0.0
    %1288 = vmatpush1.msra.mxu0 0.0
    %1289 = vmatprep.subr.mxu0 0.0
    %1290 = vmatpush1.msra.mxu0 0.0
    %1291 = vmatprep.subr.mxu0 0.0
    %1292 = vmatpush1.msra.mxu0 0.0
    %1293 = vmatprep.subr.mxu0 0.0
    %1294 = vmatpush1.msra.mxu0 0.0
    %1295 = vmatprep.mubr.f32.mxu0 0.0
    %1296 = vmatmul.mubr.f32.gmra.mrb[0].mxu0 %v221
    %v1297 = vpop.f32.mrb[0].mxu0
    %v1298 = vadd.f32 0.0, %v1297
    %v1299 = vpop.f32.mrb[0].mxu0
    %1300 = vdwg.mxu0
    %v1301 = vadd.f32 %v1113, %v46
    %v1302 = vadd.f32 %v1301, %v1224
    %v1303 = vlog2.pop %v1298
    %v1304 = vmul.f32 %v1303, 0.6931472
    %v1305 = vadd.f32 %v1302, %v1304
    %v1306 = vsel %vm1206, 1, 0
    %v1307 = vlaneseq
    %v1308 = vshrl.u32 %v1307, 7
    %v1309 = vsub.s32 0, %v1308
    %v1310 = vrot.slane %v1306, %v1309
    %vm1311 = vcmp.eq.s32.totalorder %v1310, 1
    %v1312 = vsel %vm1311, %v1305, %v1111
    %s1313 = scalar_lea.vmem %s0, 48
    %v1314 = vld [vmem:[%s1313] sm:$0x3f]
    %v1315 = vld [vmem:[%s1 + $0x6] sm:$0x1]
    %v1316 = vld [vmem:[%s2 + $0x6] sm:$0x1]
    %v1317 = vlaneseq
    %v1318 = vshrl.u32 %v1317, 7
    %v1319 = vsub.s32 0, %v1318
    %v1320 = vrot.slane %v1315, %v1319
    %vm1321 = vcmp.eq.s32.totalorder %v48, %v1320
    %v1322 = vsel %vm1321, 1, 0
    %v1323 = vcvt.s32.f32 %v1322
    %v1325 = vsel %vm113, %v1323, 0
    %1327 = vmatprep.subr.mxu0 0.0
    %1328 = vmatpush1.msra.mxu0 %v1325
    %1329 = vmatprep.subr.mxu0 0.0
    %1330 = vmatpush1.msra.mxu0 0.0
    %1331 = vmatprep.subr.mxu0 0.0
    %1332 = vmatpush1.msra.mxu0 0.0
    %1333 = vmatprep.subr.mxu0 0.0
    %1334 = vmatpush1.msra.mxu0 0.0
    %1335 = vmatprep.subr.mxu0 0.0
    %1336 = vmatpush1.msra.mxu0 0.0
    %1337 = vmatprep.subr.mxu0 0.0
    %1338 = vmatpush1.msra.mxu0 0.0
    %1339 = vmatprep.subr.mxu0 0.0
    %1340 = vmatpush1.msra.mxu0 0.0
    %1341 = vmatprep.subr.mxu0 0.0
    %1342 = vmatpush1.msra.mxu0 0.0
    %1343 = vmatprep.subr.mxu0 0.0
    %1344 = vmatpush1.msra.mxu0 0.0
    %1345 = vmatprep.subr.mxu0 0.0
    %1346 = vmatpush1.msra.mxu0 0.0
    %1347 = vmatprep.subr.mxu0 0.0
    %1348 = vmatpush1.msra.mxu0 0.0
    %1349 = vmatprep.subr.mxu0 0.0
    %1350 = vmatpush1.msra.mxu0 0.0
    %1351 = vmatprep.subr.mxu0 0.0
    %1352 = vmatpush1.msra.mxu0 0.0
    %1353 = vmatprep.subr.mxu0 0.0
    %1354 = vmatpush1.msra.mxu0 0.0
    %1355 = vmatprep.subr.mxu0 0.0
    %1356 = vmatpush1.msra.mxu0 0.0
    %1357 = vmatprep.subr.mxu0 0.0
    %1358 = vmatpush1.msra.mxu0 0.0
    %1359 = vmatprep.subr.mxu0 0.0
    %1360 = vmatpush1.msra.mxu0 0.0
    %1361 = vmatprep.subr.mxu0 0.0
    %1362 = vmatpush1.msra.mxu0 0.0
    %1363 = vmatprep.subr.mxu0 0.0
    %1364 = vmatpush1.msra.mxu0 0.0
    %1365 = vmatprep.subr.mxu0 0.0
    %1366 = vmatpush1.msra.mxu0 0.0
    %1367 = vmatprep.subr.mxu0 0.0
    %1368 = vmatpush1.msra.mxu0 0.0
    %1369 = vmatprep.subr.mxu0 0.0
    %1370 = vmatpush1.msra.mxu0 0.0
    %1371 = vmatprep.subr.mxu0 0.0
    %1372 = vmatpush1.msra.mxu0 0.0
    %1373 = vmatprep.subr.mxu0 0.0
    %1374 = vmatpush1.msra.mxu0 0.0
    %1375 = vmatprep.subr.mxu0 0.0
    %1376 = vmatpush1.msra.mxu0 0.0
    %1377 = vmatprep.subr.mxu0 0.0
    %1378 = vmatpush1.msra.mxu0 0.0
    %1379 = vmatprep.subr.mxu0 0.0
    %1380 = vmatpush1.msra.mxu0 0.0
    %1381 = vmatprep.subr.mxu0 0.0
    %1382 = vmatpush1.msra.mxu0 0.0
    %1383 = vmatprep.subr.mxu0 0.0
    %1384 = vmatpush1.msra.mxu0 0.0
    %1385 = vmatprep.subr.mxu0 0.0
    %1386 = vmatpush1.msra.mxu0 0.0
    %1387 = vmatprep.subr.mxu0 0.0
    %1388 = vmatpush1.msra.mxu0 0.0
    %1389 = vmatprep.subr.mxu0 0.0
    %1390 = vmatpush1.msra.mxu0 0.0
    %1391 = vmatprep.mubr.f32.mxu0 0.0
    %1392 = vmatmul.mubr.f32.gmra.mrb[0].mxu0 %v111
    %v1393 = vpop.f32.mrb[0].mxu0
    %v1394 = vadd.f32 0.0, %v1393
    %v1395 = vpop.f32.mrb[0].mxu0
    %1396 = vdwg.mxu0
    %v1397 = vmul.f32 %v1122, %v1394
    %v1398 = vmul.f32 %v1314, %v1323
    %v1399 = vadd.f32 %v1397, %v1398
    %v1400 = vsel %vm190, %v1399, 0.0
    %v1401 = vrot.slane %v1400, 4
    %v1402 = vadd.f32 %v1400, %v1401
    %v1403 = vrot.slane %v1402, 2
    %v1404 = vadd.f32 %v1402, %v1403
    %v1405 = vrot.slane %v1404, 1
    %v1406 = vadd.f32 %v1404, %v1405
    %vm1407 = vcmp.gt.f32.partialorder %v1316, 0.0
    %v1408 = vsel %vm1407, %v1406, 0.0
    %v1409 = vadd.f32 %v1208, %v1408
    %v1410 = vmul.f32 %v40, %v1323
    %v1411 = vsel %vm190, %v1410, 0.0
    %v1412 = vrot.slane %v1411, 4
    %v1413 = vadd.f32 %v1411, %v1412
    %v1414 = vrot.slane %v1413, 2
    %v1415 = vadd.f32 %v1413, %v1414
    %v1416 = vrot.slane %v1415, 1
    %v1417 = vadd.f32 %v1415, %v1416
    %v1418 = vsel %vm1407, %v1417, %v1217
    %v1419 = vsel %vm190, %v1312, -inf
    %v1420 = vrot.slane %v1419, 4
    %v1421 = vmax.f32 %v1419, %v1420
    %v1422 = vrot.slane %v1421, 2
    %v1423 = vmax.f32 %v1421, %v1422
    %v1424 = vrot.slane %v1423, 1
    %v1425 = vmax.f32 %v1423, %v1424
    %v1426 = vsub.f32 %v1312, %v1425
    %v1427 = vmul.f32 %v1426, 1.442695
    %v1428 = vpow.pop %v1427
    %v1430 = vsel %vm113, %v1428, 0
    %1432 = vmatprep.subr.mxu0 0.0
    %1433 = vmatpush1.msra.mxu0 %v1430
    %1434 = vmatprep.subr.mxu0 0.0
    %1435 = vmatpush1.msra.mxu0 0.0
    %1436 = vmatprep.subr.mxu0 0.0
    %1437 = vmatpush1.msra.mxu0 0.0
    %1438 = vmatprep.subr.mxu0 0.0
    %1439 = vmatpush1.msra.mxu0 0.0
    %1440 = vmatprep.subr.mxu0 0.0
    %1441 = vmatpush1.msra.mxu0 0.0
    %1442 = vmatprep.subr.mxu0 0.0
    %1443 = vmatpush1.msra.mxu0 0.0
    %1444 = vmatprep.subr.mxu0 0.0
    %1445 = vmatpush1.msra.mxu0 0.0
    %1446 = vmatprep.subr.mxu0 0.0
    %1447 = vmatpush1.msra.mxu0 0.0
    %1448 = vmatprep.subr.mxu0 0.0
    %1449 = vmatpush1.msra.mxu0 0.0
    %1450 = vmatprep.subr.mxu0 0.0
    %1451 = vmatpush1.msra.mxu0 0.0
    %1452 = vmatprep.subr.mxu0 0.0
    %1453 = vmatpush1.msra.mxu0 0.0
    %1454 = vmatprep.subr.mxu0 0.0
    %1455 = vmatpush1.msra.mxu0 0.0
    %1456 = vmatprep.subr.mxu0 0.0
    %1457 = vmatpush1.msra.mxu0 0.0
    %1458 = vmatprep.subr.mxu0 0.0
    %1459 = vmatpush1.msra.mxu0 0.0
    %1460 = vmatprep.subr.mxu0 0.0
    %1461 = vmatpush1.msra.mxu0 0.0
    %1462 = vmatprep.subr.mxu0 0.0
    %1463 = vmatpush1.msra.mxu0 0.0
    %1464 = vmatprep.subr.mxu0 0.0
    %1465 = vmatpush1.msra.mxu0 0.0
    %1466 = vmatprep.subr.mxu0 0.0
    %1467 = vmatpush1.msra.mxu0 0.0
    %1468 = vmatprep.subr.mxu0 0.0
    %1469 = vmatpush1.msra.mxu0 0.0
    %1470 = vmatprep.subr.mxu0 0.0
    %1471 = vmatpush1.msra.mxu0 0.0
    %1472 = vmatprep.subr.mxu0 0.0
    %1473 = vmatpush1.msra.mxu0 0.0
    %1474 = vmatprep.subr.mxu0 0.0
    %1475 = vmatpush1.msra.mxu0 0.0
    %1476 = vmatprep.subr.mxu0 0.0
    %1477 = vmatpush1.msra.mxu0 0.0
    %1478 = vmatprep.subr.mxu0 0.0
    %1479 = vmatpush1.msra.mxu0 0.0
    %1480 = vmatprep.subr.mxu0 0.0
    %1481 = vmatpush1.msra.mxu0 0.0
    %1482 = vmatprep.subr.mxu0 0.0
    %1483 = vmatpush1.msra.mxu0 0.0
    %1484 = vmatprep.subr.mxu0 0.0
    %1485 = vmatpush1.msra.mxu0 0.0
    %1486 = vmatprep.subr.mxu0 0.0
    %1487 = vmatpush1.msra.mxu0 0.0
    %1488 = vmatprep.subr.mxu0 0.0
    %1489 = vmatpush1.msra.mxu0 0.0
    %1490 = vmatprep.subr.mxu0 0.0
    %1491 = vmatpush1.msra.mxu0 0.0
    %1492 = vmatprep.subr.mxu0 0.0
    %1493 = vmatpush1.msra.mxu0 0.0
    %1494 = vmatprep.subr.mxu0 0.0
    %1495 = vmatpush1.msra.mxu0 0.0
    %1496 = vmatprep.mubr.f32.mxu0 0.0
    %1497 = vmatmul.mubr.f32.gmra.mrb[0].mxu0 %v221
    %v1498 = vpop.f32.mrb[0].mxu0
    %v1499 = vadd.f32 0.0, %v1498
    %v1500 = vpop.f32.mrb[0].mxu0
    %1501 = vdwg.mxu0
    %v1502 = vadd.f32 %v1314, %v46
    %v1503 = vadd.f32 %v1502, %v1425
    %v1504 = vlog2.pop %v1499
    %v1505 = vmul.f32 %v1504, 0.6931472
    %v1506 = vadd.f32 %v1503, %v1505
    %v1507 = vsel %vm1407, 1, 0
    %v1508 = vlaneseq
    %v1509 = vshrl.u32 %v1508, 7
    %v1510 = vsub.s32 0, %v1509
    %v1511 = vrot.slane %v1507, %v1510
    %vm1512 = vcmp.eq.s32.totalorder %v1511, 1
    %v1513 = vsel %vm1512, %v1506, %v1312
    %s1514 = scalar_lea.vmem %s0, 56
    %v1515 = vld [vmem:[%s1514] sm:$0x3f]
    %v1516 = vld [vmem:[%s1 + $0x7] sm:$0x1]
    %v1517 = vld [vmem:[%s2 + $0x7] sm:$0x1]
    %v1518 = vlaneseq
    %v1519 = vshrl.u32 %v1518, 7
    %v1520 = vsub.s32 0, %v1519
    %v1521 = vrot.slane %v1516, %v1520
    %vm1522 = vcmp.eq.s32.totalorder %v48, %v1521
    %v1523 = vsel %vm1522, 1, 0
    %v1524 = vcvt.s32.f32 %v1523
    %v1526 = vsel %vm113, %v1524, 0
    %1528 = vmatprep.subr.mxu0 0.0
    %1529 = vmatpush1.msra.mxu0 %v1526
    %1530 = vmatprep.subr.mxu0 0.0
    %1531 = vmatpush1.msra.mxu0 0.0
    %1532 = vmatprep.subr.mxu0 0.0
    %1533 = vmatpush1.msra.mxu0 0.0
    %1534 = vmatprep.subr.mxu0 0.0
    %1535 = vmatpush1.msra.mxu0 0.0
    %1536 = vmatprep.subr.mxu0 0.0
    %1537 = vmatpush1.msra.mxu0 0.0
    %1538 = vmatprep.subr.mxu0 0.0
    %1539 = vmatpush1.msra.mxu0 0.0
    %1540 = vmatprep.subr.mxu0 0.0
    %1541 = vmatpush1.msra.mxu0 0.0
    %1542 = vmatprep.subr.mxu0 0.0
    %1543 = vmatpush1.msra.mxu0 0.0
    %1544 = vmatprep.subr.mxu0 0.0
    %1545 = vmatpush1.msra.mxu0 0.0
    %1546 = vmatprep.subr.mxu0 0.0
    %1547 = vmatpush1.msra.mxu0 0.0
    %1548 = vmatprep.subr.mxu0 0.0
    %1549 = vmatpush1.msra.mxu0 0.0
    %1550 = vmatprep.subr.mxu0 0.0
    %1551 = vmatpush1.msra.mxu0 0.0
    %1552 = vmatprep.subr.mxu0 0.0
    %1553 = vmatpush1.msra.mxu0 0.0
    %1554 = vmatprep.subr.mxu0 0.0
    %1555 = vmatpush1.msra.mxu0 0.0
    %1556 = vmatprep.subr.mxu0 0.0
    %1557 = vmatpush1.msra.mxu0 0.0
    %1558 = vmatprep.subr.mxu0 0.0
    %1559 = vmatpush1.msra.mxu0 0.0
    %1560 = vmatprep.subr.mxu0 0.0
    %1561 = vmatpush1.msra.mxu0 0.0
    %1562 = vmatprep.subr.mxu0 0.0
    %1563 = vmatpush1.msra.mxu0 0.0
    %1564 = vmatprep.subr.mxu0 0.0
    %1565 = vmatpush1.msra.mxu0 0.0
    %1566 = vmatprep.subr.mxu0 0.0
    %1567 = vmatpush1.msra.mxu0 0.0
    %1568 = vmatprep.subr.mxu0 0.0
    %1569 = vmatpush1.msra.mxu0 0.0
    %1570 = vmatprep.subr.mxu0 0.0
    %1571 = vmatpush1.msra.mxu0 0.0
    %1572 = vmatprep.subr.mxu0 0.0
    %1573 = vmatpush1.msra.mxu0 0.0
    %1574 = vmatprep.subr.mxu0 0.0
    %1575 = vmatpush1.msra.mxu0 0.0
    %1576 = vmatprep.subr.mxu0 0.0
    %1577 = vmatpush1.msra.mxu0 0.0
    %1578 = vmatprep.subr.mxu0 0.0
    %1579 = vmatpush1.msra.mxu0 0.0
    %1580 = vmatprep.subr.mxu0 0.0
    %1581 = vmatpush1.msra.mxu0 0.0
    %1582 = vmatprep.subr.mxu0 0.0
    %1583 = vmatpush1.msra.mxu0 0.0
    %1584 = vmatprep.subr.mxu0 0.0
    %1585 = vmatpush1.msra.mxu0 0.0
    %1586 = vmatprep.subr.mxu0 0.0
    %1587 = vmatpush1.msra.mxu0 0.0
    %1588 = vmatprep.subr.mxu0 0.0
    %1589 = vmatpush1.msra.mxu0 0.0
    %1590 = vmatprep.subr.mxu0 0.0
    %1591 = vmatpush1.msra.mxu0 0.0
    %1592 = vmatprep.mubr.f32.mxu0 0.0
    %1593 = vmatmul.mubr.f32.gmra.mrb[0].mxu0 %v111
    %v1594 = vpop.f32.mrb[0].mxu0
    %v1595 = vadd.f32 0.0, %v1594
    %v1596 = vpop.f32.mrb[0].mxu0
    %1597 = vdwg.mxu0
    %v1598 = vmul.f32 %v1323, %v1595
    %v1599 = vmul.f32 %v1515, %v1524
    %v1600 = vadd.f32 %v1598, %v1599
    %v1601 = vsel %vm190, %v1600, 0.0
    %v1602 = vrot.slane %v1601, 4
    %v1603 = vadd.f32 %v1601, %v1602
    %v1604 = vrot.slane %v1603, 2
    %v1605 = vadd.f32 %v1603, %v1604
    %v1606 = vrot.slane %v1605, 1
    %v1607 = vadd.f32 %v1605, %v1606
    %vm1608 = vcmp.gt.f32.partialorder %v1517, 0.0
    %v1609 = vsel %vm1608, %v1607, 0.0
    %v1610 = vadd.f32 %v1409, %v1609
    %v1611 = vmul.f32 %v40, %v1524
    %v1612 = vsel %vm190, %v1611, 0.0
    %v1613 = vrot.slane %v1612, 4
    %v1614 = vadd.f32 %v1612, %v1613
    %v1615 = vrot.slane %v1614, 2
    %v1616 = vadd.f32 %v1614, %v1615
    %v1617 = vrot.slane %v1616, 1
    %v1618 = vadd.f32 %v1616, %v1617
    %v1619 = vsel %vm1608, %v1618, %v1418
    %v1620 = vsel %vm190, %v1513, -inf
    %v1621 = vrot.slane %v1620, 4
    %v1622 = vmax.f32 %v1620, %v1621
    %v1623 = vrot.slane %v1622, 2
    %v1624 = vmax.f32 %v1622, %v1623
    %v1625 = vrot.slane %v1624, 1
    %v1626 = vmax.f32 %v1624, %v1625
    %v1627 = vsub.f32 %v1513, %v1626
    %v1628 = vmul.f32 %v1627, 1.442695
    %v1629 = vpow.pop %v1628
    %v1631 = vsel %vm113, %v1629, 0
    %1633 = vmatprep.subr.mxu0 0.0
    %1634 = vmatpush1.msra.mxu0 %v1631
    %1635 = vmatprep.subr.mxu0 0.0
    %1636 = vmatpush1.msra.mxu0 0.0
    %1637 = vmatprep.subr.mxu0 0.0
    %1638 = vmatpush1.msra.mxu0 0.0
    %1639 = vmatprep.subr.mxu0 0.0
    %1640 = vmatpush1.msra.mxu0 0.0
    %1641 = vmatprep.subr.mxu0 0.0
    %1642 = vmatpush1.msra.mxu0 0.0
    %1643 = vmatprep.subr.mxu0 0.0
    %1644 = vmatpush1.msra.mxu0 0.0
    %1645 = vmatprep.subr.mxu0 0.0
    %1646 = vmatpush1.msra.mxu0 0.0
    %1647 = vmatprep.subr.mxu0 0.0
    %1648 = vmatpush1.msra.mxu0 0.0
    %1649 = vmatprep.subr.mxu0 0.0
    %1650 = vmatpush1.msra.mxu0 0.0
    %1651 = vmatprep.subr.mxu0 0.0
    %1652 = vmatpush1.msra.mxu0 0.0
    %1653 = vmatprep.subr.mxu0 0.0
    %1654 = vmatpush1.msra.mxu0 0.0
    %1655 = vmatprep.subr.mxu0 0.0
    %1656 = vmatpush1.msra.mxu0 0.0
    %1657 = vmatprep.subr.mxu0 0.0
    %1658 = vmatpush1.msra.mxu0 0.0
    %1659 = vmatprep.subr.mxu0 0.0
    %1660 = vmatpush1.msra.mxu0 0.0
    %1661 = vmatprep.subr.mxu0 0.0
    %1662 = vmatpush1.msra.mxu0 0.0
    %1663 = vmatprep.subr.mxu0 0.0
    %1664 = vmatpush1.msra.mxu0 0.0
    %1665 = vmatprep.subr.mxu0 0.0
    %1666 = vmatpush1.msra.mxu0 0.0
    %1667 = vmatprep.subr.mxu0 0.0
    %1668 = vmatpush1.msra.mxu0 0.0
    %1669 = vmatprep.subr.mxu0 0.0
    %1670 = vmatpush1.msra.mxu0 0.0
    %1671 = vmatprep.subr.mxu0 0.0
    %1672 = vmatpush1.msra.mxu0 0.0
    %1673 = vmatprep.subr.mxu0 0.0
    %1674 = vmatpush1.msra.mxu0 0.0
    %1675 = vmatprep.subr.mxu0 0.0
    %1676 = vmatpush1.msra.mxu0 0.0
    %1677 = vmatprep.subr.mxu0 0.0
    %1678 = vmatpush1.msra.mxu0 0.0
    %1679 = vmatprep.subr.mxu0 0.0
    %1680 = vmatpush1.msra.mxu0 0.0
    %1681 = vmatprep.subr.mxu0 0.0
    %1682 = vmatpush1.msra.mxu0 0.0
    %1683 = vmatprep.subr.mxu0 0.0
    %1684 = vmatpush1.msra.mxu0 0.0
    %1685 = vmatprep.subr.mxu0 0.0
    %1686 = vmatpush1.msra.mxu0 0.0
    %1687 = vmatprep.subr.mxu0 0.0
    %1688 = vmatpush1.msra.mxu0 0.0
    %1689 = vmatprep.subr.mxu0 0.0
    %1690 = vmatpush1.msra.mxu0 0.0
    %1691 = vmatprep.subr.mxu0 0.0
    %1692 = vmatpush1.msra.mxu0 0.0
    %1693 = vmatprep.subr.mxu0 0.0
    %1694 = vmatpush1.msra.mxu0 0.0
    %1695 = vmatprep.subr.mxu0 0.0
    %1696 = vmatpush1.msra.mxu0 0.0
    %1697 = vmatprep.mubr.f32.mxu0 0.0
    %1698 = vmatmul.mubr.f32.gmra.mrb[0].mxu0 %v221
    %v1699 = vpop.f32.mrb[0].mxu0
    %v1700 = vadd.f32 0.0, %v1699
    %v1701 = vpop.f32.mrb[0].mxu0
    %1702 = vdwg.mxu0
    %v1703 = vadd.f32 %v1515, %v46
    %v1704 = vadd.f32 %v1703, %v1626
    %v1705 = vlog2.pop %v1700
    %v1706 = vmul.f32 %v1705, 0.6931472
    %v1707 = vadd.f32 %v1704, %v1706
    %v1708 = vsel %vm1608, 1, 0
    %v1709 = vlaneseq
    %v1710 = vshrl.u32 %v1709, 7
    %v1711 = vsub.s32 0, %v1710
    %v1712 = vrot.slane %v1708, %v1711
    %vm1713 = vcmp.eq.s32.totalorder %v1712, 1
    %v1714 = vsel %vm1713, %v1707, %v1513
    %s1715 = scalar_lea.vmem %s0, 64
    %v1716 = vld [vmem:[%s1715] sm:$0x3f]
    %v1717 = vld [vmem:[%s1 + $0x8] sm:$0x1]
    %v1718 = vld [vmem:[%s2 + $0x8] sm:$0x1]
    %v1719 = vlaneseq
    %v1720 = vshrl.u32 %v1719, 7
    %v1721 = vsub.s32 0, %v1720
    %v1722 = vrot.slane %v1717, %v1721
    %vm1723 = vcmp.eq.s32.totalorder %v48, %v1722
    %v1724 = vsel %vm1723, 1, 0
    %v1725 = vcvt.s32.f32 %v1724
    %v1727 = vsel %vm113, %v1725, 0
    %1729 = vmatprep.subr.mxu0 0.0
    %1730 = vmatpush1.msra.mxu0 %v1727
    %1731 = vmatprep.subr.mxu0 0.0
    %1732 = vmatpush1.msra.mxu0 0.0
    %1733 = vmatprep.subr.mxu0 0.0
    %1734 = vmatpush1.msra.mxu0 0.0
    %1735 = vmatprep.subr.mxu0 0.0
    %1736 = vmatpush1.msra.mxu0 0.0
    %1737 = vmatprep.subr.mxu0 0.0
    %1738 = vmatpush1.msra.mxu0 0.0
    %1739 = vmatprep.subr.mxu0 0.0
    %1740 = vmatpush1.msra.mxu0 0.0
    %1741 = vmatprep.subr.mxu0 0.0
    %1742 = vmatpush1.msra.mxu0 0.0
    %1743 = vmatprep.subr.mxu0 0.0
    %1744 = vmatpush1.msra.mxu0 0.0
    %1745 = vmatprep.subr.mxu0 0.0
    %1746 = vmatpush1.msra.mxu0 0.0
    %1747 = vmatprep.subr.mxu0 0.0
    %1748 = vmatpush1.msra.mxu0 0.0
    %1749 = vmatprep.subr.mxu0 0.0
    %1750 = vmatpush1.msra.mxu0 0.0
    %1751 = vmatprep.subr.mxu0 0.0
    %1752 = vmatpush1.msra.mxu0 0.0
    %1753 = vmatprep.subr.mxu0 0.0
    %1754 = vmatpush1.msra.mxu0 0.0
    %1755 = vmatprep.subr.mxu0 0.0
    %1756 = vmatpush1.msra.mxu0 0.0
    %1757 = vmatprep.subr.mxu0 0.0
    %1758 = vmatpush1.msra.mxu0 0.0
    %1759 = vmatprep.subr.mxu0 0.0
    %1760 = vmatpush1.msra.mxu0 0.0
    %1761 = vmatprep.subr.mxu0 0.0
    %1762 = vmatpush1.msra.mxu0 0.0
    %1763 = vmatprep.subr.mxu0 0.0
    %1764 = vmatpush1.msra.mxu0 0.0
    %1765 = vmatprep.subr.mxu0 0.0
    %1766 = vmatpush1.msra.mxu0 0.0
    %1767 = vmatprep.subr.mxu0 0.0
    %1768 = vmatpush1.msra.mxu0 0.0
    %1769 = vmatprep.subr.mxu0 0.0
    %1770 = vmatpush1.msra.mxu0 0.0
    %1771 = vmatprep.subr.mxu0 0.0
    %1772 = vmatpush1.msra.mxu0 0.0
    %1773 = vmatprep.subr.mxu0 0.0
    %1774 = vmatpush1.msra.mxu0 0.0
    %1775 = vmatprep.subr.mxu0 0.0
    %1776 = vmatpush1.msra.mxu0 0.0
    %1777 = vmatprep.subr.mxu0 0.0
    %1778 = vmatpush1.msra.mxu0 0.0
    %1779 = vmatprep.subr.mxu0 0.0
    %1780 = vmatpush1.msra.mxu0 0.0
    %1781 = vmatprep.subr.mxu0 0.0
    %1782 = vmatpush1.msra.mxu0 0.0
    %1783 = vmatprep.subr.mxu0 0.0
    %1784 = vmatpush1.msra.mxu0 0.0
    %1785 = vmatprep.subr.mxu0 0.0
    %1786 = vmatpush1.msra.mxu0 0.0
    %1787 = vmatprep.subr.mxu0 0.0
    %1788 = vmatpush1.msra.mxu0 0.0
    %1789 = vmatprep.subr.mxu0 0.0
    %1790 = vmatpush1.msra.mxu0 0.0
    %1791 = vmatprep.subr.mxu0 0.0
    %1792 = vmatpush1.msra.mxu0 0.0
    %1793 = vmatprep.mubr.f32.mxu0 0.0
    %1794 = vmatmul.mubr.f32.gmra.mrb[0].mxu0 %v111
    %v1795 = vpop.f32.mrb[0].mxu0
    %v1796 = vadd.f32 0.0, %v1795
    %v1797 = vpop.f32.mrb[0].mxu0
    %1798 = vdwg.mxu0
    %v1799 = vmul.f32 %v1524, %v1796
    %v1800 = vmul.f32 %v1716, %v1725
    %v1801 = vadd.f32 %v1799, %v1800
    %v1802 = vsel %vm190, %v1801, 0.0
    %v1803 = vrot.slane %v1802, 4
    %v1804 = vadd.f32 %v1802, %v1803
    %v1805 = vrot.slane %v1804, 2
    %v1806 = vadd.f32 %v1804, %v1805
    %v1807 = vrot.slane %v1806, 1
    %v1808 = vadd.f32 %v1806, %v1807
    %vm1809 = vcmp.gt.f32.partialorder %v1718, 0.0
    %v1810 = vsel %vm1809, %v1808, 0.0
    %v1811 = vadd.f32 %v1610, %v1810
    %v1812 = vmul.f32 %v40, %v1725
    %v1813 = vsel %vm190, %v1812, 0.0
    %v1814 = vrot.slane %v1813, 4
    %v1815 = vadd.f32 %v1813, %v1814
    %v1816 = vrot.slane %v1815, 2
    %v1817 = vadd.f32 %v1815, %v1816
    %v1818 = vrot.slane %v1817, 1
    %v1819 = vadd.f32 %v1817, %v1818
    %v1820 = vsel %vm1809, %v1819, %v1619
    %v1821 = vsel %vm190, %v1714, -inf
    %v1822 = vrot.slane %v1821, 4
    %v1823 = vmax.f32 %v1821, %v1822
    %v1824 = vrot.slane %v1823, 2
    %v1825 = vmax.f32 %v1823, %v1824
    %v1826 = vrot.slane %v1825, 1
    %v1827 = vmax.f32 %v1825, %v1826
    %v1828 = vsub.f32 %v1714, %v1827
    %v1829 = vmul.f32 %v1828, 1.442695
    %v1830 = vpow.pop %v1829
    %v1832 = vsel %vm113, %v1830, 0
    %1834 = vmatprep.subr.mxu0 0.0
    %1835 = vmatpush1.msra.mxu0 %v1832
    %1836 = vmatprep.subr.mxu0 0.0
    %1837 = vmatpush1.msra.mxu0 0.0
    %1838 = vmatprep.subr.mxu0 0.0
    %1839 = vmatpush1.msra.mxu0 0.0
    %1840 = vmatprep.subr.mxu0 0.0
    %1841 = vmatpush1.msra.mxu0 0.0
    %1842 = vmatprep.subr.mxu0 0.0
    %1843 = vmatpush1.msra.mxu0 0.0
    %1844 = vmatprep.subr.mxu0 0.0
    %1845 = vmatpush1.msra.mxu0 0.0
    %1846 = vmatprep.subr.mxu0 0.0
    %1847 = vmatpush1.msra.mxu0 0.0
    %1848 = vmatprep.subr.mxu0 0.0
    %1849 = vmatpush1.msra.mxu0 0.0
    %1850 = vmatprep.subr.mxu0 0.0
    %1851 = vmatpush1.msra.mxu0 0.0
    %1852 = vmatprep.subr.mxu0 0.0
    %1853 = vmatpush1.msra.mxu0 0.0
    %1854 = vmatprep.subr.mxu0 0.0
    %1855 = vmatpush1.msra.mxu0 0.0
    %1856 = vmatprep.subr.mxu0 0.0
    %1857 = vmatpush1.msra.mxu0 0.0
    %1858 = vmatprep.subr.mxu0 0.0
    %1859 = vmatpush1.msra.mxu0 0.0
    %1860 = vmatprep.subr.mxu0 0.0
    %1861 = vmatpush1.msra.mxu0 0.0
    %1862 = vmatprep.subr.mxu0 0.0
    %1863 = vmatpush1.msra.mxu0 0.0
    %1864 = vmatprep.subr.mxu0 0.0
    %1865 = vmatpush1.msra.mxu0 0.0
    %1866 = vmatprep.subr.mxu0 0.0
    %1867 = vmatpush1.msra.mxu0 0.0
    %1868 = vmatprep.subr.mxu0 0.0
    %1869 = vmatpush1.msra.mxu0 0.0
    %1870 = vmatprep.subr.mxu0 0.0
    %1871 = vmatpush1.msra.mxu0 0.0
    %1872 = vmatprep.subr.mxu0 0.0
    %1873 = vmatpush1.msra.mxu0 0.0
    %1874 = vmatprep.subr.mxu0 0.0
    %1875 = vmatpush1.msra.mxu0 0.0
    %1876 = vmatprep.subr.mxu0 0.0
    %1877 = vmatpush1.msra.mxu0 0.0
    %1878 = vmatprep.subr.mxu0 0.0
    %1879 = vmatpush1.msra.mxu0 0.0
    %1880 = vmatprep.subr.mxu0 0.0
    %1881 = vmatpush1.msra.mxu0 0.0
    %1882 = vmatprep.subr.mxu0 0.0
    %1883 = vmatpush1.msra.mxu0 0.0
    %1884 = vmatprep.subr.mxu0 0.0
    %1885 = vmatpush1.msra.mxu0 0.0
    %1886 = vmatprep.subr.mxu0 0.0
    %1887 = vmatpush1.msra.mxu0 0.0
    %1888 = vmatprep.subr.mxu0 0.0
    %1889 = vmatpush1.msra.mxu0 0.0
    %1890 = vmatprep.subr.mxu0 0.0
    %1891 = vmatpush1.msra.mxu0 0.0
    %1892 = vmatprep.subr.mxu0 0.0
    %1893 = vmatpush1.msra.mxu0 0.0
    %1894 = vmatprep.subr.mxu0 0.0
    %1895 = vmatpush1.msra.mxu0 0.0
    %1896 = vmatprep.subr.mxu0 0.0
    %1897 = vmatpush1.msra.mxu0 0.0
    %1898 = vmatprep.mubr.f32.mxu0 0.0
    %1899 = vmatmul.mubr.f32.gmra.mrb[0].mxu0 %v221
    %v1900 = vpop.f32.mrb[0].mxu0
    %v1901 = vadd.f32 0.0, %v1900
    %v1902 = vpop.f32.mrb[0].mxu0
    %1903 = vdwg.mxu0
    %v1904 = vadd.f32 %v1716, %v46
    %v1905 = vadd.f32 %v1904, %v1827
    %v1906 = vlog2.pop %v1901
    %v1907 = vmul.f32 %v1906, 0.6931472
    %v1908 = vadd.f32 %v1905, %v1907
    %v1909 = vsel %vm1809, 1, 0
    %v1910 = vlaneseq
    %v1911 = vshrl.u32 %v1910, 7
    %v1912 = vsub.s32 0, %v1911
    %v1913 = vrot.slane %v1909, %v1912
    %vm1914 = vcmp.eq.s32.totalorder %v1913, 1
    %v1915 = vsel %vm1914, %v1908, %v1714
    %s1916 = scalar_lea.vmem %s0, 72
    %v1917 = vld [vmem:[%s1916] sm:$0x3f]
    %v1918 = vld [vmem:[%s1 + $0x9] sm:$0x1]
    %v1919 = vld [vmem:[%s2 + $0x9] sm:$0x1]
    %v1920 = vlaneseq
    %v1921 = vshrl.u32 %v1920, 7
    %v1922 = vsub.s32 0, %v1921
    %v1923 = vrot.slane %v1918, %v1922
    %vm1924 = vcmp.eq.s32.totalorder %v48, %v1923
    %v1925 = vsel %vm1924, 1, 0
    %v1926 = vcvt.s32.f32 %v1925
    %v1928 = vsel %vm113, %v1926, 0
    %1930 = vmatprep.subr.mxu0 0.0
    %1931 = vmatpush1.msra.mxu0 %v1928
    %1932 = vmatprep.subr.mxu0 0.0
    %1933 = vmatpush1.msra.mxu0 0.0
    %1934 = vmatprep.subr.mxu0 0.0
    %1935 = vmatpush1.msra.mxu0 0.0
    %1936 = vmatprep.subr.mxu0 0.0
    %1937 = vmatpush1.msra.mxu0 0.0
    %1938 = vmatprep.subr.mxu0 0.0
    %1939 = vmatpush1.msra.mxu0 0.0
    %1940 = vmatprep.subr.mxu0 0.0
    %1941 = vmatpush1.msra.mxu0 0.0
    %1942 = vmatprep.subr.mxu0 0.0
    %1943 = vmatpush1.msra.mxu0 0.0
    %1944 = vmatprep.subr.mxu0 0.0
    %1945 = vmatpush1.msra.mxu0 0.0
    %1946 = vmatprep.subr.mxu0 0.0
    %1947 = vmatpush1.msra.mxu0 0.0
    %1948 = vmatprep.subr.mxu0 0.0
    %1949 = vmatpush1.msra.mxu0 0.0
    %1950 = vmatprep.subr.mxu0 0.0
    %1951 = vmatpush1.msra.mxu0 0.0
    %1952 = vmatprep.subr.mxu0 0.0
    %1953 = vmatpush1.msra.mxu0 0.0
    %1954 = vmatprep.subr.mxu0 0.0
    %1955 = vmatpush1.msra.mxu0 0.0
    %1956 = vmatprep.subr.mxu0 0.0
    %1957 = vmatpush1.msra.mxu0 0.0
    %1958 = vmatprep.subr.mxu0 0.0
    %1959 = vmatpush1.msra.mxu0 0.0
    %1960 = vmatprep.subr.mxu0 0.0
    %1961 = vmatpush1.msra.mxu0 0.0
    %1962 = vmatprep.subr.mxu0 0.0
    %1963 = vmatpush1.msra.mxu0 0.0
    %1964 = vmatprep.subr.mxu0 0.0
    %1965 = vmatpush1.msra.mxu0 0.0
    %1966 = vmatprep.subr.mxu0 0.0
    %1967 = vmatpush1.msra.mxu0 0.0
    %1968 = vmatprep.subr.mxu0 0.0
    %1969 = vmatpush1.msra.mxu0 0.0
    %1970 = vmatprep.subr.mxu0 0.0
    %1971 = vmatpush1.msra.mxu0 0.0
    %1972 = vmatprep.subr.mxu0 0.0
    %1973 = vmatpush1.msra.mxu0 0.0
    %1974 = vmatprep.subr.mxu0 0.0
    %1975 = vmatpush1.msra.mxu0 0.0
    %1976 = vmatprep.subr.mxu0 0.0
    %1977 = vmatpush1.msra.mxu0 0.0
    %1978 = vmatprep.subr.mxu0 0.0
    %1979 = vmatpush1.msra.mxu0 0.0
    %1980 = vmatprep.subr.mxu0 0.0
    %1981 = vmatpush1.msra.mxu0 0.0
    %1982 = vmatprep.subr.mxu0 0.0
    %1983 = vmatpush1.msra.mxu0 0.0
    %1984 = vmatprep.subr.mxu0 0.0
    %1985 = vmatpush1.msra.mxu0 0.0
    %1986 = vmatprep.subr.mxu0 0.0
    %1987 = vmatpush1.msra.mxu0 0.0
    %1988 = vmatprep.subr.mxu0 0.0
    %1989 = vmatpush1.msra.mxu0 0.0
    %1990 = vmatprep.subr.mxu0 0.0
    %1991 = vmatpush1.msra.mxu0 0.0
    %1992 = vmatprep.subr.mxu0 0.0
    %1993 = vmatpush1.msra.mxu0 0.0
    %1994 = vmatprep.mubr.f32.mxu0 0.0
    %1995 = vmatmul.mubr.f32.gmra.mrb[0].mxu0 %v111
    %v1996 = vpop.f32.mrb[0].mxu0
    %v1997 = vadd.f32 0.0, %v1996
    %v1998 = vpop.f32.mrb[0].mxu0
    %1999 = vdwg.mxu0
    %v2000 = vmul.f32 %v1725, %v1997
    %v2001 = vmul.f32 %v1917, %v1926
    %v2002 = vadd.f32 %v2000, %v2001
    %v2003 = vsel %vm190, %v2002, 0.0
    %v2004 = vrot.slane %v2003, 4
    %v2005 = vadd.f32 %v2003, %v2004
    %v2006 = vrot.slane %v2005, 2
    %v2007 = vadd.f32 %v2005, %v2006
    %v2008 = vrot.slane %v2007, 1
    %v2009 = vadd.f32 %v2007, %v2008
    %vm2010 = vcmp.gt.f32.partialorder %v1919, 0.0
    %v2011 = vsel %vm2010, %v2009, 0.0
    %v2012 = vadd.f32 %v1811, %v2011
    %v2013 = vmul.f32 %v40, %v1926
    %v2014 = vsel %vm190, %v2013, 0.0
    %v2015 = vrot.slane %v2014, 4
    %v2016 = vadd.f32 %v2014, %v2015
    %v2017 = vrot.slane %v2016, 2
    %v2018 = vadd.f32 %v2016, %v2017
    %v2019 = vrot.slane %v2018, 1
    %v2020 = vadd.f32 %v2018, %v2019
    %v2021 = vsel %vm2010, %v2020, %v1820
    %v2022 = vsel %vm190, %v1915, -inf
    %v2023 = vrot.slane %v2022, 4
    %v2024 = vmax.f32 %v2022, %v2023
    %v2025 = vrot.slane %v2024, 2
    %v2026 = vmax.f32 %v2024, %v2025
    %v2027 = vrot.slane %v2026, 1
    %v2028 = vmax.f32 %v2026, %v2027
    %v2029 = vsub.f32 %v1915, %v2028
    %v2030 = vmul.f32 %v2029, 1.442695
    %v2031 = vpow.pop %v2030
    %v2033 = vsel %vm113, %v2031, 0
    %2035 = vmatprep.subr.mxu0 0.0
    %2036 = vmatpush1.msra.mxu0 %v2033
    %2037 = vmatprep.subr.mxu0 0.0
    %2038 = vmatpush1.msra.mxu0 0.0
    %2039 = vmatprep.subr.mxu0 0.0
    %2040 = vmatpush1.msra.mxu0 0.0
    %2041 = vmatprep.subr.mxu0 0.0
    %2042 = vmatpush1.msra.mxu0 0.0
    %2043 = vmatprep.subr.mxu0 0.0
    %2044 = vmatpush1.msra.mxu0 0.0
    %2045 = vmatprep.subr.mxu0 0.0
    %2046 = vmatpush1.msra.mxu0 0.0
    %2047 = vmatprep.subr.mxu0 0.0
    %2048 = vmatpush1.msra.mxu0 0.0
    %2049 = vmatprep.subr.mxu0 0.0
    %2050 = vmatpush1.msra.mxu0 0.0
    %2051 = vmatprep.subr.mxu0 0.0
    %2052 = vmatpush1.msra.mxu0 0.0
    %2053 = vmatprep.subr.mxu0 0.0
    %2054 = vmatpush1.msra.mxu0 0.0
    %2055 = vmatprep.subr.mxu0 0.0
    %2056 = vmatpush1.msra.mxu0 0.0
    %2057 = vmatprep.subr.mxu0 0.0
    %2058 = vmatpush1.msra.mxu0 0.0
    %2059 = vmatprep.subr.mxu0 0.0
    %2060 = vmatpush1.msra.mxu0 0.0
    %2061 = vmatprep.subr.mxu0 0.0
    %2062 = vmatpush1.msra.mxu0 0.0
    %2063 = vmatprep.subr.mxu0 0.0
    %2064 = vmatpush1.msra.mxu0 0.0
    %2065 = vmatprep.subr.mxu0 0.0
    %2066 = vmatpush1.msra.mxu0 0.0
    %2067 = vmatprep.subr.mxu0 0.0
    %2068 = vmatpush1.msra.mxu0 0.0
    %2069 = vmatprep.subr.mxu0 0.0
    %2070 = vmatpush1.msra.mxu0 0.0
    %2071 = vmatprep.subr.mxu0 0.0
    %2072 = vmatpush1.msra.mxu0 0.0
    %2073 = vmatprep.subr.mxu0 0.0
    %2074 = vmatpush1.msra.mxu0 0.0
    %2075 = vmatprep.subr.mxu0 0.0
    %2076 = vmatpush1.msra.mxu0 0.0
    %2077 = vmatprep.subr.mxu0 0.0
    %2078 = vmatpush1.msra.mxu0 0.0
    %2079 = vmatprep.subr.mxu0 0.0
    %2080 = vmatpush1.msra.mxu0 0.0
    %2081 = vmatprep.subr.mxu0 0.0
    %2082 = vmatpush1.msra.mxu0 0.0
    %2083 = vmatprep.subr.mxu0 0.0
    %2084 = vmatpush1.msra.mxu0 0.0
    %2085 = vmatprep.subr.mxu0 0.0
    %2086 = vmatpush1.msra.mxu0 0.0
    %2087 = vmatprep.subr.mxu0 0.0
    %2088 = vmatpush1.msra.mxu0 0.0
    %2089 = vmatprep.subr.mxu0 0.0
    %2090 = vmatpush1.msra.mxu0 0.0
    %2091 = vmatprep.subr.mxu0 0.0
    %2092 = vmatpush1.msra.mxu0 0.0
    %2093 = vmatprep.subr.mxu0 0.0
    %2094 = vmatpush1.msra.mxu0 0.0
    %2095 = vmatprep.subr.mxu0 0.0
    %2096 = vmatpush1.msra.mxu0 0.0
    %2097 = vmatprep.subr.mxu0 0.0
    %2098 = vmatpush1.msra.mxu0 0.0
    %2099 = vmatprep.mubr.f32.mxu0 0.0
    %2100 = vmatmul.mubr.f32.gmra.mrb[0].mxu0 %v221
    %v2101 = vpop.f32.mrb[0].mxu0
    %v2102 = vadd.f32 0.0, %v2101
    %v2103 = vpop.f32.mrb[0].mxu0
    %2104 = vdwg.mxu0
    %v2105 = vadd.f32 %v1917, %v46
    %v2106 = vadd.f32 %v2105, %v2028
    %v2107 = vlog2.pop %v2102
    %v2108 = vmul.f32 %v2107, 0.6931472
    %v2109 = vadd.f32 %v2106, %v2108
    %v2110 = vsel %vm2010, 1, 0
    %v2111 = vlaneseq
    %v2112 = vshrl.u32 %v2111, 7
    %v2113 = vsub.s32 0, %v2112
    %v2114 = vrot.slane %v2110, %v2113
    %vm2115 = vcmp.eq.s32.totalorder %v2114, 1
    %v2116 = vsel %vm2115, %v2109, %v1915
    %s2117 = scalar_lea.vmem %s0, 80
    %v2118 = vld [vmem:[%s2117] sm:$0x3f]
    %v2119 = vld [vmem:[%s1 + $0xa] sm:$0x1]
    %v2120 = vld [vmem:[%s2 + $0xa] sm:$0x1]
    %v2121 = vlaneseq
    %v2122 = vshrl.u32 %v2121, 7
    %v2123 = vsub.s32 0, %v2122
    %v2124 = vrot.slane %v2119, %v2123
    %vm2125 = vcmp.eq.s32.totalorder %v48, %v2124
    %v2126 = vsel %vm2125, 1, 0
    %v2127 = vcvt.s32.f32 %v2126
    %v2129 = vsel %vm113, %v2127, 0
    %2131 = vmatprep.subr.mxu0 0.0
    %2132 = vmatpush1.msra.mxu0 %v2129
    %2133 = vmatprep.subr.mxu0 0.0
    %2134 = vmatpush1.msra.mxu0 0.0
    %2135 = vmatprep.subr.mxu0 0.0
    %2136 = vmatpush1.msra.mxu0 0.0
    %2137 = vmatprep.subr.mxu0 0.0
    %2138 = vmatpush1.msra.mxu0 0.0
    %2139 = vmatprep.subr.mxu0 0.0
    %2140 = vmatpush1.msra.mxu0 0.0
    %2141 = vmatprep.subr.mxu0 0.0
    %2142 = vmatpush1.msra.mxu0 0.0
    %2143 = vmatprep.subr.mxu0 0.0
    %2144 = vmatpush1.msra.mxu0 0.0
    %2145 = vmatprep.subr.mxu0 0.0
    %2146 = vmatpush1.msra.mxu0 0.0
    %2147 = vmatprep.subr.mxu0 0.0
    %2148 = vmatpush1.msra.mxu0 0.0
    %2149 = vmatprep.subr.mxu0 0.0
    %2150 = vmatpush1.msra.mxu0 0.0
    %2151 = vmatprep.subr.mxu0 0.0
    %2152 = vmatpush1.msra.mxu0 0.0
    %2153 = vmatprep.subr.mxu0 0.0
    %2154 = vmatpush1.msra.mxu0 0.0
    %2155 = vmatprep.subr.mxu0 0.0
    %2156 = vmatpush1.msra.mxu0 0.0
    %2157 = vmatprep.subr.mxu0 0.0
    %2158 = vmatpush1.msra.mxu0 0.0
    %2159 = vmatprep.subr.mxu0 0.0
    %2160 = vmatpush1.msra.mxu0 0.0
    %2161 = vmatprep.subr.mxu0 0.0
    %2162 = vmatpush1.msra.mxu0 0.0
    %2163 = vmatprep.subr.mxu0 0.0
    %2164 = vmatpush1.msra.mxu0 0.0
    %2165 = vmatprep.subr.mxu0 0.0
    %2166 = vmatpush1.msra.mxu0 0.0
    %2167 = vmatprep.subr.mxu0 0.0
    %2168 = vmatpush1.msra.mxu0 0.0
    %2169 = vmatprep.subr.mxu0 0.0
    %2170 = vmatpush1.msra.mxu0 0.0
    %2171 = vmatprep.subr.mxu0 0.0
    %2172 = vmatpush1.msra.mxu0 0.0
    %2173 = vmatprep.subr.mxu0 0.0
    %2174 = vmatpush1.msra.mxu0 0.0
    %2175 = vmatprep.subr.mxu0 0.0
    %2176 = vmatpush1.msra.mxu0 0.0
    %2177 = vmatprep.subr.mxu0 0.0
    %2178 = vmatpush1.msra.mxu0 0.0
    %2179 = vmatprep.subr.mxu0 0.0
    %2180 = vmatpush1.msra.mxu0 0.0
    %2181 = vmatprep.subr.mxu0 0.0
    %2182 = vmatpush1.msra.mxu0 0.0
    %2183 = vmatprep.subr.mxu0 0.0
    %2184 = vmatpush1.msra.mxu0 0.0
    %2185 = vmatprep.subr.mxu0 0.0
    %2186 = vmatpush1.msra.mxu0 0.0
    %2187 = vmatprep.subr.mxu0 0.0
    %2188 = vmatpush1.msra.mxu0 0.0
    %2189 = vmatprep.subr.mxu0 0.0
    %2190 = vmatpush1.msra.mxu0 0.0
    %2191 = vmatprep.subr.mxu0 0.0
    %2192 = vmatpush1.msra.mxu0 0.0
    %2193 = vmatprep.subr.mxu0 0.0
    %2194 = vmatpush1.msra.mxu0 0.0
    %2195 = vmatprep.mubr.f32.mxu0 0.0
    %2196 = vmatmul.mubr.f32.gmra.mrb[0].mxu0 %v111
    %v2197 = vpop.f32.mrb[0].mxu0
    %v2198 = vadd.f32 0.0, %v2197
    %v2199 = vpop.f32.mrb[0].mxu0
    %2200 = vdwg.mxu0
    %v2201 = vmul.f32 %v1926, %v2198
    %v2202 = vmul.f32 %v2118, %v2127
    %v2203 = vadd.f32 %v2201, %v2202
    %v2204 = vsel %vm190, %v2203, 0.0
    %v2205 = vrot.slane %v2204, 4
    %v2206 = vadd.f32 %v2204, %v2205
    %v2207 = vrot.slane %v2206, 2
    %v2208 = vadd.f32 %v2206, %v2207
    %v2209 = vrot.slane %v2208, 1
    %v2210 = vadd.f32 %v2208, %v2209
    %vm2211 = vcmp.gt.f32.partialorder %v2120, 0.0
    %v2212 = vsel %vm2211, %v2210, 0.0
    %v2213 = vadd.f32 %v2012, %v2212
    %v2214 = vmul.f32 %v40, %v2127
    %v2215 = vsel %vm190, %v2214, 0.0
    %v2216 = vrot.slane %v2215, 4
    %v2217 = vadd.f32 %v2215, %v2216
    %v2218 = vrot.slane %v2217, 2
    %v2219 = vadd.f32 %v2217, %v2218
    %v2220 = vrot.slane %v2219, 1
    %v2221 = vadd.f32 %v2219, %v2220
    %v2222 = vsel %vm2211, %v2221, %v2021
    %v2223 = vsel %vm190, %v2116, -inf
    %v2224 = vrot.slane %v2223, 4
    %v2225 = vmax.f32 %v2223, %v2224
    %v2226 = vrot.slane %v2225, 2
    %v2227 = vmax.f32 %v2225, %v2226
    %v2228 = vrot.slane %v2227, 1
    %v2229 = vmax.f32 %v2227, %v2228
    %v2230 = vsub.f32 %v2116, %v2229
    %v2231 = vmul.f32 %v2230, 1.442695
    %v2232 = vpow.pop %v2231
    %v2234 = vsel %vm113, %v2232, 0
    %2236 = vmatprep.subr.mxu0 0.0
    %2237 = vmatpush1.msra.mxu0 %v2234
    %2238 = vmatprep.subr.mxu0 0.0
    %2239 = vmatpush1.msra.mxu0 0.0
    %2240 = vmatprep.subr.mxu0 0.0
    %2241 = vmatpush1.msra.mxu0 0.0
    %2242 = vmatprep.subr.mxu0 0.0
    %2243 = vmatpush1.msra.mxu0 0.0
    %2244 = vmatprep.subr.mxu0 0.0
    %2245 = vmatpush1.msra.mxu0 0.0
    %2246 = vmatprep.subr.mxu0 0.0
    %2247 = vmatpush1.msra.mxu0 0.0
    %2248 = vmatprep.subr.mxu0 0.0
    %2249 = vmatpush1.msra.mxu0 0.0
    %2250 = vmatprep.subr.mxu0 0.0
    %2251 = vmatpush1.msra.mxu0 0.0
    %2252 = vmatprep.subr.mxu0 0.0
    %2253 = vmatpush1.msra.mxu0 0.0
    %2254 = vmatprep.subr.mxu0 0.0
    %2255 = vmatpush1.msra.mxu0 0.0
    %2256 = vmatprep.subr.mxu0 0.0
    %2257 = vmatpush1.msra.mxu0 0.0
    %2258 = vmatprep.subr.mxu0 0.0
    %2259 = vmatpush1.msra.mxu0 0.0
    %2260 = vmatprep.subr.mxu0 0.0
    %2261 = vmatpush1.msra.mxu0 0.0
    %2262 = vmatprep.subr.mxu0 0.0
    %2263 = vmatpush1.msra.mxu0 0.0
    %2264 = vmatprep.subr.mxu0 0.0
    %2265 = vmatpush1.msra.mxu0 0.0
    %2266 = vmatprep.subr.mxu0 0.0
    %2267 = vmatpush1.msra.mxu0 0.0
    %2268 = vmatprep.subr.mxu0 0.0
    %2269 = vmatpush1.msra.mxu0 0.0
    %2270 = vmatprep.subr.mxu0 0.0
    %2271 = vmatpush1.msra.mxu0 0.0
    %2272 = vmatprep.subr.mxu0 0.0
    %2273 = vmatpush1.msra.mxu0 0.0
    %2274 = vmatprep.subr.mxu0 0.0
    %2275 = vmatpush1.msra.mxu0 0.0
    %2276 = vmatprep.subr.mxu0 0.0
    %2277 = vmatpush1.msra.mxu0 0.0
    %2278 = vmatprep.subr.mxu0 0.0
    %2279 = vmatpush1.msra.mxu0 0.0
    %2280 = vmatprep.subr.mxu0 0.0
    %2281 = vmatpush1.msra.mxu0 0.0
    %2282 = vmatprep.subr.mxu0 0.0
    %2283 = vmatpush1.msra.mxu0 0.0
    %2284 = vmatprep.subr.mxu0 0.0
    %2285 = vmatpush1.msra.mxu0 0.0
    %2286 = vmatprep.subr.mxu0 0.0
    %2287 = vmatpush1.msra.mxu0 0.0
    %2288 = vmatprep.subr.mxu0 0.0
    %2289 = vmatpush1.msra.mxu0 0.0
    %2290 = vmatprep.subr.mxu0 0.0
    %2291 = vmatpush1.msra.mxu0 0.0
    %2292 = vmatprep.subr.mxu0 0.0
    %2293 = vmatpush1.msra.mxu0 0.0
    %2294 = vmatprep.subr.mxu0 0.0
    %2295 = vmatpush1.msra.mxu0 0.0
    %2296 = vmatprep.subr.mxu0 0.0
    %2297 = vmatpush1.msra.mxu0 0.0
    %2298 = vmatprep.subr.mxu0 0.0
    %2299 = vmatpush1.msra.mxu0 0.0
    %2300 = vmatprep.mubr.f32.mxu0 0.0
    %2301 = vmatmul.mubr.f32.gmra.mrb[0].mxu0 %v221
    %v2302 = vpop.f32.mrb[0].mxu0
    %v2303 = vadd.f32 0.0, %v2302
    %v2304 = vpop.f32.mrb[0].mxu0
    %2305 = vdwg.mxu0
    %v2306 = vadd.f32 %v2118, %v46
    %v2307 = vadd.f32 %v2306, %v2229
    %v2308 = vlog2.pop %v2303
    %v2309 = vmul.f32 %v2308, 0.6931472
    %v2310 = vadd.f32 %v2307, %v2309
    %v2311 = vsel %vm2211, 1, 0
    %v2312 = vlaneseq
    %v2313 = vshrl.u32 %v2312, 7
    %v2314 = vsub.s32 0, %v2313
    %v2315 = vrot.slane %v2311, %v2314
    %vm2316 = vcmp.eq.s32.totalorder %v2315, 1
    %v2317 = vsel %vm2316, %v2310, %v2116
    %s2318 = scalar_lea.vmem %s0, 88
    %v2319 = vld [vmem:[%s2318] sm:$0x3f]
    %v2320 = vld [vmem:[%s1 + $0xb] sm:$0x1]
    %v2321 = vld [vmem:[%s2 + $0xb] sm:$0x1]
    %v2322 = vlaneseq
    %v2323 = vshrl.u32 %v2322, 7
    %v2324 = vsub.s32 0, %v2323
    %v2325 = vrot.slane %v2320, %v2324
    %vm2326 = vcmp.eq.s32.totalorder %v48, %v2325
    %v2327 = vsel %vm2326, 1, 0
    %v2328 = vcvt.s32.f32 %v2327
    %v2330 = vsel %vm113, %v2328, 0
    %2332 = vmatprep.subr.mxu0 0.0
    %2333 = vmatpush1.msra.mxu0 %v2330
    %2334 = vmatprep.subr.mxu0 0.0
    %2335 = vmatpush1.msra.mxu0 0.0
    %2336 = vmatprep.subr.mxu0 0.0
    %2337 = vmatpush1.msra.mxu0 0.0
    %2338 = vmatprep.subr.mxu0 0.0
    %2339 = vmatpush1.msra.mxu0 0.0
    %2340 = vmatprep.subr.mxu0 0.0
    %2341 = vmatpush1.msra.mxu0 0.0
    %2342 = vmatprep.subr.mxu0 0.0
    %2343 = vmatpush1.msra.mxu0 0.0
    %2344 = vmatprep.subr.mxu0 0.0
    %2345 = vmatpush1.msra.mxu0 0.0
    %2346 = vmatprep.subr.mxu0 0.0
    %2347 = vmatpush1.msra.mxu0 0.0
    %2348 = vmatprep.subr.mxu0 0.0
    %2349 = vmatpush1.msra.mxu0 0.0
    %2350 = vmatprep.subr.mxu0 0.0
    %2351 = vmatpush1.msra.mxu0 0.0
    %2352 = vmatprep.subr.mxu0 0.0
    %2353 = vmatpush1.msra.mxu0 0.0
    %2354 = vmatprep.subr.mxu0 0.0
    %2355 = vmatpush1.msra.mxu0 0.0
    %2356 = vmatprep.subr.mxu0 0.0
    %2357 = vmatpush1.msra.mxu0 0.0
    %2358 = vmatprep.subr.mxu0 0.0
    %2359 = vmatpush1.msra.mxu0 0.0
    %2360 = vmatprep.subr.mxu0 0.0
    %2361 = vmatpush1.msra.mxu0 0.0
    %2362 = vmatprep.subr.mxu0 0.0
    %2363 = vmatpush1.msra.mxu0 0.0
    %2364 = vmatprep.subr.mxu0 0.0
    %2365 = vmatpush1.msra.mxu0 0.0
    %2366 = vmatprep.subr.mxu0 0.0
    %2367 = vmatpush1.msra.mxu0 0.0
    %2368 = vmatprep.subr.mxu0 0.0
    %2369 = vmatpush1.msra.mxu0 0.0
    %2370 = vmatprep.subr.mxu0 0.0
    %2371 = vmatpush1.msra.mxu0 0.0
    %2372 = vmatprep.subr.mxu0 0.0
    %2373 = vmatpush1.msra.mxu0 0.0
    %2374 = vmatprep.subr.mxu0 0.0
    %2375 = vmatpush1.msra.mxu0 0.0
    %2376 = vmatprep.subr.mxu0 0.0
    %2377 = vmatpush1.msra.mxu0 0.0
    %2378 = vmatprep.subr.mxu0 0.0
    %2379 = vmatpush1.msra.mxu0 0.0
    %2380 = vmatprep.subr.mxu0 0.0
    %2381 = vmatpush1.msra.mxu0 0.0
    %2382 = vmatprep.subr.mxu0 0.0
    %2383 = vmatpush1.msra.mxu0 0.0
    %2384 = vmatprep.subr.mxu0 0.0
    %2385 = vmatpush1.msra.mxu0 0.0
    %2386 = vmatprep.subr.mxu0 0.0
    %2387 = vmatpush1.msra.mxu0 0.0
    %2388 = vmatprep.subr.mxu0 0.0
    %2389 = vmatpush1.msra.mxu0 0.0
    %2390 = vmatprep.subr.mxu0 0.0
    %2391 = vmatpush1.msra.mxu0 0.0
    %2392 = vmatprep.subr.mxu0 0.0
    %2393 = vmatpush1.msra.mxu0 0.0
    %2394 = vmatprep.subr.mxu0 0.0
    %2395 = vmatpush1.msra.mxu0 0.0
    %2396 = vmatprep.mubr.f32.mxu0 0.0
    %2397 = vmatmul.mubr.f32.gmra.mrb[0].mxu0 %v111
    %v2398 = vpop.f32.mrb[0].mxu0
    %v2399 = vadd.f32 0.0, %v2398
    %v2400 = vpop.f32.mrb[0].mxu0
    %2401 = vdwg.mxu0
    %v2402 = vmul.f32 %v2127, %v2399
    %v2403 = vmul.f32 %v2319, %v2328
    %v2404 = vadd.f32 %v2402, %v2403
    %v2405 = vsel %vm190, %v2404, 0.0
    %v2406 = vrot.slane %v2405, 4
    %v2407 = vadd.f32 %v2405, %v2406
    %v2408 = vrot.slane %v2407, 2
    %v2409 = vadd.f32 %v2407, %v2408
    %v2410 = vrot.slane %v2409, 1
    %v2411 = vadd.f32 %v2409, %v2410
    %vm2412 = vcmp.gt.f32.partialorder %v2321, 0.0
    %v2413 = vsel %vm2412, %v2411, 0.0
    %v2414 = vadd.f32 %v2213, %v2413
    %v2415 = vmul.f32 %v40, %v2328
    %v2416 = vsel %vm190, %v2415, 0.0
    %v2417 = vrot.slane %v2416, 4
    %v2418 = vadd.f32 %v2416, %v2417
    %v2419 = vrot.slane %v2418, 2
    %v2420 = vadd.f32 %v2418, %v2419
    %v2421 = vrot.slane %v2420, 1
    %v2422 = vadd.f32 %v2420, %v2421
    %v2423 = vsel %vm2412, %v2422, %v2222
    %v2424 = vsel %vm190, %v2317, -inf
    %v2425 = vrot.slane %v2424, 4
    %v2426 = vmax.f32 %v2424, %v2425
    %v2427 = vrot.slane %v2426, 2
    %v2428 = vmax.f32 %v2426, %v2427
    %v2429 = vrot.slane %v2428, 1
    %v2430 = vmax.f32 %v2428, %v2429
    %v2431 = vsub.f32 %v2317, %v2430
    %v2432 = vmul.f32 %v2431, 1.442695
    %v2433 = vpow.pop %v2432
    %v2435 = vsel %vm113, %v2433, 0
    %2437 = vmatprep.subr.mxu0 0.0
    %2438 = vmatpush1.msra.mxu0 %v2435
    %2439 = vmatprep.subr.mxu0 0.0
    %2440 = vmatpush1.msra.mxu0 0.0
    %2441 = vmatprep.subr.mxu0 0.0
    %2442 = vmatpush1.msra.mxu0 0.0
    %2443 = vmatprep.subr.mxu0 0.0
    %2444 = vmatpush1.msra.mxu0 0.0
    %2445 = vmatprep.subr.mxu0 0.0
    %2446 = vmatpush1.msra.mxu0 0.0
    %2447 = vmatprep.subr.mxu0 0.0
    %2448 = vmatpush1.msra.mxu0 0.0
    %2449 = vmatprep.subr.mxu0 0.0
    %2450 = vmatpush1.msra.mxu0 0.0
    %2451 = vmatprep.subr.mxu0 0.0
    %2452 = vmatpush1.msra.mxu0 0.0
    %2453 = vmatprep.subr.mxu0 0.0
    %2454 = vmatpush1.msra.mxu0 0.0
    %2455 = vmatprep.subr.mxu0 0.0
    %2456 = vmatpush1.msra.mxu0 0.0
    %2457 = vmatprep.subr.mxu0 0.0
    %2458 = vmatpush1.msra.mxu0 0.0
    %2459 = vmatprep.subr.mxu0 0.0
    %2460 = vmatpush1.msra.mxu0 0.0
    %2461 = vmatprep.subr.mxu0 0.0
    %2462 = vmatpush1.msra.mxu0 0.0
    %2463 = vmatprep.subr.mxu0 0.0
    %2464 = vmatpush1.msra.mxu0 0.0
    %2465 = vmatprep.subr.mxu0 0.0
    %2466 = vmatpush1.msra.mxu0 0.0
    %2467 = vmatprep.subr.mxu0 0.0
    %2468 = vmatpush1.msra.mxu0 0.0
    %2469 = vmatprep.subr.mxu0 0.0
    %2470 = vmatpush1.msra.mxu0 0.0
    %2471 = vmatprep.subr.mxu0 0.0
    %2472 = vmatpush1.msra.mxu0 0.0
    %2473 = vmatprep.subr.mxu0 0.0
    %2474 = vmatpush1.msra.mxu0 0.0
    %2475 = vmatprep.subr.mxu0 0.0
    %2476 = vmatpush1.msra.mxu0 0.0
    %2477 = vmatprep.subr.mxu0 0.0
    %2478 = vmatpush1.msra.mxu0 0.0
    %2479 = vmatprep.subr.mxu0 0.0
    %2480 = vmatpush1.msra.mxu0 0.0
    %2481 = vmatprep.subr.mxu0 0.0
    %2482 = vmatpush1.msra.mxu0 0.0
    %2483 = vmatprep.subr.mxu0 0.0
    %2484 = vmatpush1.msra.mxu0 0.0
    %2485 = vmatprep.subr.mxu0 0.0
    %2486 = vmatpush1.msra.mxu0 0.0
    %2487 = vmatprep.subr.mxu0 0.0
    %2488 = vmatpush1.msra.mxu0 0.0
    %2489 = vmatprep.subr.mxu0 0.0
    %2490 = vmatpush1.msra.mxu0 0.0
    %2491 = vmatprep.subr.mxu0 0.0
    %2492 = vmatpush1.msra.mxu0 0.0
    %2493 = vmatprep.subr.mxu0 0.0
    %2494 = vmatpush1.msra.mxu0 0.0
    %2495 = vmatprep.subr.mxu0 0.0
    %2496 = vmatpush1.msra.mxu0 0.0
    %2497 = vmatprep.subr.mxu0 0.0
    %2498 = vmatpush1.msra.mxu0 0.0
    %2499 = vmatprep.subr.mxu0 0.0
    %2500 = vmatpush1.msra.mxu0 0.0
    %2501 = vmatprep.mubr.f32.mxu0 0.0
    %2502 = vmatmul.mubr.f32.gmra.mrb[0].mxu0 %v221
    %v2503 = vpop.f32.mrb[0].mxu0
    %v2504 = vadd.f32 0.0, %v2503
    %v2505 = vpop.f32.mrb[0].mxu0
    %2506 = vdwg.mxu0
    %v2507 = vadd.f32 %v2319, %v46
    %v2508 = vadd.f32 %v2507, %v2430
    %v2509 = vlog2.pop %v2504
    %v2510 = vmul.f32 %v2509, 0.6931472
    %v2511 = vadd.f32 %v2508, %v2510
    %v2512 = vsel %vm2412, 1, 0
    %v2513 = vlaneseq
    %v2514 = vshrl.u32 %v2513, 7
    %v2515 = vsub.s32 0, %v2514
    %v2516 = vrot.slane %v2512, %v2515
    %vm2517 = vcmp.eq.s32.totalorder %v2516, 1
    %v2518 = vsel %vm2517, %v2511, %v2317
    %2519 = vst.msk [vmem:[#allocation2] sm:$0x3f] %vm190, %v2518
    %vm2520 = vcmask 57344
    %2521 = vst.msk [vmem:[#allocation3] sm:$0x1] %vm2520, %v2414
    %2522 = vst.msk [vmem:[#allocation4] sm:$0x1] %vm2520, %v2423
    %2523 = vst.msk [vmem:[#allocation5] sm:$0x3f] %vm190, %v2328
    // Predicated region
    $region38: #{tpu_custom_call.1} parent=1 // pred_check
      %p2524 = pneg %p49
    $region39: #{tpu_custom_call.1} parent=1 // pred_check_branch
      %2526 = sbr.rel (%p2524) target = $region41
    $region40: #{tpu_custom_call.1} parent=1 // pred_region
      %v2527 = vadd.f32 %v2518, %v40
      %v2528 = vsel %vm190, %v2527, -inf
      %v2529 = vrot.slane %v2528, 4
      %v2530 = vmax.f32 %v2528, %v2529
      %v2531 = vrot.slane %v2530, 2
      %v2532 = vmax.f32 %v2530, %v2531
      %v2533 = vrot.slane %v2532, 1
      %v2534 = vmax.f32 %v2532, %v2533
      %v2535 = vsub.f32 %v2527, %v2534
      %v2536 = vmul.f32 %v2535, 1.442695
      %v2537 = vpow.pop %v2536
      %v2538 = vsel %vm190, %v2537, 0.0
      %v2539 = vrot.slane %v2538, 4
      %v2540 = vadd.f32 %v2538, %v2539
      %v2541 = vrot.slane %v2540, 2
      %v2542 = vadd.f32 %v2540, %v2541
      %v2543 = vrot.slane %v2542, 1
      %v2544 = vadd.f32 %v2542, %v2543
      %v2545 = vlog2.pop %v2544
      %v2546 = vmul.f32 %v2545, 0.6931472
      %v2547 = vadd.f32 %v2534, %v2546
      %v2548 = vadd.f32 %v2414, %v2423
      %v2549 = vsub.f32 %v2548, %v2547
      %2550 = vst.msk [vmem:[#allocation6] sm:$0x1] %vm2520, %v2549
    $region41: #{tpu_custom_call.1} parent=1 // pred_fallthru
      _
    // Predicated region
    $region42: #{tpu_custom_call.1} parent=1 // pred_check
      _
    $region43: #{tpu_custom_call.1} parent=1 // pred_check_branch
      %2552 = sbr.rel (0) target = $region45
    $region44: #{tpu_custom_call.1} parent=1 // pred_region
      %s2554 = ssub.s32 16, 16
      %2555 = vsyncadd [#allocation7], %s2554
      %s2557 = sshll.u32 [#allocation6], 4
      %s2558 = int_to_ptr.vmem [resolvable:$true] %s2557
      %2560 = dma.vmem_to_hbm [thread:$0]  %s2558, 16, %s8, [#allocation7]
    $region45: #{tpu_custom_call.1} parent=1 // pred_fallthru
      _
    // Predicated region
    $region46: #{tpu_custom_call.1} parent=1 // pred_check
      _
    $region47: #{tpu_custom_call.1} parent=1 // pred_check_branch
      %2562 = sbr.rel (0) target = $region49
    $region48: #{tpu_custom_call.1} parent=1 // pred_region
      %2563 = dma.done [#allocation7], 16
    $region49: #{tpu_custom_call.1} parent=1 // pred_fallthru
      _
    %2564 = vsyncpa [#allocation7], 1

</llo_original>
